<compile_context>
chip_gen: v6e
topology: v6e:2x2x1
jax: 0.10.0
libtpu: 0.0.40
codegen_flags: <defaults>
</compile_context>

<pallas_src>
import functools

import jax
import jax.numpy as jnp
from jax.experimental import pallas as pl
from jax.experimental.pallas import tpu as pltpu

EPS = 1e-5


# ---------------------------------------------------------------------------
# Fused BasicBlock kernels
# ---------------------------------------------------------------------------
def _make_block_s1_kernel(H, W, Cin, Cout, mxu_dtype, has_sc):
    """BasicBlock with stride-1 conv1 (identity or 1x1 shortcut)."""

    def kernel(*refs):
        if has_sc:
            (x_ref, s1_ref, b1_ref, w1_ref, s2_ref, b2_ref, w2_ref, wsc_ref,
             o_ref, pad1_ref, pad2_ref) = refs
        else:
            (x_ref, s1_ref, b1_ref, w1_ref, s2_ref, b2_ref, w2_ref,
             o_ref, pad1_ref, pad2_ref) = refs

        x = x_ref[0]                                              # (H, W*Cin) f32
        # bn1 + relu (per-channel affine pre-tiled to the lane layout)
        act1 = jnp.maximum(x * s1_ref[...] + b1_ref[...], 0.0)

        # conv1: 3x3, stride 1, pad 1  ->  9 shifted views @ block-diag weights
        pad1_ref[...] = jnp.zeros((H + 2, (W + 2) * Cin), jnp.float32)
        pad1_ref[1:H + 1, Cin:(W + 1) * Cin] = act1
        acc = jnp.zeros((H, W * Cout), jnp.float32)
        for t in range(9):
            dh, dw = t // 3, t % 3
            a_tap = pad1_ref[dh:dh + H, dw * Cin:(dw + W) * Cin]
            acc = acc + jnp.dot(a_tap.astype(mxu_dtype), w1_ref[t],
                                preferred_element_type=jnp.float32)

        # bn2 + relu fused on the f32 accumulator
        act2 = jnp.maximum(acc * s2_ref[...] + b2_ref[...], 0.0)
        # dropRate == 0.0 -> dropout is identity
        # TODO(synk): training-mode dropout (dropRate > 0) would need pltpu.prng_* masking.

        # shortcut
        if has_sc:
            sc = jnp.dot(act1.astype(mxu_dtype), wsc_ref[...],
                         preferred_element_type=jnp.float32)
        else:
            sc = x                                                # identity (Cin == Cout)

        # conv2: 3x3, stride 1, pad 1 with the residual add fused in
        pad2_ref[...] = jnp.zeros((H + 2, (W + 2) * Cout), jnp.float32)
        pad2_ref[1:H + 1, Cout:(W + 1) * Cout] = act2
        out = sc
        for t in range(9):
            dh, dw = t // 3, t % 3
            a_tap = pad2_ref[dh:dh + H, dw * Cout:(dw + W) * Cout]
            out = out + jnp.dot(a_tap.astype(mxu_dtype), w2_ref[t],
                                preferred_element_type=jnp.float32)
        o_ref[0] = out.astype(o_ref.dtype)

    return kernel


def _make_block_s2_kernel(H, W, Cin, Cout, mxu_dtype):
    """BasicBlock with stride-2 conv1 and a 1x1 stride-2 shortcut conv.

    The wrapper passes the input pre-split into its 4 spatial parity planes so
    that every stride-2 tap becomes a dense static slice of one parity plane of
    the (zero-padded) bn1+relu activation.
    """
    H2, W2 = H // 2, W // 2

    def kernel(xp_ref, s1_ref, b1_ref, w1_ref, s2_ref, b2_ref, w2_ref, wsc_ref,
               o_ref, p00, p01, p10, p11, pad2_ref):
        planes = ((p00, p01), (p10, p11))

        # bn1 + relu on each parity plane, written into zero-padded parity
        # planes of act1.  plane(a,b)[u,v] == padded_act1[2u+a, 2v+b].
        sc = None
        for a in (0, 1):
            for b in (0, 1):
                pref = planes[a][b]
                pref[...] = jnp.zeros((H2 + 1, (W2 + 1) * Cin), jnp.float32)
                v = jnp.maximum(
                    xp_ref[0, a * 2 + b] * s1_ref[...] + b1_ref[...], 0.0)
                pref[(1 - a):(1 - a) + H2,
                     (1 - b) * Cin:((1 - b) + W2) * Cin] = v
                if a == 1 and b == 1:
                    # shortcut 1x1 conv stride 2: its input is act1[0::2, 0::2] == v
                    sc = jnp.dot(v.astype(mxu_dtype), wsc_ref[...],
                                 preferred_element_type=jnp.float32)

        # conv1: 3x3, stride 2, pad 1.  Tap (dh, dw) reads parity plane
        # (dh & 1, dw & 1) at dense offset (dh // 2, dw // 2).
        acc = jnp.zeros((H2, W2 * Cout), jnp.float32)
        for t in range(9):
            dh, dw = t // 3, t % 3
            pref = planes[dh & 1][dw & 1]
            a_tap = pref[(dh // 2):(dh // 2) + H2,
                         (dw // 2) * Cin:((dw // 2) + W2) * Cin]
            acc = acc + jnp.dot(a_tap.astype(mxu_dtype), w1_ref[t],
                                preferred_element_type=jnp.float32)

        # bn2 + relu fused on the f32 accumulator
        act2 = jnp.maximum(acc * s2_ref[...] + b2_ref[...], 0.0)
        # TODO(synk): training-mode dropout (dropRate > 0) would need pltpu.prng_* masking.

        # conv2: 3x3, stride 1, pad 1 with the residual (shortcut) add fused in
        pad2_ref[...] = jnp.zeros((H2 + 2, (W2 + 2) * Cout), jnp.float32)
        pad2_ref[1:H2 + 1, Cout:(W2 + 1) * Cout] = act2
        out = sc
        for t in range(9):
            dh, dw = t // 3, t % 3
            a_tap = pad2_ref[dh:dh + H2, dw * Cout:(dw + W2) * Cout]
            out = out + jnp.dot(a_tap.astype(mxu_dtype), w2_ref[t],
                                preferred_element_type=jnp.float32)
        o_ref[0] = out.astype(o_ref.dtype)

    return kernel


# ---------------------------------------------------------------------------
# Parameter preprocessing (tiny, weight-only -> constant-folded under jit)
# ---------------------------------------------------------------------------
def _bn_affine(gamma, beta, mean, var):
    scale = gamma / jnp.sqrt(var + EPS)
    shift = beta - mean * scale
    return scale, shift


def _kron_taps(w, nblk, dtype):
    """(3,3,Cin,Cout) -> (9, nblk*Cin, nblk*Cout) block-diagonal tap weights."""
    kh, kw, cin, cout = w.shape
    taps = w.reshape(kh * kw, cin, cout)
    eye = jnp.eye(nblk, dtype=w.dtype)
    k = (eye[None, :, None, :, None] * taps[:, None, :, None, :]).reshape(
        kh * kw, nblk * cin, nblk * cout)
    return k.astype(dtype)


def _kron_1x1(w, nblk, dtype):
    """(Cin,Cout) -> (nblk*Cin, nblk*Cout) block-diagonal 1x1-conv weight."""
    cin, cout = w.shape
    eye = jnp.eye(nblk, dtype=w.dtype)
    return (eye[:, None, :, None] * w[None, :, None, :]).reshape(
        nblk * cin, nblk * cout).astype(dtype)


# ---------------------------------------------------------------------------
# BasicBlock / NetworkBlock wrappers
# ---------------------------------------------------------------------------
def basic_block_forward(x3, hw, p, stride, mxu_dtype):
    """One BasicBlock as a single fused pallas_call.

    x3: (N, H, W*Cin) float32 activations (channels innermost / lane-dense).
    Returns ((N, Ho, Wo*Cout) float32, (Ho, Wo)).
    """
    N = x3.shape[0]
    H, W = hw
    Cin = p["bn1_gamma"].shape[0]
    Cout = p["conv1_w"].shape[-1]
    equal = Cin == Cout
    assert stride in (1, 2), "WideResNet only uses strides 1 and 2"
    if stride == 2:
        assert H % 2 == 0 and W % 2 == 0 and not equal
    Ho, Wo = H // stride, W // stride

    s1, b1 = _bn_affine(p["bn1_gamma"], p["bn1_beta"], p["bn1_mean"], p["bn1_var"])
    s2, b2 = _bn_affine(p["bn2_gamma"], p["bn2_beta"], p["bn2_mean"], p["bn2_var"])
    w1k = _kron_taps(p["conv1_w"], Wo, mxu_dtype)      # (9, Wo*Cin,  Wo*Cout)
    w2k = _kron_taps(p["conv2_w"], Wo, mxu_dtype)      # (9, Wo*Cout, Wo*Cout)
    s2t = jnp.tile(s2, Wo)[None, :]
    b2t = jnp.tile(b2, Wo)[None, :]

    cp = pltpu.CompilerParams(dimension_semantics=("parallel",))
    out_shape = jax.ShapeDtypeStruct((N, Ho, Wo * Cout), jnp.float32)
    out_spec = pl.BlockSpec((1, Ho, Wo * Cout), lambda i: (i, 0, 0))

    if stride == 1:
        s1t = jnp.tile(s1, W)[None, :]
        b1t = jnp.tile(b1, W)[None, :]
        kern = _make_block_s1_kernel(H, W, Cin, Cout, mxu_dtype, not equal)
        inputs = [x3, s1t, b1t, w1k, s2t, b2t, w2k]
        in_specs = [
            pl.BlockSpec((1, H, W * Cin), lambda i: (i, 0, 0)),
            pl.BlockSpec((1, W * Cin), lambda i: (0, 0)),
            pl.BlockSpec((1, W * Cin), lambda i: (0, 0)),
            pl.BlockSpec((9, Wo * Cin, Wo * Cout), lambda i: (0, 0, 0)),
            pl.BlockSpec((1, Wo * Cout), lambda i: (0, 0)),
            pl.BlockSpec((1, Wo * Cout), lambda i: (0, 0)),
            pl.BlockSpec((9, Wo * Cout, Wo * Cout), lambda i: (0, 0, 0)),
        ]
        if not equal:
            inputs.append(_kron_1x1(p["conv_sc_w"], Wo, mxu_dtype))
            in_specs.append(pl.BlockSpec((Wo * Cin, Wo * Cout), lambda i: (0, 0)))
        scratch = [
            pltpu.VMEM((H + 2, (W + 2) * Cin), jnp.float32),
            pltpu.VMEM((H + 2, (W + 2) * Cout), jnp.float32),
        ]
    else:  # stride == 2
        H2, W2 = H // 2, W // 2
        xs = x3.reshape(N, H, W, Cin)
        # Parity split of x (the only stride handling outside the kernel);
        # plane (a, b) holds the source for padded_act1[2u+a, 2v+b].
        xp = jnp.stack(
            [xs[:, (1 - a)::2, (1 - b)::2, :].reshape(N, H2, W2 * Cin)
             for a in (0, 1) for b in (0, 1)],
            axis=1)                                    # (N, 4, H2, W2*Cin)
        s1t = jnp.tile(s1, W2)[None, :]
        b1t = jnp.tile(b1, W2)[None, :]
        kern = _make_block_s2_kernel(H, W, Cin, Cout, mxu_dtype)
        inputs = [xp, s1t, b1t, w1k, s2t, b2t, w2k,
                  _kron_1x1(p["conv_sc_w"], Wo, mxu_dtype)]
        in_specs = [
            pl.BlockSpec((1, 4, H2, W2 * Cin), lambda i: (i, 0, 0, 0)),
            pl.BlockSpec((1, W2 * Cin), lambda i: (0, 0)),
            pl.BlockSpec((1, W2 * Cin), lambda i: (0, 0)),
            pl.BlockSpec((9, W2 * Cin, W2 * Cout), lambda i: (0, 0, 0)),
            pl.BlockSpec((1, W2 * Cout), lambda i: (0, 0)),
            pl.BlockSpec((1, W2 * Cout), lambda i: (0, 0)),
            pl.BlockSpec((9, W2 * Cout, W2 * Cout), lambda i: (0, 0, 0)),
            pl.BlockSpec((W2 * Cin, W2 * Cout), lambda i: (0, 0)),
        ]
        scratch = (
            [pltpu.VMEM((H2 + 1, (W2 + 1) * Cin), jnp.float32) for _ in range(4)]
            + [pltpu.VMEM((H2 + 2, (W2 + 2) * Cout), jnp.float32)]
        )

    out = pl.pallas_call(
        kern,
        out_shape=out_shape,
        grid=(N,),
        in_specs=in_specs,
        out_specs=out_spec,
        scratch_shapes=scratch,
        compiler_params=cp,
    )(*inputs)
    return out, (Ho, Wo)


def network_block_forward(x_nchw, params_list, stride, mxu_dtype=jnp.float32):
    """NetworkBlock: sequential BasicBlocks.  NCHW in / NCHW out."""
    N, C, H, W = x_nchw.shape
    x = jnp.transpose(x_nchw, (0, 2, 3, 1)).reshape(N, H, W * C)
    hw = (H, W)
    for i, p in enumerate(params_list):
        s = stride if i == 0 else 1
        x, hw = basic_block_forward(x, hw, p, s, mxu_dtype)
    Cout = params_list[-1]["conv1_w"].shape[-1]
    Ho, Wo = hw
    return jnp.transpose(x.reshape(N, Ho, Wo, Cout), (0, 3, 1, 2))


# ---------------------------------------------------------------------------
# Deterministic parameter init (synthetic, no checkpoint)
# ---------------------------------------------------------------------------
def init_network_block_params(key, nb_layers, in_planes, out_planes):
    params = []
    for i in range(nb_layers):
        cin = in_planes if i == 0 else out_planes
        key, *ks = jax.random.split(key, 12)
        p = {
            "bn1_gamma": 1.0 + 0.1 * jax.random.normal(ks[0], (cin,), jnp.float32),
            "bn1_beta": 0.1 * jax.random.normal(ks[1], (cin,), jnp.float32),
            "bn1_mean": 0.1 * jax.random.normal(ks[2], (cin,), jnp.float32),
            "bn1_var": 1.0 + 0.1 * jnp.abs(jax.random.normal(ks[3], (cin,), jnp.float32)),
            "conv1_w": jax.random.normal(ks[4], (3, 3, cin, out_planes), jnp.float32)
            * (2.0 / (9 * cin)) ** 0.5,
            "bn2_gamma": 1.0 + 0.1 * jax.random.normal(ks[5], (out_planes,), jnp.float32),
            "bn2_beta": 0.1 * jax.random.normal(ks[6], (out_planes,), jnp.float32),
            "bn2_mean": 0.1 * jax.random.normal(ks[7], (out_planes,), jnp.float32),
            "bn2_var": 1.0
            + 0.1 * jnp.abs(jax.random.normal(ks[8], (out_planes,), jnp.float32)),
            "conv2_w": jax.random.normal(
                ks[9], (3, 3, out_planes, out_planes), jnp.float32
            )
            * (2.0 / (9 * out_planes)) ** 0.5,
        }
        if cin != out_planes:
            p["conv_sc_w"] = jax.random.normal(ks[10], (cin, out_planes), jnp.float32) * (
                1.0 / cin
            ) ** 0.5
        params.append(p)
    return params


# ---------------------------------------------------------------------------
# Pure-JAX reference (for correctness check)
# ---------------------------------------------------------------------------
def _ref_bn(x, g, b, m, v):
    return (x - m) / jnp.sqrt(v + EPS) * g + b


def _ref_conv(x, w, stride):
    return jax.lax.conv_general_dilated(
        x, w, (stride, stride), ((1, 1), (1, 1)),
        dimension_numbers=("NHWC", "HWIO", "NHWC"),
        precision=jax.lax.Precision.HIGHEST,
    )


def ref_network_block(x_nchw, params_list, stride):
    x = jnp.transpose(x_nchw, (0, 2, 3, 1))
    for i, p in enumerate(params_list):
        s = stride if i == 0 else 1
        a = jax.nn.relu(_ref_bn(x, p["bn1_gamma"], p["bn1_beta"], p["bn1_mean"], p["bn1_var"]))
        out = _ref_conv(a, p["conv1_w"], s)
        out = jax.nn.relu(
            _ref_bn(out, p["bn2_gamma"], p["bn2_beta"], p["bn2_mean"], p["bn2_var"])
        )
        out = _ref_conv(out, p["conv2_w"], 1)
        if "conv_sc_w" in p:
            sc = jnp.matmul(a[:, ::s, ::s, :], p["conv_sc_w"],
                            precision=jax.lax.Precision.HIGHEST)
        else:
            sc = x
        x = out + sc
    return jnp.transpose(x, (0, 3, 1, 2))


# ---------------------------------------------------------------------------
if __name__ == "__main__":
    # NetworkBlock(nb_layers=2, in_planes=4, out_planes=8, block=BasicBlock,
    #              stride=2, act_cfg=ReLU, dropRate=0.0)
    nb_layers, in_planes, out_planes, stride = 2, 4, 8, 2

    key = jax.random.PRNGKey(0)
    k_x, k_p = jax.random.split(key)
    x = jax.random.normal(k_x, (2, in_planes, 16, 16), jnp.float32)  # NCHW
    params = init_network_block_params(k_p, nb_layers, in_planes, out_planes)

    # f32 MXU path (tight correctness check)
    fwd = jax.jit(functools.partial(network_block_forward, stride=stride))
    y = jax.block_until_ready(fwd(x, params))

    y_ref = jax.block_until_ready(ref_network_block(x, params, stride))
    assert y.shape == (2, out_planes, 8, 8), y.shape
    assert jnp.allclose(y, y_ref, atol=1e-4, rtol=1e-4), float(
        jnp.max(jnp.abs(y - y_ref))
    )

    # bf16 MXU-operand path (v5e/v6e/v7x feedback: halves matmul operand bytes;
    # BN affine math and accumulation stay f32) -- loose tolerance check.
    fwd_bf16 = jax.jit(
        functools.partial(network_block_forward, stride=stride,
                          mxu_dtype=jnp.bfloat16))
    y_bf16 = jax.block_until_ready(fwd_bf16(x, params))
    assert jnp.allclose(y_bf16, y_ref, atol=0.15, rtol=0.1), float(
        jnp.max(jnp.abs(y_bf16 - y_ref))
    )

    print("KERNEL_OK")
</pallas_src>

<mosaic_0001>
module attributes {stable_mosaic.version = 11 : i64} {
  func.func @kernel(%arg0: i32, %arg1: memref<1x8x64xf32, #tpu.memory_space<vmem>>, %arg2: memref<1x64xf32, #tpu.memory_space<vmem>>, %arg3: memref<1x64xf32, #tpu.memory_space<vmem>>, %arg4: memref<9x64x64xf32, #tpu.memory_space<vmem>>, %arg5: memref<1x64xf32, #tpu.memory_space<vmem>>, %arg6: memref<1x64xf32, #tpu.memory_space<vmem>>, %arg7: memref<9x64x64xf32, #tpu.memory_space<vmem>>, %arg8: memref<1x8x64xf32, #tpu.memory_space<vmem>>, %arg9: memref<10x80xf32, #tpu.memory_space<vmem>>, %arg10: memref<10x80xf32, #tpu.memory_space<vmem>>) attributes {dimension_semantics = [#tpu.dimension_semantics<parallel>], iteration_bounds = array<i64: 2>, scalar_prefetch = 0 : i64, scratch_operands = 2 : i64, tpu.core_type = #tpu.core_type<tc>, window_params = [{transform_indices = @transform_0, window_bounds = array<i64: 1, 8, 64>}, {pipeline_mode = #tpu.pipeline_mode<synchronous>, transform_indices = @transform_1, window_bounds = array<i64: 1, 64>}, {pipeline_mode = #tpu.pipeline_mode<synchronous>, transform_indices = @transform_2, window_bounds = array<i64: 1, 64>}, {pipeline_mode = #tpu.pipeline_mode<synchronous>, transform_indices = @transform_3, window_bounds = array<i64: 9, 64, 64>}, {pipeline_mode = #tpu.pipeline_mode<synchronous>, transform_indices = @transform_4, window_bounds = array<i64: 1, 64>}, {pipeline_mode = #tpu.pipeline_mode<synchronous>, transform_indices = @transform_5, window_bounds = array<i64: 1, 64>}, {pipeline_mode = #tpu.pipeline_mode<synchronous>, transform_indices = @transform_6, window_bounds = array<i64: 9, 64, 64>}, {transform_indices = @transform_7, window_bounds = array<i64: 1, 8, 64>}]} {
    %c0 = arith.constant 0 : index
    %c0_0 = arith.constant 0 : index
    %c0_1 = arith.constant 0 : index
    %0 = vector.load %arg1[%c0, %c0_0, %c0_1] : memref<1x8x64xf32, #tpu.memory_space<vmem>>, vector<1x8x64xf32>
    %1 = vector.shape_cast %0 : vector<1x8x64xf32> to vector<8x64xf32>
    %c0_2 = arith.constant 0 : index
    %c0_3 = arith.constant 0 : index
    %2 = vector.load %arg2[%c0_2, %c0_3] : memref<1x64xf32, #tpu.memory_space<vmem>>, vector<1x64xf32>
    %3 = vector.broadcast %2 : vector<1x64xf32> to vector<8x64xf32>
    %4 = arith.mulf %1, %3 : vector<8x64xf32>
    %c0_4 = arith.constant 0 : index
    %c0_5 = arith.constant 0 : index
    %5 = vector.load %arg3[%c0_4, %c0_5] : memref<1x64xf32, #tpu.memory_space<vmem>>, vector<1x64xf32>
    %6 = vector.broadcast %5 : vector<1x64xf32> to vector<8x64xf32>
    %7 = arith.addf %4, %6 : vector<8x64xf32>
    %cst = arith.constant 0.000000e+00 : f32
    %8 = vector.broadcast %cst : f32 to vector<8x64xf32>
    %9 = arith.maximumf %7, %8 : vector<8x64xf32>
    %cst_6 = arith.constant 0.000000e+00 : f32
    %10 = vector.broadcast %cst_6 : f32 to vector<10x80xf32>
    %c0_7 = arith.constant 0 : index
    %c0_8 = arith.constant 0 : index
    %11 = vector.load %arg9[%c0_7, %c0_8] : memref<10x80xf32, #tpu.memory_space<vmem>>, vector<10x80xf32>
    tpu.vector_store %arg9[%c0_7, %c0_8], %10 {strides = array<i32>} : memref<10x80xf32, #tpu.memory_space<vmem>>, vector<10x80xf32>,
    %c1 = arith.constant 1 : index
    %c8 = arith.constant 8 : index
    %12 = vector.load %arg9[%c1, %c8] : memref<10x80xf32, #tpu.memory_space<vmem>>, vector<8x64xf32>
    tpu.vector_store %arg9[%c1, %c8], %9 {strides = array<i32>} : memref<10x80xf32, #tpu.memory_space<vmem>>, vector<8x64xf32>,
    %cst_9 = arith.constant 0.000000e+00 : f32
    %13 = vector.broadcast %cst_9 : f32 to vector<8x64xf32>
    %c0_10 = arith.constant 0 : index
    %c0_11 = arith.constant 0 : index
    %14 = vector.load %arg9[%c0_10, %c0_11] : memref<10x80xf32, #tpu.memory_space<vmem>>, vector<8x64xf32>
    %c0_12 = arith.constant 0 : index
    %c0_13 = arith.constant 0 : index
    %c0_14 = arith.constant 0 : index
    %15 = vector.load %arg4[%c0_12, %c0_13, %c0_14] : memref<9x64x64xf32, #tpu.memory_space<vmem>>, vector<1x64x64xf32>
    %16 = vector.shape_cast %15 : vector<1x64x64xf32> to vector<64x64xf32>
    %cst_15 = arith.constant dense<0.000000e+00> : vector<8x64xf32>
    %17 = tpu.matmul %14, %16, %cst_15 {dimension_numbers = #tpu.dot_dimension_numbers<[1], [0], [0], [1], [0, 0, 1, 1], [], []>} : vector<8x64xf32>, vector<64x64xf32>, vector<8x64xf32> -> vector<8x64xf32>
    %18 = arith.addf %13, %17 : vector<8x64xf32>
    %c0_16 = arith.constant 0 : index
    %c8_17 = arith.constant 8 : index
    %19 = vector.load %arg9[%c0_16, %c8_17] : memref<10x80xf32, #tpu.memory_space<vmem>>, vector<8x64xf32>
    %c1_18 = arith.constant 1 : index
    %c0_19 = arith.constant 0 : index
    %c0_20 = arith.constant 0 : index
    %20 = vector.load %arg4[%c1_18, %c0_19, %c0_20] : memref<9x64x64xf32, #tpu.memory_space<vmem>>, vector<1x64x64xf32>
    %21 = vector.shape_cast %20 : vector<1x64x64xf32> to vector<64x64xf32>
    %cst_21 = arith.constant dense<0.000000e+00> : vector<8x64xf32>
    %22 = tpu.matmul %19, %21, %cst_21 {dimension_numbers = #tpu.dot_dimension_numbers<[1], [0], [0], [1], [0, 0, 1, 1], [], []>} : vector<8x64xf32>, vector<64x64xf32>, vector<8x64xf32> -> vector<8x64xf32>
    %23 = arith.addf %18, %22 : vector<8x64xf32>
    %c0_22 = arith.constant 0 : index
    %c16 = arith.constant 16 : index
    %24 = vector.load %arg9[%c0_22, %c16] : memref<10x80xf32, #tpu.memory_space<vmem>>, vector<8x64xf32>
    %c2 = arith.constant 2 : index
    %c0_23 = arith.constant 0 : index
    %c0_24 = arith.constant 0 : index
    %25 = vector.load %arg4[%c2, %c0_23, %c0_24] : memref<9x64x64xf32, #tpu.memory_space<vmem>>, vector<1x64x64xf32>
    %26 = vector.shape_cast %25 : vector<1x64x64xf32> to vector<64x64xf32>
    %cst_25 = arith.constant dense<0.000000e+00> : vector<8x64xf32>
    %27 = tpu.matmul %24, %26, %cst_25 {dimension_numbers = #tpu.dot_dimension_numbers<[1], [0], [0], [1], [0, 0, 1, 1], [], []>} : vector<8x64xf32>, vector<64x64xf32>, vector<8x64xf32> -> vector<8x64xf32>
    %28 = arith.addf %23, %27 : vector<8x64xf32>
    %c1_26 = arith.constant 1 : index
    %c0_27 = arith.constant 0 : index
    %29 = vector.load %arg9[%c1_26, %c0_27] : memref<10x80xf32, #tpu.memory_space<vmem>>, vector<8x64xf32>
    %c3 = arith.constant 3 : index
    %c0_28 = arith.constant 0 : index
    %c0_29 = arith.constant 0 : index
    %30 = vector.load %arg4[%c3, %c0_28, %c0_29] : memref<9x64x64xf32, #tpu.memory_space<vmem>>, vector<1x64x64xf32>
    %31 = vector.shape_cast %30 : vector<1x64x64xf32> to vector<64x64xf32>
    %cst_30 = arith.constant dense<0.000000e+00> : vector<8x64xf32>
    %32 = tpu.matmul %29, %31, %cst_30 {dimension_numbers = #tpu.dot_dimension_numbers<[1], [0], [0], [1], [0, 0, 1, 1], [], []>} : vector<8x64xf32>, vector<64x64xf32>, vector<8x64xf32> -> vector<8x64xf32>
    %33 = arith.addf %28, %32 : vector<8x64xf32>
    %c1_31 = arith.constant 1 : index
    %c8_32 = arith.constant 8 : index
    %34 = vector.load %arg9[%c1_31, %c8_32] : memref<10x80xf32, #tpu.memory_space<vmem>>, vector<8x64xf32>
    %c4 = arith.constant 4 : index
    %c0_33 = arith.constant 0 : index
    %c0_34 = arith.constant 0 : index
    %35 = vector.load %arg4[%c4, %c0_33, %c0_34] : memref<9x64x64xf32, #tpu.memory_space<vmem>>, vector<1x64x64xf32>
    %36 = vector.shape_cast %35 : vector<1x64x64xf32> to vector<64x64xf32>
    %cst_35 = arith.constant dense<0.000000e+00> : vector<8x64xf32>
    %37 = tpu.matmul %34, %36, %cst_35 {dimension_numbers = #tpu.dot_dimension_numbers<[1], [0], [0], [1], [0, 0, 1, 1], [], []>} : vector<8x64xf32>, vector<64x64xf32>, vector<8x64xf32> -> vector<8x64xf32>
    %38 = arith.addf %33, %37 : vector<8x64xf32>
    %c1_36 = arith.constant 1 : index
    %c16_37 = arith.constant 16 : index
    %39 = vector.load %arg9[%c1_36, %c16_37] : memref<10x80xf32, #tpu.memory_space<vmem>>, vector<8x64xf32>
    %c5 = arith.constant 5 : index
    %c0_38 = arith.constant 0 : index
    %c0_39 = arith.constant 0 : index
    %40 = vector.load %arg4[%c5, %c0_38, %c0_39] : memref<9x64x64xf32, #tpu.memory_space<vmem>>, vector<1x64x64xf32>
    %41 = vector.shape_cast %40 : vector<1x64x64xf32> to vector<64x64xf32>
    %cst_40 = arith.constant dense<0.000000e+00> : vector<8x64xf32>
    %42 = tpu.matmul %39, %41, %cst_40 {dimension_numbers = #tpu.dot_dimension_numbers<[1], [0], [0], [1], [0, 0, 1, 1], [], []>} : vector<8x64xf32>, vector<64x64xf32>, vector<8x64xf32> -> vector<8x64xf32>
    %43 = arith.addf %38, %42 : vector<8x64xf32>
    %c2_41 = arith.constant 2 : index
    %c0_42 = arith.constant 0 : index
    %44 = vector.load %arg9[%c2_41, %c0_42] : memref<10x80xf32, #tpu.memory_space<vmem>>, vector<8x64xf32>
    %c6 = arith.constant 6 : index
    %c0_43 = arith.constant 0 : index
    %c0_44 = arith.constant 0 : index
    %45 = vector.load %arg4[%c6, %c0_43, %c0_44] : memref<9x64x64xf32, #tpu.memory_space<vmem>>, vector<1x64x64xf32>
    %46 = vector.shape_cast %45 : vector<1x64x64xf32> to vector<64x64xf32>
    %cst_45 = arith.constant dense<0.000000e+00> : vector<8x64xf32>
    %47 = tpu.matmul %44, %46, %cst_45 {dimension_numbers = #tpu.dot_dimension_numbers<[1], [0], [0], [1], [0, 0, 1, 1], [], []>} : vector<8x64xf32>, vector<64x64xf32>, vector<8x64xf32> -> vector<8x64xf32>
    %48 = arith.addf %43, %47 : vector<8x64xf32>
    %c2_46 = arith.constant 2 : index
    %c8_47 = arith.constant 8 : index
    %49 = vector.load %arg9[%c2_46, %c8_47] : memref<10x80xf32, #tpu.memory_space<vmem>>, vector<8x64xf32>
    %c7 = arith.constant 7 : index
    %c0_48 = arith.constant 0 : index
    %c0_49 = arith.constant 0 : index
    %50 = vector.load %arg4[%c7, %c0_48, %c0_49] : memref<9x64x64xf32, #tpu.memory_space<vmem>>, vector<1x64x64xf32>
    %51 = vector.shape_cast %50 : vector<1x64x64xf32> to vector<64x64xf32>
    %cst_50 = arith.constant dense<0.000000e+00> : vector<8x64xf32>
    %52 = tpu.matmul %49, %51, %cst_50 {dimension_numbers = #tpu.dot_dimension_numbers<[1], [0], [0], [1], [0, 0, 1, 1], [], []>} : vector<8x64xf32>, vector<64x64xf32>, vector<8x64xf32> -> vector<8x64xf32>
    %53 = arith.addf %48, %52 : vector<8x64xf32>
    %c2_51 = arith.constant 2 : index
    %c16_52 = arith.constant 16 : index
    %54 = vector.load %arg9[%c2_51, %c16_52] : memref<10x80xf32, #tpu.memory_space<vmem>>, vector<8x64xf32>
    %c8_53 = arith.constant 8 : index
    %c0_54 = arith.constant 0 : index
    %c0_55 = arith.constant 0 : index
    %55 = vector.load %arg4[%c8_53, %c0_54, %c0_55] : memref<9x64x64xf32, #tpu.memory_space<vmem>>, vector<1x64x64xf32>
    %56 = vector.shape_cast %55 : vector<1x64x64xf32> to vector<64x64xf32>
    %cst_56 = arith.constant dense<0.000000e+00> : vector<8x64xf32>
    %57 = tpu.matmul %54, %56, %cst_56 {dimension_numbers = #tpu.dot_dimension_numbers<[1], [0], [0], [1], [0, 0, 1, 1], [], []>} : vector<8x64xf32>, vector<64x64xf32>, vector<8x64xf32> -> vector<8x64xf32>
    %58 = arith.addf %53, %57 : vector<8x64xf32>
    %c0_57 = arith.constant 0 : index
    %c0_58 = arith.constant 0 : index
    %59 = vector.load %arg5[%c0_57, %c0_58] : memref<1x64xf32, #tpu.memory_space<vmem>>, vector<1x64xf32>
    %60 = vector.broadcast %59 : vector<1x64xf32> to vector<8x64xf32>
    %61 = arith.mulf %58, %60 : vector<8x64xf32>
    %c0_59 = arith.constant 0 : index
    %c0_60 = arith.constant 0 : index
    %62 = vector.load %arg6[%c0_59, %c0_60] : memref<1x64xf32, #tpu.memory_space<vmem>>, vector<1x64xf32>
    %63 = vector.broadcast %62 : vector<1x64xf32> to vector<8x64xf32>
    %64 = arith.addf %61, %63 : vector<8x64xf32>
    %cst_61 = arith.constant 0.000000e+00 : f32
    %65 = vector.broadcast %cst_61 : f32 to vector<8x64xf32>
    %66 = arith.maximumf %64, %65 : vector<8x64xf32>
    %cst_62 = arith.constant 0.000000e+00 : f32
    %67 = vector.broadcast %cst_62 : f32 to vector<10x80xf32>
    %c0_63 = arith.constant 0 : index
    %c0_64 = arith.constant 0 : index
    %68 = vector.load %arg10[%c0_63, %c0_64] : memref<10x80xf32, #tpu.memory_space<vmem>>, vector<10x80xf32>
    tpu.vector_store %arg10[%c0_63, %c0_64], %67 {strides = array<i32>} : memref<10x80xf32, #tpu.memory_space<vmem>>, vector<10x80xf32>,
    %c1_65 = arith.constant 1 : index
    %c8_66 = arith.constant 8 : index
    %69 = vector.load %arg10[%c1_65, %c8_66] : memref<10x80xf32, #tpu.memory_space<vmem>>, vector<8x64xf32>
    tpu.vector_store %arg10[%c1_65, %c8_66], %66 {strides = array<i32>} : memref<10x80xf32, #tpu.memory_space<vmem>>, vector<8x64xf32>,
    %c0_67 = arith.constant 0 : index
    %c0_68 = arith.constant 0 : index
    %70 = vector.load %arg10[%c0_67, %c0_68] : memref<10x80xf32, #tpu.memory_space<vmem>>, vector<8x64xf32>
    %c0_69 = arith.constant 0 : index
    %c0_70 = arith.constant 0 : index
    %c0_71 = arith.constant 0 : index
    %71 = vector.load %arg7[%c0_69, %c0_70, %c0_71] : memref<9x64x64xf32, #tpu.memory_space<vmem>>, vector<1x64x64xf32>
    %72 = vector.shape_cast %71 : vector<1x64x64xf32> to vector<64x64xf32>
    %cst_72 = arith.constant dense<0.000000e+00> : vector<8x64xf32>
    %73 = tpu.matmul %70, %72, %cst_72 {dimension_numbers = #tpu.dot_dimension_numbers<[1], [0], [0], [1], [0, 0, 1, 1], [], []>} : vector<8x64xf32>, vector<64x64xf32>, vector<8x64xf32> -> vector<8x64xf32>
    %74 = arith.addf %1, %73 : vector<8x64xf32>
    %c0_73 = arith.constant 0 : index
    %c8_74 = arith.constant 8 : index
    %75 = vector.load %arg10[%c0_73, %c8_74] : memref<10x80xf32, #tpu.memory_space<vmem>>, vector<8x64xf32>
    %c1_75 = arith.constant 1 : index
    %c0_76 = arith.constant 0 : index
    %c0_77 = arith.constant 0 : index
    %76 = vector.load %arg7[%c1_75, %c0_76, %c0_77] : memref<9x64x64xf32, #tpu.memory_space<vmem>>, vector<1x64x64xf32>
    %77 = vector.shape_cast %76 : vector<1x64x64xf32> to vector<64x64xf32>
    %cst_78 = arith.constant dense<0.000000e+00> : vector<8x64xf32>
    %78 = tpu.matmul %75, %77, %cst_78 {dimension_numbers = #tpu.dot_dimension_numbers<[1], [0], [0], [1], [0, 0, 1, 1], [], []>} : vector<8x64xf32>, vector<64x64xf32>, vector<8x64xf32> -> vector<8x64xf32>
    %79 = arith.addf %74, %78 : vector<8x64xf32>
    %c0_79 = arith.constant 0 : index
    %c16_80 = arith.constant 16 : index
    %80 = vector.load %arg10[%c0_79, %c16_80] : memref<10x80xf32, #tpu.memory_space<vmem>>, vector<8x64xf32>
    %c2_81 = arith.constant 2 : index
    %c0_82 = arith.constant 0 : index
    %c0_83 = arith.constant 0 : index
    %81 = vector.load %arg7[%c2_81, %c0_82, %c0_83] : memref<9x64x64xf32, #tpu.memory_space<vmem>>, vector<1x64x64xf32>
    %82 = vector.shape_cast %81 : vector<1x64x64xf32> to vector<64x64xf32>
    %cst_84 = arith.constant dense<0.000000e+00> : vector<8x64xf32>
    %83 = tpu.matmul %80, %82, %cst_84 {dimension_numbers = #tpu.dot_dimension_numbers<[1], [0], [0], [1], [0, 0, 1, 1], [], []>} : vector<8x64xf32>, vector<64x64xf32>, vector<8x64xf32> -> vector<8x64xf32>
    %84 = arith.addf %79, %83 : vector<8x64xf32>
    %c1_85 = arith.constant 1 : index
    %c0_86 = arith.constant 0 : index
    %85 = vector.load %arg10[%c1_85, %c0_86] : memref<10x80xf32, #tpu.memory_space<vmem>>, vector<8x64xf32>
    %c3_87 = arith.constant 3 : index
    %c0_88 = arith.constant 0 : index
    %c0_89 = arith.constant 0 : index
    %86 = vector.load %arg7[%c3_87, %c0_88, %c0_89] : memref<9x64x64xf32, #tpu.memory_space<vmem>>, vector<1x64x64xf32>
    %87 = vector.shape_cast %86 : vector<1x64x64xf32> to vector<64x64xf32>
    %cst_90 = arith.constant dense<0.000000e+00> : vector<8x64xf32>
    %88 = tpu.matmul %85, %87, %cst_90 {dimension_numbers = #tpu.dot_dimension_numbers<[1], [0], [0], [1], [0, 0, 1, 1], [], []>} : vector<8x64xf32>, vector<64x64xf32>, vector<8x64xf32> -> vector<8x64xf32>
    %89 = arith.addf %84, %88 : vector<8x64xf32>
    %c1_91 = arith.constant 1 : index
    %c8_92 = arith.constant 8 : index
    %90 = vector.load %arg10[%c1_91, %c8_92] : memref<10x80xf32, #tpu.memory_space<vmem>>, vector<8x64xf32>
    %c4_93 = arith.constant 4 : index
    %c0_94 = arith.constant 0 : index
    %c0_95 = arith.constant 0 : index
    %91 = vector.load %arg7[%c4_93, %c0_94, %c0_95] : memref<9x64x64xf32, #tpu.memory_space<vmem>>, vector<1x64x64xf32>
    %92 = vector.shape_cast %91 : vector<1x64x64xf32> to vector<64x64xf32>
    %cst_96 = arith.constant dense<0.000000e+00> : vector<8x64xf32>
    %93 = tpu.matmul %90, %92, %cst_96 {dimension_numbers = #tpu.dot_dimension_numbers<[1], [0], [0], [1], [0, 0, 1, 1], [], []>} : vector<8x64xf32>, vector<64x64xf32>, vector<8x64xf32> -> vector<8x64xf32>
    %94 = arith.addf %89, %93 : vector<8x64xf32>
    %c1_97 = arith.constant 1 : index
    %c16_98 = arith.constant 16 : index
    %95 = vector.load %arg10[%c1_97, %c16_98] : memref<10x80xf32, #tpu.memory_space<vmem>>, vector<8x64xf32>
    %c5_99 = arith.constant 5 : index
    %c0_100 = arith.constant 0 : index
    %c0_101 = arith.constant 0 : index
    %96 = vector.load %arg7[%c5_99, %c0_100, %c0_101] : memref<9x64x64xf32, #tpu.memory_space<vmem>>, vector<1x64x64xf32>
    %97 = vector.shape_cast %96 : vector<1x64x64xf32> to vector<64x64xf32>
    %cst_102 = arith.constant dense<0.000000e+00> : vector<8x64xf32>
    %98 = tpu.matmul %95, %97, %cst_102 {dimension_numbers = #tpu.dot_dimension_numbers<[1], [0], [0], [1], [0, 0, 1, 1], [], []>} : vector<8x64xf32>, vector<64x64xf32>, vector<8x64xf32> -> vector<8x64xf32>
    %99 = arith.addf %94, %98 : vector<8x64xf32>
    %c2_103 = arith.constant 2 : index
    %c0_104 = arith.constant 0 : index
    %100 = vector.load %arg10[%c2_103, %c0_104] : memref<10x80xf32, #tpu.memory_space<vmem>>, vector<8x64xf32>
    %c6_105 = arith.constant 6 : index
    %c0_106 = arith.constant 0 : index
    %c0_107 = arith.constant 0 : index
    %101 = vector.load %arg7[%c6_105, %c0_106, %c0_107] : memref<9x64x64xf32, #tpu.memory_space<vmem>>, vector<1x64x64xf32>
    %102 = vector.shape_cast %101 : vector<1x64x64xf32> to vector<64x64xf32>
    %cst_108 = arith.constant dense<0.000000e+00> : vector<8x64xf32>
    %103 = tpu.matmul %100, %102, %cst_108 {dimension_numbers = #tpu.dot_dimension_numbers<[1], [0], [0], [1], [0, 0, 1, 1], [], []>} : vector<8x64xf32>, vector<64x64xf32>, vector<8x64xf32> -> vector<8x64xf32>
    %104 = arith.addf %99, %103 : vector<8x64xf32>
    %c2_109 = arith.constant 2 : index
    %c8_110 = arith.constant 8 : index
    %105 = vector.load %arg10[%c2_109, %c8_110] : memref<10x80xf32, #tpu.memory_space<vmem>>, vector<8x64xf32>
    %c7_111 = arith.constant 7 : index
    %c0_112 = arith.constant 0 : index
    %c0_113 = arith.constant 0 : index
    %106 = vector.load %arg7[%c7_111, %c0_112, %c0_113] : memref<9x64x64xf32, #tpu.memory_space<vmem>>, vector<1x64x64xf32>
    %107 = vector.shape_cast %106 : vector<1x64x64xf32> to vector<64x64xf32>
    %cst_114 = arith.constant dense<0.000000e+00> : vector<8x64xf32>
    %108 = tpu.matmul %105, %107, %cst_114 {dimension_numbers = #tpu.dot_dimension_numbers<[1], [0], [0], [1], [0, 0, 1, 1], [], []>} : vector<8x64xf32>, vector<64x64xf32>, vector<8x64xf32> -> vector<8x64xf32>
    %109 = arith.addf %104, %108 : vector<8x64xf32>
    %c2_115 = arith.constant 2 : index
    %c16_116 = arith.constant 16 : index
    %110 = vector.load %arg10[%c2_115, %c16_116] : memref<10x80xf32, #tpu.memory_space<vmem>>, vector<8x64xf32>
    %c8_117 = arith.constant 8 : index
    %c0_118 = arith.constant 0 : index
    %c0_119 = arith.constant 0 : index
    %111 = vector.load %arg7[%c8_117, %c0_118, %c0_119] : memref<9x64x64xf32, #tpu.memory_space<vmem>>, vector<1x64x64xf32>
    %112 = vector.shape_cast %111 : vector<1x64x64xf32> to vector<64x64xf32>
    %cst_120 = arith.constant dense<0.000000e+00> : vector<8x64xf32>
    %113 = tpu.matmul %110, %112, %cst_120 {dimension_numbers = #tpu.dot_dimension_numbers<[1], [0], [0], [1], [0, 0, 1, 1], [], []>} : vector<8x64xf32>, vector<64x64xf32>, vector<8x64xf32> -> vector<8x64xf32>
    %114 = arith.addf %109, %113 : vector<8x64xf32>
    %c0_121 = arith.constant 0 : index
    %c0_122 = arith.constant 0 : index
    %c0_123 = arith.constant 0 : index
    %115 = vector.load %arg8[%c0_121, %c0_122, %c0_123] : memref<1x8x64xf32, #tpu.memory_space<vmem>>, vector<1x8x64xf32>
    %116 = vector.shape_cast %115 : vector<1x8x64xf32> to vector<8x64xf32>
    %117 = vector.shape_cast %114 : vector<8x64xf32> to vector<1x8x64xf32>
    tpu.vector_store %arg8[%c0_121, %c0_122, %c0_123], %117 {strides = array<i32>} : memref<1x8x64xf32, #tpu.memory_space<vmem>>, vector<1x8x64xf32>,
    return
  }
  func.func @transform_0(%arg0: i32) -> (i32, i32, i32) {
    %c0_i32 = arith.constant 0 : i32
    %c0_i32_0 = arith.constant 0 : i32
    %c0_i32_1 = arith.constant 0 : i32
    return %arg0, %c0_i32, %c0_i32_0 : i32, i32, i32
  }
  func.func @transform_1(%arg0: i32) -> (i32, i32) {
    %c0_i32 = arith.constant 0 : i32
    %c0_i32_0 = arith.constant 0 : i32
    %c0_i32_1 = arith.constant 0 : i32
    return %c0_i32, %c0_i32_0 : i32, i32
  }
  func.func @transform_2(%arg0: i32) -> (i32, i32) {
    %c0_i32 = arith.constant 0 : i32
    %c0_i32_0 = arith.constant 0 : i32
    %c0_i32_1 = arith.constant 0 : i32
    return %c0_i32, %c0_i32_0 : i32, i32
  }
  func.func @transform_3(%arg0: i32) -> (i32, i32, i32) {
    %c0_i32 = arith.constant 0 : i32
    %c0_i32_0 = arith.constant 0 : i32
    %c0_i32_1 = arith.constant 0 : i32
    %c0_i32_2 = arith.constant 0 : i32
    return %c0_i32, %c0_i32_0, %c0_i32_1 : i32, i32, i32
  }
  func.func @transform_4(%arg0: i32) -> (i32, i32) {
    %c0_i32 = arith.constant 0 : i32
    %c0_i32_0 = arith.constant 0 : i32
    %c0_i32_1 = arith.constant 0 : i32
    return %c0_i32, %c0_i32_0 : i32, i32
  }
  func.func @transform_5(%arg0: i32) -> (i32, i32) {
    %c0_i32 = arith.constant 0 : i32
    %c0_i32_0 = arith.constant 0 : i32
    %c0_i32_1 = arith.constant 0 : i32
    return %c0_i32, %c0_i32_0 : i32, i32
  }
  func.func @transform_6(%arg0: i32) -> (i32, i32, i32) {
    %c0_i32 = arith.constant 0 : i32
    %c0_i32_0 = arith.constant 0 : i32
    %c0_i32_1 = arith.constant 0 : i32
    %c0_i32_2 = arith.constant 0 : i32
    return %c0_i32, %c0_i32_0, %c0_i32_1 : i32, i32, i32
  }
  func.func @transform_7(%arg0: i32) -> (i32, i32, i32) {
    %c0_i32 = arith.constant 0 : i32
    %c0_i32_0 = arith.constant 0 : i32
    %c0_i32_1 = arith.constant 0 : i32
    return %arg0, %c0_i32, %c0_i32_0 : i32, i32, i32
  }
}

module attributes {stable_mosaic.version = 11 : i64} {
  func.func @kernel(%arg0: i32, %arg1: memref<1x4x8x32xf32, #tpu.memory_space<vmem>>, %arg2: memref<1x32xf32, #tpu.memory_space<vmem>>, %arg3: memref<1x32xf32, #tpu.memory_space<vmem>>, %arg4: memref<9x32x64xf32, #tpu.memory_space<vmem>>, %arg5: memref<1x64xf32, #tpu.memory_space<vmem>>, %arg6: memref<1x64xf32, #tpu.memory_space<vmem>>, %arg7: memref<9x64x64xf32, #tpu.memory_space<vmem>>, %arg8: memref<32x64xf32, #tpu.memory_space<vmem>>, %arg9: memref<1x8x64xf32, #tpu.memory_space<vmem>>, %arg10: memref<9x36xf32, #tpu.memory_space<vmem>>, %arg11: memref<9x36xf32, #tpu.memory_space<vmem>>, %arg12: memref<9x36xf32, #tpu.memory_space<vmem>>, %arg13: memref<9x36xf32, #tpu.memory_space<vmem>>, %arg14: memref<10x80xf32, #tpu.memory_space<vmem>>) attributes {dimension_semantics = [#tpu.dimension_semantics<parallel>], iteration_bounds = array<i64: 2>, scalar_prefetch = 0 : i64, scratch_operands = 5 : i64, tpu.core_type = #tpu.core_type<tc>, window_params = [{transform_indices = @transform_0, window_bounds = array<i64: 1, 4, 8, 32>}, {pipeline_mode = #tpu.pipeline_mode<synchronous>, transform_indices = @transform_1, window_bounds = array<i64: 1, 32>}, {pipeline_mode = #tpu.pipeline_mode<synchronous>, transform_indices = @transform_2, window_bounds = array<i64: 1, 32>}, {pipeline_mode = #tpu.pipeline_mode<synchronous>, transform_indices = @transform_3, window_bounds = array<i64: 9, 32, 64>}, {pipeline_mode = #tpu.pipeline_mode<synchronous>, transform_indices = @transform_4, window_bounds = array<i64: 1, 64>}, {pipeline_mode = #tpu.pipeline_mode<synchronous>, transform_indices = @transform_5, window_bounds = array<i64: 1, 64>}, {pipeline_mode = #tpu.pipeline_mode<synchronous>, transform_indices = @transform_6, window_bounds = array<i64: 9, 64, 64>}, {pipeline_mode = #tpu.pipeline_mode<synchronous>, transform_indices = @transform_7, window_bounds = array<i64: 32, 64>}, {transform_indices = @transform_8, window_bounds = array<i64: 1, 8, 64>}]} {
    %cst = arith.constant 0.000000e+00 : f32
    %0 = vector.broadcast %cst : f32 to vector<9x36xf32>
    %c0 = arith.constant 0 : index
    %c0_0 = arith.constant 0 : index
    %1 = vector.load %arg10[%c0, %c0_0] : memref<9x36xf32, #tpu.memory_space<vmem>>, vector<9x36xf32>
    tpu.vector_store %arg10[%c0, %c0_0], %0 {strides = array<i32>} : memref<9x36xf32, #tpu.memory_space<vmem>>, vector<9x36xf32>,
    %c0_1 = arith.constant 0 : index
    %c0_2 = arith.constant 0 : index
    %c0_3 = arith.constant 0 : index
    %c0_4 = arith.constant 0 : index
    %2 = vector.load %arg1[%c0_1, %c0_2, %c0_3, %c0_4] : memref<1x4x8x32xf32, #tpu.memory_space<vmem>>, vector<1x1x8x32xf32>
    %3 = vector.shape_cast %2 : vector<1x1x8x32xf32> to vector<8x32xf32>
    %c0_5 = arith.constant 0 : index
    %c0_6 = arith.constant 0 : index
    %4 = vector.load %arg2[%c0_5, %c0_6] : memref<1x32xf32, #tpu.memory_space<vmem>>, vector<1x32xf32>
    %5 = vector.broadcast %4 : vector<1x32xf32> to vector<8x32xf32>
    %6 = arith.mulf %3, %5 : vector<8x32xf32>
    %c0_7 = arith.constant 0 : index
    %c0_8 = arith.constant 0 : index
    %7 = vector.load %arg3[%c0_7, %c0_8] : memref<1x32xf32, #tpu.memory_space<vmem>>, vector<1x32xf32>
    %8 = vector.broadcast %7 : vector<1x32xf32> to vector<8x32xf32>
    %9 = arith.addf %6, %8 : vector<8x32xf32>
    %cst_9 = arith.constant 0.000000e+00 : f32
    %10 = vector.broadcast %cst_9 : f32 to vector<8x32xf32>
    %11 = arith.maximumf %9, %10 : vector<8x32xf32>
    %c1 = arith.constant 1 : index
    %c4 = arith.constant 4 : index
    %12 = vector.load %arg10[%c1, %c4] : memref<9x36xf32, #tpu.memory_space<vmem>>, vector<8x32xf32>
    tpu.vector_store %arg10[%c1, %c4], %11 {strides = array<i32>} : memref<9x36xf32, #tpu.memory_space<vmem>>, vector<8x32xf32>,
    %cst_10 = arith.constant 0.000000e+00 : f32
    %13 = vector.broadcast %cst_10 : f32 to vector<9x36xf32>
    %c0_11 = arith.constant 0 : index
    %c0_12 = arith.constant 0 : index
    %14 = vector.load %arg11[%c0_11, %c0_12] : memref<9x36xf32, #tpu.memory_space<vmem>>, vector<9x36xf32>
    tpu.vector_store %arg11[%c0_11, %c0_12], %13 {strides = array<i32>} : memref<9x36xf32, #tpu.memory_space<vmem>>, vector<9x36xf32>,
    %c0_13 = arith.constant 0 : index
    %c1_14 = arith.constant 1 : index
    %c0_15 = arith.constant 0 : index
    %c0_16 = arith.constant 0 : index
    %15 = vector.load %arg1[%c0_13, %c1_14, %c0_15, %c0_16] : memref<1x4x8x32xf32, #tpu.memory_space<vmem>>, vector<1x1x8x32xf32>
    %16 = vector.shape_cast %15 : vector<1x1x8x32xf32> to vector<8x32xf32>
    %c0_17 = arith.constant 0 : index
    %c0_18 = arith.constant 0 : index
    %17 = vector.load %arg2[%c0_17, %c0_18] : memref<1x32xf32, #tpu.memory_space<vmem>>, vector<1x32xf32>
    %18 = vector.broadcast %17 : vector<1x32xf32> to vector<8x32xf32>
    %19 = arith.mulf %16, %18 : vector<8x32xf32>
    %c0_19 = arith.constant 0 : index
    %c0_20 = arith.constant 0 : index
    %20 = vector.load %arg3[%c0_19, %c0_20] : memref<1x32xf32, #tpu.memory_space<vmem>>, vector<1x32xf32>
    %21 = vector.broadcast %20 : vector<1x32xf32> to vector<8x32xf32>
    %22 = arith.addf %19, %21 : vector<8x32xf32>
    %cst_21 = arith.constant 0.000000e+00 : f32
    %23 = vector.broadcast %cst_21 : f32 to vector<8x32xf32>
    %24 = arith.maximumf %22, %23 : vector<8x32xf32>
    %c1_22 = arith.constant 1 : index
    %c0_23 = arith.constant 0 : index
    %25 = vector.load %arg11[%c1_22, %c0_23] : memref<9x36xf32, #tpu.memory_space<vmem>>, vector<8x32xf32>
    tpu.vector_store %arg11[%c1_22, %c0_23], %24 {strides = array<i32>} : memref<9x36xf32, #tpu.memory_space<vmem>>, vector<8x32xf32>,
    %cst_24 = arith.constant 0.000000e+00 : f32
    %26 = vector.broadcast %cst_24 : f32 to vector<9x36xf32>
    %c0_25 = arith.constant 0 : index
    %c0_26 = arith.constant 0 : index
    %27 = vector.load %arg12[%c0_25, %c0_26] : memref<9x36xf32, #tpu.memory_space<vmem>>, vector<9x36xf32>
    tpu.vector_store %arg12[%c0_25, %c0_26], %26 {strides = array<i32>} : memref<9x36xf32, #tpu.memory_space<vmem>>, vector<9x36xf32>,
    %c0_27 = arith.constant 0 : index
    %c2 = arith.constant 2 : index
    %c0_28 = arith.constant 0 : index
    %c0_29 = arith.constant 0 : index
    %28 = vector.load %arg1[%c0_27, %c2, %c0_28, %c0_29] : memref<1x4x8x32xf32, #tpu.memory_space<vmem>>, vector<1x1x8x32xf32>
    %29 = vector.shape_cast %28 : vector<1x1x8x32xf32> to vector<8x32xf32>
    %c0_30 = arith.constant 0 : index
    %c0_31 = arith.constant 0 : index
    %30 = vector.load %arg2[%c0_30, %c0_31] : memref<1x32xf32, #tpu.memory_space<vmem>>, vector<1x32xf32>
    %31 = vector.broadcast %30 : vector<1x32xf32> to vector<8x32xf32>
    %32 = arith.mulf %29, %31 : vector<8x32xf32>
    %c0_32 = arith.constant 0 : index
    %c0_33 = arith.constant 0 : index
    %33 = vector.load %arg3[%c0_32, %c0_33] : memref<1x32xf32, #tpu.memory_space<vmem>>, vector<1x32xf32>
    %34 = vector.broadcast %33 : vector<1x32xf32> to vector<8x32xf32>
    %35 = arith.addf %32, %34 : vector<8x32xf32>
    %cst_34 = arith.constant 0.000000e+00 : f32
    %36 = vector.broadcast %cst_34 : f32 to vector<8x32xf32>
    %37 = arith.maximumf %35, %36 : vector<8x32xf32>
    %c0_35 = arith.constant 0 : index
    %c4_36 = arith.constant 4 : index
    %38 = vector.load %arg12[%c0_35, %c4_36] : memref<9x36xf32, #tpu.memory_space<vmem>>, vector<8x32xf32>
    tpu.vector_store %arg12[%c0_35, %c4_36], %37 {strides = array<i32>} : memref<9x36xf32, #tpu.memory_space<vmem>>, vector<8x32xf32>,
    %cst_37 = arith.constant 0.000000e+00 : f32
    %39 = vector.broadcast %cst_37 : f32 to vector<9x36xf32>
    %c0_38 = arith.constant 0 : index
    %c0_39 = arith.constant 0 : index
    %40 = vector.load %arg13[%c0_38, %c0_39] : memref<9x36xf32, #tpu.memory_space<vmem>>, vector<9x36xf32>
    tpu.vector_store %arg13[%c0_38, %c0_39], %39 {strides = array<i32>} : memref<9x36xf32, #tpu.memory_space<vmem>>, vector<9x36xf32>,
    %c0_40 = arith.constant 0 : index
    %c3 = arith.constant 3 : index
    %c0_41 = arith.constant 0 : index
    %c0_42 = arith.constant 0 : index
    %41 = vector.load %arg1[%c0_40, %c3, %c0_41, %c0_42] : memref<1x4x8x32xf32, #tpu.memory_space<vmem>>, vector<1x1x8x32xf32>
    %42 = vector.shape_cast %41 : vector<1x1x8x32xf32> to vector<8x32xf32>
    %c0_43 = arith.constant 0 : index
    %c0_44 = arith.constant 0 : index
    %43 = vector.load %arg2[%c0_43, %c0_44] : memref<1x32xf32, #tpu.memory_space<vmem>>, vector<1x32xf32>
    %44 = vector.broadcast %43 : vector<1x32xf32> to vector<8x32xf32>
    %45 = arith.mulf %42, %44 : vector<8x32xf32>
    %c0_45 = arith.constant 0 : index
    %c0_46 = arith.constant 0 : index
    %46 = vector.load %arg3[%c0_45, %c0_46] : memref<1x32xf32, #tpu.memory_space<vmem>>, vector<1x32xf32>
    %47 = vector.broadcast %46 : vector<1x32xf32> to vector<8x32xf32>
    %48 = arith.addf %45, %47 : vector<8x32xf32>
    %cst_47 = arith.constant 0.000000e+00 : f32
    %49 = vector.broadcast %cst_47 : f32 to vector<8x32xf32>
    %50 = arith.maximumf %48, %49 : vector<8x32xf32>
    %c0_48 = arith.constant 0 : index
    %c0_49 = arith.constant 0 : index
    %51 = vector.load %arg13[%c0_48, %c0_49] : memref<9x36xf32, #tpu.memory_space<vmem>>, vector<8x32xf32>
    tpu.vector_store %arg13[%c0_48, %c0_49], %50 {strides = array<i32>} : memref<9x36xf32, #tpu.memory_space<vmem>>, vector<8x32xf32>,
    %c0_50 = arith.constant 0 : index
    %c0_51 = arith.constant 0 : index
    %52 = vector.load %arg8[%c0_50, %c0_51] : memref<32x64xf32, #tpu.memory_space<vmem>>, vector<32x64xf32>
    %cst_52 = arith.constant dense<0.000000e+00> : vector<8x64xf32>
    %53 = tpu.matmul %50, %52, %cst_52 {dimension_numbers = #tpu.dot_dimension_numbers<[1], [0], [0], [1], [0, 0, 1, 1], [], []>} : vector<8x32xf32>, vector<32x64xf32>, vector<8x64xf32> -> vector<8x64xf32>
    %cst_53 = arith.constant 0.000000e+00 : f32
    %54 = vector.broadcast %cst_53 : f32 to vector<8x64xf32>
    %c0_54 = arith.constant 0 : index
    %c0_55 = arith.constant 0 : index
    %55 = vector.load %arg10[%c0_54, %c0_55] : memref<9x36xf32, #tpu.memory_space<vmem>>, vector<8x32xf32>
    %c0_56 = arith.constant 0 : index
    %c0_57 = arith.constant 0 : index
    %c0_58 = arith.constant 0 : index
    %56 = vector.load %arg4[%c0_56, %c0_57, %c0_58] : memref<9x32x64xf32, #tpu.memory_space<vmem>>, vector<1x32x64xf32>
    %57 = vector.shape_cast %56 : vector<1x32x64xf32> to vector<32x64xf32>
    %cst_59 = arith.constant dense<0.000000e+00> : vector<8x64xf32>
    %58 = tpu.matmul %55, %57, %cst_59 {dimension_numbers = #tpu.dot_dimension_numbers<[1], [0], [0], [1], [0, 0, 1, 1], [], []>} : vector<8x32xf32>, vector<32x64xf32>, vector<8x64xf32> -> vector<8x64xf32>
    %59 = arith.addf %54, %58 : vector<8x64xf32>
    %c0_60 = arith.constant 0 : index
    %c0_61 = arith.constant 0 : index
    %60 = vector.load %arg11[%c0_60, %c0_61] : memref<9x36xf32, #tpu.memory_space<vmem>>, vector<8x32xf32>
    %c1_62 = arith.constant 1 : index
    %c0_63 = arith.constant 0 : index
    %c0_64 = arith.constant 0 : index
    %61 = vector.load %arg4[%c1_62, %c0_63, %c0_64] : memref<9x32x64xf32, #tpu.memory_space<vmem>>, vector<1x32x64xf32>
    %62 = vector.shape_cast %61 : vector<1x32x64xf32> to vector<32x64xf32>
    %cst_65 = arith.constant dense<0.000000e+00> : vector<8x64xf32>
    %63 = tpu.matmul %60, %62, %cst_65 {dimension_numbers = #tpu.dot_dimension_numbers<[1], [0], [0], [1], [0, 0, 1, 1], [], []>} : vector<8x32xf32>, vector<32x64xf32>, vector<8x64xf32> -> vector<8x64xf32>
    %64 = arith.addf %59, %63 : vector<8x64xf32>
    %c0_66 = arith.constant 0 : index
    %c4_67 = arith.constant 4 : index
    %65 = vector.load %arg10[%c0_66, %c4_67] : memref<9x36xf32, #tpu.memory_space<vmem>>, vector<8x32xf32>
    %c2_68 = arith.constant 2 : index
    %c0_69 = arith.constant 0 : index
    %c0_70 = arith.constant 0 : index
    %66 = vector.load %arg4[%c2_68, %c0_69, %c0_70] : memref<9x32x64xf32, #tpu.memory_space<vmem>>, vector<1x32x64xf32>
    %67 = vector.shape_cast %66 : vector<1x32x64xf32> to vector<32x64xf32>
    %cst_71 = arith.constant dense<0.000000e+00> : vector<8x64xf32>
    %68 = tpu.matmul %65, %67, %cst_71 {dimension_numbers = #tpu.dot_dimension_numbers<[1], [0], [0], [1], [0, 0, 1, 1], [], []>} : vector<8x32xf32>, vector<32x64xf32>, vector<8x64xf32> -> vector<8x64xf32>
    %69 = arith.addf %64, %68 : vector<8x64xf32>
    %c0_72 = arith.constant 0 : index
    %c0_73 = arith.constant 0 : index
    %70 = vector.load %arg12[%c0_72, %c0_73] : memref<9x36xf32, #tpu.memory_space<vmem>>, vector<8x32xf32>
    %c3_74 = arith.constant 3 : index
    %c0_75 = arith.constant 0 : index
    %c0_76 = arith.constant 0 : index
    %71 = vector.load %arg4[%c3_74, %c0_75, %c0_76] : memref<9x32x64xf32, #tpu.memory_space<vmem>>, vector<1x32x64xf32>
    %72 = vector.shape_cast %71 : vector<1x32x64xf32> to vector<32x64xf32>
    %cst_77 = arith.constant dense<0.000000e+00> : vector<8x64xf32>
    %73 = tpu.matmul %70, %72, %cst_77 {dimension_numbers = #tpu.dot_dimension_numbers<[1], [0], [0], [1], [0, 0, 1, 1], [], []>} : vector<8x32xf32>, vector<32x64xf32>, vector<8x64xf32> -> vector<8x64xf32>
    %74 = arith.addf %69, %73 : vector<8x64xf32>
    %c0_78 = arith.constant 0 : index
    %c0_79 = arith.constant 0 : index
    %75 = vector.load %arg13[%c0_78, %c0_79] : memref<9x36xf32, #tpu.memory_space<vmem>>, vector<8x32xf32>
    %c4_80 = arith.constant 4 : index
    %c0_81 = arith.constant 0 : index
    %c0_82 = arith.constant 0 : index
    %76 = vector.load %arg4[%c4_80, %c0_81, %c0_82] : memref<9x32x64xf32, #tpu.memory_space<vmem>>, vector<1x32x64xf32>
    %77 = vector.shape_cast %76 : vector<1x32x64xf32> to vector<32x64xf32>
    %cst_83 = arith.constant dense<0.000000e+00> : vector<8x64xf32>
    %78 = tpu.matmul %75, %77, %cst_83 {dimension_numbers = #tpu.dot_dimension_numbers<[1], [0], [0], [1], [0, 0, 1, 1], [], []>} : vector<8x32xf32>, vector<32x64xf32>, vector<8x64xf32> -> vector<8x64xf32>
    %79 = arith.addf %74, %78 : vector<8x64xf32>
    %c0_84 = arith.constant 0 : index
    %c4_85 = arith.constant 4 : index
    %80 = vector.load %arg12[%c0_84, %c4_85] : memref<9x36xf32, #tpu.memory_space<vmem>>, vector<8x32xf32>
    %c5 = arith.constant 5 : index
    %c0_86 = arith.constant 0 : index
    %c0_87 = arith.constant 0 : index
    %81 = vector.load %arg4[%c5, %c0_86, %c0_87] : memref<9x32x64xf32, #tpu.memory_space<vmem>>, vector<1x32x64xf32>
    %82 = vector.shape_cast %81 : vector<1x32x64xf32> to vector<32x64xf32>
    %cst_88 = arith.constant dense<0.000000e+00> : vector<8x64xf32>
    %83 = tpu.matmul %80, %82, %cst_88 {dimension_numbers = #tpu.dot_dimension_numbers<[1], [0], [0], [1], [0, 0, 1, 1], [], []>} : vector<8x32xf32>, vector<32x64xf32>, vector<8x64xf32> -> vector<8x64xf32>
    %84 = arith.addf %79, %83 : vector<8x64xf32>
    %c1_89 = arith.constant 1 : index
    %c0_90 = arith.constant 0 : index
    %85 = vector.load %arg10[%c1_89, %c0_90] : memref<9x36xf32, #tpu.memory_space<vmem>>, vector<8x32xf32>
    %c6 = arith.constant 6 : index
    %c0_91 = arith.constant 0 : index
    %c0_92 = arith.constant 0 : index
    %86 = vector.load %arg4[%c6, %c0_91, %c0_92] : memref<9x32x64xf32, #tpu.memory_space<vmem>>, vector<1x32x64xf32>
    %87 = vector.shape_cast %86 : vector<1x32x64xf32> to vector<32x64xf32>
    %cst_93 = arith.constant dense<0.000000e+00> : vector<8x64xf32>
    %88 = tpu.matmul %85, %87, %cst_93 {dimension_numbers = #tpu.dot_dimension_numbers<[1], [0], [0], [1], [0, 0, 1, 1], [], []>} : vector<8x32xf32>, vector<32x64xf32>, vector<8x64xf32> -> vector<8x64xf32>
    %89 = arith.addf %84, %88 : vector<8x64xf32>
    %c1_94 = arith.constant 1 : index
    %c0_95 = arith.constant 0 : index
    %90 = vector.load %arg11[%c1_94, %c0_95] : memref<9x36xf32, #tpu.memory_space<vmem>>, vector<8x32xf32>
    %c7 = arith.constant 7 : index
    %c0_96 = arith.constant 0 : index
    %c0_97 = arith.constant 0 : index
    %91 = vector.load %arg4[%c7, %c0_96, %c0_97] : memref<9x32x64xf32, #tpu.memory_space<vmem>>, vector<1x32x64xf32>
    %92 = vector.shape_cast %91 : vector<1x32x64xf32> to vector<32x64xf32>
    %cst_98 = arith.constant dense<0.000000e+00> : vector<8x64xf32>
    %93 = tpu.matmul %90, %92, %cst_98 {dimension_numbers = #tpu.dot_dimension_numbers<[1], [0], [0], [1], [0, 0, 1, 1], [], []>} : vector<8x32xf32>, vector<32x64xf32>, vector<8x64xf32> -> vector<8x64xf32>
    %94 = arith.addf %89, %93 : vector<8x64xf32>
    %c1_99 = arith.constant 1 : index
    %c4_100 = arith.constant 4 : index
    %95 = vector.load %arg10[%c1_99, %c4_100] : memref<9x36xf32, #tpu.memory_space<vmem>>, vector<8x32xf32>
    %c8 = arith.constant 8 : index
    %c0_101 = arith.constant 0 : index
    %c0_102 = arith.constant 0 : index
    %96 = vector.load %arg4[%c8, %c0_101, %c0_102] : memref<9x32x64xf32, #tpu.memory_space<vmem>>, vector<1x32x64xf32>
    %97 = vector.shape_cast %96 : vector<1x32x64xf32> to vector<32x64xf32>
    %cst_103 = arith.constant dense<0.000000e+00> : vector<8x64xf32>
    %98 = tpu.matmul %95, %97, %cst_103 {dimension_numbers = #tpu.dot_dimension_numbers<[1], [0], [0], [1], [0, 0, 1, 1], [], []>} : vector<8x32xf32>, vector<32x64xf32>, vector<8x64xf32> -> vector<8x64xf32>
    %99 = arith.addf %94, %98 : vector<8x64xf32>
    %c0_104 = arith.constant 0 : index
    %c0_105 = arith.constant 0 : index
    %100 = vector.load %arg5[%c0_104, %c0_105] : memref<1x64xf32, #tpu.memory_space<vmem>>, vector<1x64xf32>
    %101 = vector.broadcast %100 : vector<1x64xf32> to vector<8x64xf32>
    %102 = arith.mulf %99, %101 : vector<8x64xf32>
    %c0_106 = arith.constant 0 : index
    %c0_107 = arith.constant 0 : index
    %103 = vector.load %arg6[%c0_106, %c0_107] : memref<1x64xf32, #tpu.memory_space<vmem>>, vector<1x64xf32>
    %104 = vector.broadcast %103 : vector<1x64xf32> to vector<8x64xf32>
    %105 = arith.addf %102, %104 : vector<8x64xf32>
    %cst_108 = arith.constant 0.000000e+00 : f32
    %106 = vector.broadcast %cst_108 : f32 to vector<8x64xf32>
    %107 = arith.maximumf %105, %106 : vector<8x64xf32>
    %cst_109 = arith.constant 0.000000e+00 : f32
    %108 = vector.broadcast %cst_109 : f32 to vector<10x80xf32>
    %c0_110 = arith.constant 0 : index
    %c0_111 = arith.constant 0 : index
    %109 = vector.load %arg14[%c0_110, %c0_111] : memref<10x80xf32, #tpu.memory_space<vmem>>, vector<10x80xf32>
    tpu.vector_store %arg14[%c0_110, %c0_111], %108 {strides = array<i32>} : memref<10x80xf32, #tpu.memory_space<vmem>>, vector<10x80xf32>,
    %c1_112 = arith.constant 1 : index
    %c8_113 = arith.constant 8 : index
    %110 = vector.load %arg14[%c1_112, %c8_113] : memref<10x80xf32, #tpu.memory_space<vmem>>, vector<8x64xf32>
    tpu.vector_store %arg14[%c1_112, %c8_113], %107 {strides = array<i32>} : memref<10x80xf32, #tpu.memory_space<vmem>>, vector<8x64xf32>,
    %c0_114 = arith.constant 0 : index
    %c0_115 = arith.constant 0 : index
    %111 = vector.load %arg14[%c0_114, %c0_115] : memref<10x80xf32, #tpu.memory_space<vmem>>, vector<8x64xf32>
    %c0_116 = arith.constant 0 : index
    %c0_117 = arith.constant 0 : index
    %c0_118 = arith.constant 0 : index
    %112 = vector.load %arg7[%c0_116, %c0_117, %c0_118] : memref<9x64x64xf32, #tpu.memory_space<vmem>>, vector<1x64x64xf32>
    %113 = vector.shape_cast %112 : vector<1x64x64xf32> to vector<64x64xf32>
    %cst_119 = arith.constant dense<0.000000e+00> : vector<8x64xf32>
    %114 = tpu.matmul %111, %113, %cst_119 {dimension_numbers = #tpu.dot_dimension_numbers<[1], [0], [0], [1], [0, 0, 1, 1], [], []>} : vector<8x64xf32>, vector<64x64xf32>, vector<8x64xf32> -> vector<8x64xf32>
    %115 = arith.addf %53, %114 : vector<8x64xf32>
    %c0_120 = arith.constant 0 : index
    %c8_121 = arith.constant 8 : index
    %116 = vector.load %arg14[%c0_120, %c8_121] : memref<10x80xf32, #tpu.memory_space<vmem>>, vector<8x64xf32>
    %c1_122 = arith.constant 1 : index
    %c0_123 = arith.constant 0 : index
    %c0_124 = arith.constant 0 : index
    %117 = vector.load %arg7[%c1_122, %c0_123, %c0_124] : memref<9x64x64xf32, #tpu.memory_space<vmem>>, vector<1x64x64xf32>
    %118 = vector.shape_cast %117 : vector<1x64x64xf32> to vector<64x64xf32>
    %cst_125 = arith.constant dense<0.000000e+00> : vector<8x64xf32>
    %119 = tpu.matmul %116, %118, %cst_125 {dimension_numbers = #tpu.dot_dimension_numbers<[1], [0], [0], [1], [0, 0, 1, 1], [], []>} : vector<8x64xf32>, vector<64x64xf32>, vector<8x64xf32> -> vector<8x64xf32>
    %120 = arith.addf %115, %119 : vector<8x64xf32>
    %c0_126 = arith.constant 0 : index
    %c16 = arith.constant 16 : index
    %121 = vector.load %arg14[%c0_126, %c16] : memref<10x80xf32, #tpu.memory_space<vmem>>, vector<8x64xf32>
    %c2_127 = arith.constant 2 : index
    %c0_128 = arith.constant 0 : index
    %c0_129 = arith.constant 0 : index
    %122 = vector.load %arg7[%c2_127, %c0_128, %c0_129] : memref<9x64x64xf32, #tpu.memory_space<vmem>>, vector<1x64x64xf32>
    %123 = vector.shape_cast %122 : vector<1x64x64xf32> to vector<64x64xf32>
    %cst_130 = arith.constant dense<0.000000e+00> : vector<8x64xf32>
    %124 = tpu.matmul %121, %123, %cst_130 {dimension_numbers = #tpu.dot_dimension_numbers<[1], [0], [0], [1], [0, 0, 1, 1], [], []>} : vector<8x64xf32>, vector<64x64xf32>, vector<8x64xf32> -> vector<8x64xf32>
    %125 = arith.addf %120, %124 : vector<8x64xf32>
    %c1_131 = arith.constant 1 : index
    %c0_132 = arith.constant 0 : index
    %126 = vector.load %arg14[%c1_131, %c0_132] : memref<10x80xf32, #tpu.memory_space<vmem>>, vector<8x64xf32>
    %c3_133 = arith.constant 3 : index
    %c0_134 = arith.constant 0 : index
    %c0_135 = arith.constant 0 : index
    %127 = vector.load %arg7[%c3_133, %c0_134, %c0_135] : memref<9x64x64xf32, #tpu.memory_space<vmem>>, vector<1x64x64xf32>
    %128 = vector.shape_cast %127 : vector<1x64x64xf32> to vector<64x64xf32>
    %cst_136 = arith.constant dense<0.000000e+00> : vector<8x64xf32>
    %129 = tpu.matmul %126, %128, %cst_136 {dimension_numbers = #tpu.dot_dimension_numbers<[1], [0], [0], [1], [0, 0, 1, 1], [], []>} : vector<8x64xf32>, vector<64x64xf32>, vector<8x64xf32> -> vector<8x64xf32>
    %130 = arith.addf %125, %129 : vector<8x64xf32>
    %c1_137 = arith.constant 1 : index
    %c8_138 = arith.constant 8 : index
    %131 = vector.load %arg14[%c1_137, %c8_138] : memref<10x80xf32, #tpu.memory_space<vmem>>, vector<8x64xf32>
    %c4_139 = arith.constant 4 : index
    %c0_140 = arith.constant 0 : index
    %c0_141 = arith.constant 0 : index
    %132 = vector.load %arg7[%c4_139, %c0_140, %c0_141] : memref<9x64x64xf32, #tpu.memory_space<vmem>>, vector<1x64x64xf32>
    %133 = vector.shape_cast %132 : vector<1x64x64xf32> to vector<64x64xf32>
    %cst_142 = arith.constant dense<0.000000e+00> : vector<8x64xf32>
    %134 = tpu.matmul %131, %133, %cst_142 {dimension_numbers = #tpu.dot_dimension_numbers<[1], [0], [0], [1], [0, 0, 1, 1], [], []>} : vector<8x64xf32>, vector<64x64xf32>, vector<8x64xf32> -> vector<8x64xf32>
    %135 = arith.addf %130, %134 : vector<8x64xf32>
    %c1_143 = arith.constant 1 : index
    %c16_144 = arith.constant 16 : index
    %136 = vector.load %arg14[%c1_143, %c16_144] : memref<10x80xf32, #tpu.memory_space<vmem>>, vector<8x64xf32>
    %c5_145 = arith.constant 5 : index
    %c0_146 = arith.constant 0 : index
    %c0_147 = arith.constant 0 : index
    %137 = vector.load %arg7[%c5_145, %c0_146, %c0_147] : memref<9x64x64xf32, #tpu.memory_space<vmem>>, vector<1x64x64xf32>
    %138 = vector.shape_cast %137 : vector<1x64x64xf32> to vector<64x64xf32>
    %cst_148 = arith.constant dense<0.000000e+00> : vector<8x64xf32>
    %139 = tpu.matmul %136, %138, %cst_148 {dimension_numbers = #tpu.dot_dimension_numbers<[1], [0], [0], [1], [0, 0, 1, 1], [], []>} : vector<8x64xf32>, vector<64x64xf32>, vector<8x64xf32> -> vector<8x64xf32>
    %140 = arith.addf %135, %139 : vector<8x64xf32>
    %c2_149 = arith.constant 2 : index
    %c0_150 = arith.constant 0 : index
    %141 = vector.load %arg14[%c2_149, %c0_150] : memref<10x80xf32, #tpu.memory_space<vmem>>, vector<8x64xf32>
    %c6_151 = arith.constant 6 : index
    %c0_152 = arith.constant 0 : index
    %c0_153 = arith.constant 0 : index
    %142 = vector.load %arg7[%c6_151, %c0_152, %c0_153] : memref<9x64x64xf32, #tpu.memory_space<vmem>>, vector<1x64x64xf32>
    %143 = vector.shape_cast %142 : vector<1x64x64xf32> to vector<64x64xf32>
    %cst_154 = arith.constant dense<0.000000e+00> : vector<8x64xf32>
    %144 = tpu.matmul %141, %143, %cst_154 {dimension_numbers = #tpu.dot_dimension_numbers<[1], [0], [0], [1], [0, 0, 1, 1], [], []>} : vector<8x64xf32>, vector<64x64xf32>, vector<8x64xf32> -> vector<8x64xf32>
    %145 = arith.addf %140, %144 : vector<8x64xf32>
    %c2_155 = arith.constant 2 : index
    %c8_156 = arith.constant 8 : index
    %146 = vector.load %arg14[%c2_155, %c8_156] : memref<10x80xf32, #tpu.memory_space<vmem>>, vector<8x64xf32>
    %c7_157 = arith.constant 7 : index
    %c0_158 = arith.constant 0 : index
    %c0_159 = arith.constant 0 : index
    %147 = vector.load %arg7[%c7_157, %c0_158, %c0_159] : memref<9x64x64xf32, #tpu.memory_space<vmem>>, vector<1x64x64xf32>
    %148 = vector.shape_cast %147 : vector<1x64x64xf32> to vector<64x64xf32>
    %cst_160 = arith.constant dense<0.000000e+00> : vector<8x64xf32>
    %149 = tpu.matmul %146, %148, %cst_160 {dimension_numbers = #tpu.dot_dimension_numbers<[1], [0], [0], [1], [0, 0, 1, 1], [], []>} : vector<8x64xf32>, vector<64x64xf32>, vector<8x64xf32> -> vector<8x64xf32>
    %150 = arith.addf %145, %149 : vector<8x64xf32>
    %c2_161 = arith.constant 2 : index
    %c16_162 = arith.constant 16 : index
    %151 = vector.load %arg14[%c2_161, %c16_162] : memref<10x80xf32, #tpu.memory_space<vmem>>, vector<8x64xf32>
    %c8_163 = arith.constant 8 : index
    %c0_164 = arith.constant 0 : index
    %c0_165 = arith.constant 0 : index
    %152 = vector.load %arg7[%c8_163, %c0_164, %c0_165] : memref<9x64x64xf32, #tpu.memory_space<vmem>>, vector<1x64x64xf32>
    %153 = vector.shape_cast %152 : vector<1x64x64xf32> to vector<64x64xf32>
    %cst_166 = arith.constant dense<0.000000e+00> : vector<8x64xf32>
    %154 = tpu.matmul %151, %153, %cst_166 {dimension_numbers = #tpu.dot_dimension_numbers<[1], [0], [0], [1], [0, 0, 1, 1], [], []>} : vector<8x64xf32>, vector<64x64xf32>, vector<8x64xf32> -> vector<8x64xf32>
    %155 = arith.addf %150, %154 : vector<8x64xf32>
    %c0_167 = arith.constant 0 : index
    %c0_168 = arith.constant 0 : index
    %c0_169 = arith.constant 0 : index
    %156 = vector.load %arg9[%c0_167, %c0_168, %c0_169] : memref<1x8x64xf32, #tpu.memory_space<vmem>>, vector<1x8x64xf32>
    %157 = vector.shape_cast %156 : vector<1x8x64xf32> to vector<8x64xf32>
    %158 = vector.shape_cast %155 : vector<8x64xf32> to vector<1x8x64xf32>
    tpu.vector_store %arg9[%c0_167, %c0_168, %c0_169], %158 {strides = array<i32>} : memref<1x8x64xf32, #tpu.memory_space<vmem>>, vector<1x8x64xf32>,
    return
  }
  func.func @transform_0(%arg0: i32) -> (i32, i32, i32, i32) {
    %c0_i32 = arith.constant 0 : i32
    %c0_i32_0 = arith.constant 0 : i32
    %c0_i32_1 = arith.constant 0 : i32
    %c0_i32_2 = arith.constant 0 : i32
    return %arg0, %c0_i32, %c0_i32_0, %c0_i32_1 : i32, i32, i32, i32
  }
  func.func @transform_1(%arg0: i32) -> (i32, i32) {
    %c0_i32 = arith.constant 0 : i32
    %c0_i32_0 = arith.constant 0 : i32
    %c0_i32_1 = arith.constant 0 : i32
    return %c0_i32, %c0_i32_0 : i32, i32
  }
  func.func @transform_2(%arg0: i32) -> (i32, i32) {
    %c0_i32 = arith.constant 0 : i32
    %c0_i32_0 = arith.constant 0 : i32
    %c0_i32_1 = arith.constant 0 : i32
    return %c0_i32, %c0_i32_0 : i32, i32
  }
  func.func @transform_3(%arg0: i32) -> (i32, i32, i32) {
    %c0_i32 = arith.constant 0 : i32
    %c0_i32_0 = arith.constant 0 : i32
    %c0_i32_1 = arith.constant 0 : i32
    %c0_i32_2 = arith.constant 0 : i32
    return %c0_i32, %c0_i32_0, %c0_i32_1 : i32, i32, i32
  }
  func.func @transform_4(%arg0: i32) -> (i32, i32) {
    %c0_i32 = arith.constant 0 : i32
    %c0_i32_0 = arith.constant 0 : i32
    %c0_i32_1 = arith.constant 0 : i32
    return %c0_i32, %c0_i32_0 : i32, i32
  }
  func.func @transform_5(%arg0: i32) -> (i32, i32) {
    %c0_i32 = arith.constant 0 : i32
    %c0_i32_0 = arith.constant 0 : i32
    %c0_i32_1 = arith.constant 0 : i32
    return %c0_i32, %c0_i32_0 : i32, i32
  }
  func.func @transform_6(%arg0: i32) -> (i32, i32, i32) {
    %c0_i32 = arith.constant 0 : i32
    %c0_i32_0 = arith.constant 0 : i32
    %c0_i32_1 = arith.constant 0 : i32
    %c0_i32_2 = arith.constant 0 : i32
    return %c0_i32, %c0_i32_0, %c0_i32_1 : i32, i32, i32
  }
  func.func @transform_7(%arg0: i32) -> (i32, i32) {
    %c0_i32 = arith.constant 0 : i32
    %c0_i32_0 = arith.constant 0 : i32
    %c0_i32_1 = arith.constant 0 : i32
    return %c0_i32, %c0_i32_0 : i32, i32
  }
  func.func @transform_8(%arg0: i32) -> (i32, i32, i32) {
    %c0_i32 = arith.constant 0 : i32
    %c0_i32_0 = arith.constant 0 : i32
    %c0_i32_1 = arith.constant 0 : i32
    return %arg0, %c0_i32, %c0_i32_0 : i32, i32, i32
  }
}

</mosaic_0001>

<llo_original>
// kernel: mul.2
$region0: #{mul.2}
  #allocation0 [shape = 's32[1]{0}', space=sflag, size = 0x4, scoped, tag = 'scoped memory for mul.2']
  %s0 = inlined_call_operand.vmem [shape: f32[32,64], index: 0, kind: input, shape index: {}]
  %s1 = inlined_call_operand.vmem [shape: f32[32,64], index: 1, kind: input, shape index: {}]
  %s2 = inlined_call_operand.vmem [shape: f32[32,64], index: 2, kind: output, shape index: {}]
  %v3 = vld [vmem:[%s0] sm:$0xff]
  %v4 = vld [vmem:[%s1] sm:$0xff]
  %5 = xla_tuple %v3, %v4
  %6 = xla_tuple %5
  %v7 = vmul.f32 %v3, %v4
  %8 = xla_tuple %v7
  %9 = vst [vmem:[%s2] sm:$0xff] %v7
  %s10 = scalar_lea.vmem %s0, 8
  %v11 = vld [vmem:[%s10] sm:$0xff]
  %s12 = scalar_lea.vmem %s1, 8
  %v13 = vld [vmem:[%s12] sm:$0xff]
  %14 = xla_tuple %v11, %v13
  %15 = xla_tuple %14
  %v16 = vmul.f32 %v11, %v13
  %17 = xla_tuple %v16
  %s18 = scalar_lea.vmem %s2, 8
  %19 = vst [vmem:[%s18] sm:$0xff] %v16
  %s20 = scalar_lea.vmem %s0, 16
  %v21 = vld [vmem:[%s20] sm:$0xff]
  %s22 = scalar_lea.vmem %s1, 16
  %v23 = vld [vmem:[%s22] sm:$0xff]
  %24 = xla_tuple %v21, %v23
  %25 = xla_tuple %24
  %v26 = vmul.f32 %v21, %v23
  %27 = xla_tuple %v26
  %s28 = scalar_lea.vmem %s2, 16
  %29 = vst [vmem:[%s28] sm:$0xff] %v26
  %s30 = scalar_lea.vmem %s0, 24
  %v31 = vld [vmem:[%s30] sm:$0xff]
  %s32 = scalar_lea.vmem %s1, 24
  %v33 = vld [vmem:[%s32] sm:$0xff]
  %34 = xla_tuple %v31, %v33
  %35 = xla_tuple %34
  %v36 = vmul.f32 %v31, %v33
  %37 = xla_tuple %v36
  %s38 = scalar_lea.vmem %s2, 24
  %39 = vst [vmem:[%s38] sm:$0xff] %v36

// kernel: tile.43
$region0: #{tile.43}
  #allocation0 [shape = 's32[1]{0}', space=sflag, size = 0x4, scoped, tag = 'scoped memory for tile.43']
  %s0 = inlined_call_operand.vmem [shape: f32[8], index: 0, kind: input, shape index: {}]
  %s1 = inlined_call_operand.vmem [shape: f32[8,8], index: 1, kind: output, shape index: {}]
  // Predicated region
  $region2: #{tile.43} parent=0 // pred_check
    _
  $region3: #{tile.43} parent=0 // pred_check_branch
    %3 = sbr.rel (0) target = $region5
  $region4: #{tile.43} parent=0 // pred_region
    _
  $region5: #{tile.43} parent=0 // pred_fallthru
    _
  %v4 = vld [vmem:[%s0] ss:$0 sm:$0xff]
  %5 = vst [vmem:[%s1] sm:$0xff] %v4

// kernel: tile.44
$region0: #{tile.44}
  %s0 = inlined_call_operand.vmem [shape: f32[8,8], index: 0, kind: input, shape index: {}]
  %s1 = inlined_call_operand.vmem [shape: f32[1,64], index: 1, kind: output, shape index: {}]
  $region1: #{tile.44} parent=0
    #allocation0 [shape = 'u8[4096]{0}', space=vmem, size = 0x1000, scoped, tag = 'scoped mem for output reshape']
    %v2 = vld [vmem:[%s0] sm:$0x1]
    %vm3 = vcmask 64512
    %4 = vst.msk [vmem:[#allocation0] sm:$0x1] %vm3, %v2
    %s5 = scalar_lea.vmem %s0, 7
    %v6 = vld [vmem:[%s5] sm:$0x1]
    %7 = vrot.lane.b32.xlu0 %v6, 56
    %v8 = vpop.permute.xlu0 %7
    %vm9 = vcmask 523712
    %10 = vst.msk [vmem:[#allocation0] sm:$0x1] %vm9, %v8
    %s11 = scalar_lea.vmem %s0, 6
    %v12 = vld [vmem:[%s11] sm:$0x1]
    %13 = vrot.lane.b32.xlu0 %v12, 48
    %v14 = vpop.permute.xlu0 %13
    %vm15 = vcmask 458112
    %16 = vst.msk [vmem:[#allocation0] sm:$0x1] %vm15, %v14
    %s17 = scalar_lea.vmem %s0, 5
    %v18 = vld [vmem:[%s17] sm:$0x1]
    %19 = vrot.lane.b32.xlu0 %v18, 40
    %v20 = vpop.permute.xlu0 %19
    %vm21 = vcmask 392512
    %22 = vst.msk [vmem:[#allocation0] sm:$0x1] %vm21, %v20
    %s23 = scalar_lea.vmem %s0, 4
    %v24 = vld [vmem:[%s23] sm:$0x1]
    %25 = vrot.lane.b32.xlu0 %v24, 32
    %v26 = vpop.permute.xlu0 %25
    %vm27 = vcmask 326912
    %28 = vst.msk [vmem:[#allocation0] sm:$0x1] %vm27, %v26
    %s29 = scalar_lea.vmem %s0, 3
    %v30 = vld [vmem:[%s29] sm:$0x1]
    %31 = vrot.lane.b32.xlu0 %v30, 24
    %v32 = vpop.permute.xlu0 %31
    %vm33 = vcmask 261312
    %34 = vst.msk [vmem:[#allocation0] sm:$0x1] %vm33, %v32
    %s35 = scalar_lea.vmem %s0, 2
    %v36 = vld [vmem:[%s35] sm:$0x1]
    %37 = vrot.lane.b32.xlu0 %v36, 16
    %v38 = vpop.permute.xlu0 %37
    %vm39 = vcmask 195712
    %40 = vst.msk [vmem:[#allocation0] sm:$0x1] %vm39, %v38
    %s41 = scalar_lea.vmem %s0, 1
    %v42 = vld [vmem:[%s41] sm:$0x1]
    %43 = vrot.lane.b32.xlu0 %v42, 8
    %v44 = vpop.permute.xlu0 %43
    %vm45 = vcmask 130112
    %46 = vst.msk [vmem:[#allocation0] sm:$0x1] %vm45, %v44
    %s48 = sshll.u32 1, 1
    %s49 = ssub.s32 %s48, 1
    %v51 = vld [vmem:[#allocation0] sm:%s49]
    %s52 = sshll.u32 1, 1
    %s53 = ssub.s32 %s52, 1
    %54 = vst [vmem:[%s1] sm:%s53] %v51

// kernel: tile.54
$region0: #{tile.54}
  %s0 = inlined_call_operand.vmem [shape: f32[8,4], index: 0, kind: input, shape index: {}]
  %s1 = inlined_call_operand.vmem [shape: f32[1,32], index: 1, kind: output, shape index: {}]
  $region1: #{tile.54} parent=0
    #allocation0 [shape = 'u8[4096]{0}', space=vmem, size = 0x1000, scoped, tag = 'scoped mem for output reshape']
    %v2 = vld [vmem:[%s0] sm:$0x1]
    %vm3 = vcmask 31744
    %4 = vst.msk [vmem:[#allocation0] sm:$0x1] %vm3, %v2
    %s5 = scalar_lea.vmem %s0, 7
    %v6 = vld [vmem:[%s5] sm:$0x1]
    %7 = vrot.lane.b32.xlu0 %v6, 28
    %v8 = vpop.permute.xlu0 %7
    %vm9 = vcmask 261344
    %10 = vst.msk [vmem:[#allocation0] sm:$0x1] %vm9, %v8
    %s11 = scalar_lea.vmem %s0, 6
    %v12 = vld [vmem:[%s11] sm:$0x1]
    %13 = vrot.lane.b32.xlu0 %v12, 24
    %v14 = vpop.permute.xlu0 %13
    %vm15 = vcmask 228544
    %16 = vst.msk [vmem:[#allocation0] sm:$0x1] %vm15, %v14
    %s17 = scalar_lea.vmem %s0, 5
    %v18 = vld [vmem:[%s17] sm:$0x1]
    %19 = vrot.lane.b32.xlu0 %v18, 20
    %v20 = vpop.permute.xlu0 %19
    %vm21 = vcmask 195744
    %22 = vst.msk [vmem:[#allocation0] sm:$0x1] %vm21, %v20
    %s23 = scalar_lea.vmem %s0, 4
    %v24 = vld [vmem:[%s23] sm:$0x1]
    %25 = vrot.lane.b32.xlu0 %v24, 16
    %v26 = vpop.permute.xlu0 %25
    %vm27 = vcmask 162944
    %28 = vst.msk [vmem:[#allocation0] sm:$0x1] %vm27, %v26
    %s29 = scalar_lea.vmem %s0, 3
    %v30 = vld [vmem:[%s29] sm:$0x1]
    %31 = vrot.lane.b32.xlu0 %v30, 12
    %v32 = vpop.permute.xlu0 %31
    %vm33 = vcmask 130144
    %34 = vst.msk [vmem:[#allocation0] sm:$0x1] %vm33, %v32
    %s35 = scalar_lea.vmem %s0, 2
    %v36 = vld [vmem:[%s35] sm:$0x1]
    %37 = vrot.lane.b32.xlu0 %v36, 8
    %v38 = vpop.permute.xlu0 %37
    %vm39 = vcmask 97344
    %40 = vst.msk [vmem:[#allocation0] sm:$0x1] %vm39, %v38
    %s41 = scalar_lea.vmem %s0, 1
    %v42 = vld [vmem:[%s41] sm:$0x1]
    %43 = vrot.lane.b32.xlu0 %v42, 4
    %v44 = vpop.permute.xlu0 %43
    %vm45 = vcmask 64544
    %46 = vst.msk [vmem:[#allocation0] sm:$0x1] %vm45, %v44
    %s48 = sshll.u32 1, 1
    %s49 = ssub.s32 %s48, 1
    %v51 = vld [vmem:[#allocation0] sm:%s49]
    %s52 = sshll.u32 1, 1
    %s53 = ssub.s32 %s52, 1
    %54 = vst [vmem:[%s1] sm:%s53] %v51

// kernel: tile.53
$region0: #{tile.53}
  #allocation0 [shape = 's32[1]{0}', space=sflag, size = 0x4, scoped, tag = 'scoped memory for tile.53']
  %s0 = inlined_call_operand.vmem [shape: f32[4], index: 0, kind: input, shape index: {}]
  %s1 = inlined_call_operand.vmem [shape: f32[8,4], index: 1, kind: output, shape index: {}]
  // Predicated region
  $region2: #{tile.53} parent=0 // pred_check
    _
  $region3: #{tile.53} parent=0 // pred_check_branch
    %3 = sbr.rel (0) target = $region5
  $region4: #{tile.53} parent=0 // pred_region
    _
  $region5: #{tile.53} parent=0 // pred_fallthru
    _
  %v4 = vld [vmem:[%s0] ss:$0 sm:$0xff]
  %5 = vst [vmem:[%s1] sm:$0xff] %v4

// kernel: network_block_forward.3
$region0: #{network_block_forward.3}
  #allocation0 [shape = 'u32[]', space=smem, size = 0x4, offset = 0x4, fixed_abs, tag = 'smem constant byte address 0x4 - core index']
  #allocation1 [shape = 'u32[144,128]{1,0:T(1,128)}', space=vmem, size = 0x12000, scoped, tag = 'internal scratch']
  #allocation2 [shape = 'f32[10,80]{1,0:T(8,128)}', space=vmem, size = 0x2000, scoped, tag = 'scratch operand']
  #allocation3 [shape = 'f32[10,80]{1,0:T(8,128)}', space=vmem, size = 0x2000, scoped, tag = 'scratch operand']
  %s0 = inlined_call_operand.vmem [shape: f32[2,8,64], index: 0, kind: input, shape index: {}]
  %s1 = inlined_call_operand.vmem [shape: f32[1,64], index: 1, kind: input, shape index: {}]
  %s2 = inlined_call_operand.vmem [shape: f32[1,64], index: 2, kind: input, shape index: {}]
  %s3 = inlined_call_operand.vmem [shape: f32[9,64,64], index: 3, kind: input, shape index: {}]
  %s4 = inlined_call_operand.vmem [shape: f32[1,64], index: 4, kind: input, shape index: {}]
  %s5 = inlined_call_operand.vmem [shape: f32[1,64], index: 5, kind: input, shape index: {}]
  %s6 = inlined_call_operand.vmem [shape: f32[9,64,64], index: 6, kind: input, shape index: {}]
  %s7 = inlined_call_operand.vmem [shape: f32[2,8,64], index: 7, kind: output, shape index: {}]
  %s8 = sld [smem:[#allocation0]]
  $region61: #{network_block_forward.3} parent=0
    _
  %s10 = ssub.s32 1, %s8
  %s11 = scalar_select 0, %s10, %s8
  loop: start=0, step=1, limit=4
  $region2: #{network_block_forward.3} parent=0 // loop_pre_header
    _
  $region3: #{network_block_forward.3} parent=0 // loop_header
    %s13 = sphi 0, %s17
    %p14 = scmp.ge.s32.totalorder %s13, 4
    %s23 = sphi 0, %s25
    %s26 = sphi 0, %s23
    %s27 = sphi 0, %s26
    %s43 = sphi 0, %s27
    %s47 = sphi 0, %s47
    %s49 = sphi 0, %s47
    %s50 = sphi 0, %s49
    %s64 = sphi 0, %s50
    %s68 = sphi 0, %s68
    %s70 = sphi 0, %s68
    %s71 = sphi 0, %s70
    %s85 = sphi 0, %s71
    %s89 = sphi 0, %s89
    %s91 = sphi 0, %s89
    %s92 = sphi 0, %s91
    %s106 = sphi 0, %s92
    %s110 = sphi 0, %s110
    %s112 = sphi 0, %s110
    %s113 = sphi 0, %s112
    %s127 = sphi 0, %s113
    %s131 = sphi 0, %s131
    %s133 = sphi 0, %s131
    %s134 = sphi 0, %s133
    %s148 = sphi 0, %s134
    %s152 = sphi 0, %s152
    %s154 = sphi 0, %s152
    %s155 = sphi 0, %s154
    %s169 = sphi 0, %s155
    %s175 = sphi 0, %s177
    %s178 = sphi 0, %s175
    %s179 = sphi 0, %s178
    %s195 = sphi 0, %s179
  $region4: #{network_block_forward.3} parent=0 // loop_header_branch
    %16 = sbr.rel (%p14) target = $region8
  $region5: #{network_block_forward.3} parent=0 // loop_body
    %s18 = ssub.s32 %s13, 1
    %s19 = ssub.s32 %s13, 2
    %s20 = sadd.s32 %s13, 1
    %s21 = ssub.s32 %s13, %s20
    %p22 = scmp.eq.s32.totalorder %s21, 0
    %s24 = sadd.s32 %s23, 1
    %s25 = scalar_select %p22, %s23, %s24
    %p28 = pneg %p22
    %p29 = scmp.eq.s32.totalorder %s13, 1
    %p30 = por %p28, %p29
    %p31 = scmp.ne.s32.totalorder %s23, %s26
    %p32 = scmp.eq.s32.totalorder %s13, 0
    %p33 = por %p31, %p32
    %p34 = scmp.ne.s32.totalorder %s23, %s26
    %p35 = scmp.eq.s32.totalorder %s18, 1
    %p36 = por %p34, %p35
    %p37 = scmp.ne.s32.totalorder %s26, %s27
    %p38 = scmp.eq.s32.totalorder %s18, 0
    %p39 = por %p37, %p38
    %p40 = scmp.ne.s32.totalorder %s26, %s27
    %p41 = scmp.eq.s32.totalorder %s19, 1
    %p42 = por %p40, %p41
    %p44 = scmp.ne.s32.totalorder %s27, %s43
    %p45 = scmp.eq.s32.totalorder %s19, 0
    %p46 = por %p44, %p45
    %s48 = sadd.s32 %s47, 1
    %p51 = scmp.eq.s32.totalorder %s13, 1
    %p52 = scmp.ne.s32.totalorder %s47, %s49
    %p53 = scmp.eq.s32.totalorder %s13, 0
    %p54 = por %p52, %p53
    %p55 = scmp.ne.s32.totalorder %s47, %s49
    %p56 = scmp.eq.s32.totalorder %s18, 1
    %p57 = por %p55, %p56
    %p58 = scmp.ne.s32.totalorder %s49, %s50
    %p59 = scmp.eq.s32.totalorder %s18, 0
    %p60 = por %p58, %p59
    %p61 = scmp.ne.s32.totalorder %s49, %s50
    %p62 = scmp.eq.s32.totalorder %s19, 1
    %p63 = por %p61, %p62
    %p65 = scmp.ne.s32.totalorder %s50, %s64
    %p66 = scmp.eq.s32.totalorder %s19, 0
    %p67 = por %p65, %p66
    %s69 = sadd.s32 %s68, 1
    %p72 = scmp.eq.s32.totalorder %s13, 1
    %p73 = scmp.ne.s32.totalorder %s68, %s70
    %p74 = scmp.eq.s32.totalorder %s13, 0
    %p75 = por %p73, %p74
    %p76 = scmp.ne.s32.totalorder %s68, %s70
    %p77 = scmp.eq.s32.totalorder %s18, 1
    %p78 = por %p76, %p77
    %p79 = scmp.ne.s32.totalorder %s70, %s71
    %p80 = scmp.eq.s32.totalorder %s18, 0
    %p81 = por %p79, %p80
    %p82 = scmp.ne.s32.totalorder %s70, %s71
    %p83 = scmp.eq.s32.totalorder %s19, 1
    %p84 = por %p82, %p83
    %p86 = scmp.ne.s32.totalorder %s71, %s85
    %p87 = scmp.eq.s32.totalorder %s19, 0
    %p88 = por %p86, %p87
    %s90 = sadd.s32 %s89, 1
    %p93 = scmp.eq.s32.totalorder %s13, 1
    %p94 = scmp.ne.s32.totalorder %s89, %s91
    %p95 = scmp.eq.s32.totalorder %s13, 0
    %p96 = por %p94, %p95
    %p97 = scmp.ne.s32.totalorder %s89, %s91
    %p98 = scmp.eq.s32.totalorder %s18, 1
    %p99 = por %p97, %p98
    %p100 = scmp.ne.s32.totalorder %s91, %s92
    %p101 = scmp.eq.s32.totalorder %s18, 0
    %p102 = por %p100, %p101
    %p103 = scmp.ne.s32.totalorder %s91, %s92
    %p104 = scmp.eq.s32.totalorder %s19, 1
    %p105 = por %p103, %p104
    %p107 = scmp.ne.s32.totalorder %s92, %s106
    %p108 = scmp.eq.s32.totalorder %s19, 0
    %p109 = por %p107, %p108
    %s111 = sadd.s32 %s110, 1
    %p114 = scmp.eq.s32.totalorder %s13, 1
    %p115 = scmp.ne.s32.totalorder %s110, %s112
    %p116 = scmp.eq.s32.totalorder %s13, 0
    %p117 = por %p115, %p116
    %p118 = scmp.ne.s32.totalorder %s110, %s112
    %p119 = scmp.eq.s32.totalorder %s18, 1
    %p120 = por %p118, %p119
    %p121 = scmp.ne.s32.totalorder %s112, %s113
    %p122 = scmp.eq.s32.totalorder %s18, 0
    %p123 = por %p121, %p122
    %p124 = scmp.ne.s32.totalorder %s112, %s113
    %p125 = scmp.eq.s32.totalorder %s19, 1
    %p126 = por %p124, %p125
    %p128 = scmp.ne.s32.totalorder %s113, %s127
    %p129 = scmp.eq.s32.totalorder %s19, 0
    %p130 = por %p128, %p129
    %s132 = sadd.s32 %s131, 1
    %p135 = scmp.eq.s32.totalorder %s13, 1
    %p136 = scmp.ne.s32.totalorder %s131, %s133
    %p137 = scmp.eq.s32.totalorder %s13, 0
    %p138 = por %p136, %p137
    %p139 = scmp.ne.s32.totalorder %s131, %s133
    %p140 = scmp.eq.s32.totalorder %s18, 1
    %p141 = por %p139, %p140
    %p142 = scmp.ne.s32.totalorder %s133, %s134
    %p143 = scmp.eq.s32.totalorder %s18, 0
    %p144 = por %p142, %p143
    %p145 = scmp.ne.s32.totalorder %s133, %s134
    %p146 = scmp.eq.s32.totalorder %s19, 1
    %p147 = por %p145, %p146
    %p149 = scmp.ne.s32.totalorder %s134, %s148
    %p150 = scmp.eq.s32.totalorder %s19, 0
    %p151 = por %p149, %p150
    %s153 = sadd.s32 %s152, 1
    %p156 = scmp.eq.s32.totalorder %s13, 1
    %p157 = scmp.ne.s32.totalorder %s152, %s154
    %p158 = scmp.eq.s32.totalorder %s13, 0
    %p159 = por %p157, %p158
    %p160 = scmp.ne.s32.totalorder %s152, %s154
    %p161 = scmp.eq.s32.totalorder %s18, 1
    %p162 = por %p160, %p161
    %p163 = scmp.ne.s32.totalorder %s154, %s155
    %p164 = scmp.eq.s32.totalorder %s18, 0
    %p165 = por %p163, %p164
    %p166 = scmp.ne.s32.totalorder %s154, %s155
    %p167 = scmp.eq.s32.totalorder %s19, 1
    %p168 = por %p166, %p167
    %p170 = scmp.ne.s32.totalorder %s155, %s169
    %p171 = scmp.eq.s32.totalorder %s19, 0
    %p172 = por %p170, %p171
    %s173 = ssub.s32 %s13, %s20
    %p174 = scmp.eq.s32.totalorder %s173, 0
    %s176 = sadd.s32 %s175, 1
    %s177 = scalar_select %p174, %s175, %s176
    %p180 = pneg %p174
    %p181 = scmp.eq.s32.totalorder %s13, 1
    %p182 = por %p180, %p181
    %p183 = scmp.ne.s32.totalorder %s175, %s178
    %p184 = scmp.eq.s32.totalorder %s13, 0
    %p185 = por %p183, %p184
    %p186 = scmp.ne.s32.totalorder %s175, %s178
    %p187 = scmp.eq.s32.totalorder %s18, 1
    %p188 = por %p186, %p187
    %p189 = scmp.ne.s32.totalorder %s178, %s179
    %p190 = scmp.eq.s32.totalorder %s18, 0
    %p191 = por %p189, %p190
    %p192 = scmp.ne.s32.totalorder %s178, %s179
    %p193 = scmp.eq.s32.totalorder %s19, 1
    %p194 = por %p192, %p193
    %p196 = scmp.ne.s32.totalorder %s179, %s195
    %p197 = scmp.eq.s32.totalorder %s19, 0
    %p198 = por %p196, %p197
    %p199 = scmp.le.s32.totalorder 1, %s13
    %p200 = scmp.lt.s32.totalorder %s13, 3
    %p201 = pnand %p199, %p200
    %p202 = pneg %p201
    // Predicated region
    $region9: #{network_block_forward.3} parent=5 // pred_check
      _
    $region10: #{network_block_forward.3} parent=5 // pred_check_branch
      %204 = sbr.rel (%p201) target = $region12
    $region11: #{network_block_forward.3} parent=5 // pred_region
      %s205 = ssub.s32 %s13, 1
      // Predicated region
      $region13: #{network_block_forward.3} parent=11 // pred_check
        %p206 = pneg %p60
      $region14: #{network_block_forward.3} parent=11 // pred_check_branch
        %208 = sbr.rel (%p206) target = $region16
      $region15: #{network_block_forward.3} parent=11 // pred_region
        _
      $region16: #{network_block_forward.3} parent=11 // pred_fallthru
        _
      // Predicated region
      $region17: #{network_block_forward.3} parent=11 // pred_check
        %p209 = pneg %p81
      $region18: #{network_block_forward.3} parent=11 // pred_check_branch
        %211 = sbr.rel (%p209) target = $region20
      $region19: #{network_block_forward.3} parent=11 // pred_region
        _
      $region20: #{network_block_forward.3} parent=11 // pred_fallthru
        _
      // Predicated region
      $region21: #{network_block_forward.3} parent=11 // pred_check
        %p212 = pneg %p102
      $region22: #{network_block_forward.3} parent=11 // pred_check_branch
        %214 = sbr.rel (%p212) target = $region24
      $region23: #{network_block_forward.3} parent=11 // pred_region
        _
      $region24: #{network_block_forward.3} parent=11 // pred_fallthru
        _
      // Predicated region
      $region25: #{network_block_forward.3} parent=11 // pred_check
        %p215 = pneg %p123
      $region26: #{network_block_forward.3} parent=11 // pred_check_branch
        %217 = sbr.rel (%p215) target = $region28
      $region27: #{network_block_forward.3} parent=11 // pred_region
        _
      $region28: #{network_block_forward.3} parent=11 // pred_fallthru
        _
      // Predicated region
      $region29: #{network_block_forward.3} parent=11 // pred_check
        %p218 = pneg %p144
      $region30: #{network_block_forward.3} parent=11 // pred_check_branch
        %220 = sbr.rel (%p218) target = $region32
      $region31: #{network_block_forward.3} parent=11 // pred_region
        _
      $region32: #{network_block_forward.3} parent=11 // pred_fallthru
        _
      // Predicated region
      $region33: #{network_block_forward.3} parent=11 // pred_check
        %p221 = pneg %p165
      $region34: #{network_block_forward.3} parent=11 // pred_check_branch
        %223 = sbr.rel (%p221) target = $region36
      $region35: #{network_block_forward.3} parent=11 // pred_region
        _
      $region36: #{network_block_forward.3} parent=11 // pred_fallthru
        _
    $region12: #{network_block_forward.3} parent=5 // pred_fallthru
      _
    %p224 = scmp.lt.s32.totalorder %s13, 2
    // Predicated region
    $region37: #{network_block_forward.3} parent=5 // pred_check
      %p225 = pneg %p224
    $region38: #{network_block_forward.3} parent=5 // pred_check_branch
      %227 = sbr.rel (%p225) target = $region40
    $region39: #{network_block_forward.3} parent=5 // pred_region
      // Predicated region
      $region41: #{network_block_forward.3} parent=39 // pred_check
        %p228 = pneg %p33
      $region42: #{network_block_forward.3} parent=39 // pred_check_branch
        %230 = sbr.rel (%p228) target = $region44
      $region43: #{network_block_forward.3} parent=39 // pred_region
        %p231 = scmp.lt.s32.totalorder %s13, 1
        %s232 = scalar_select %p231, %s13, 1
        %s233 = smul.addr %s232, 8
        %s234 = scalar_lea.vmem %s0, %s233
      $region44: #{network_block_forward.3} parent=39 // pred_fallthru
        _
    $region40: #{network_block_forward.3} parent=5 // pred_fallthru
      _
    %p235 = scmp.le.s32.totalorder 1, %s13
    %p236 = scmp.lt.s32.totalorder %s13, 3
    %p237 = pnand %p235, %p236
    %p238 = pneg %p237
    // Predicated region
    $region45: #{network_block_forward.3} parent=5 // pred_check
      _
    $region46: #{network_block_forward.3} parent=5 // pred_check_branch
      %240 = sbr.rel (%p237) target = $region48
    $region47: #{network_block_forward.3} parent=5 // pred_region
      %s241 = ssub.s32 %s13, 1
      %p242 = scmp.lt.s32.totalorder %s18, 1
      %s243 = scalar_select %p242, %s18, 1
      %s244 = smul.addr %s243, 8
      %s245 = scalar_lea.vmem %s0, %s244
      %p246 = pneg %p39
      %p247 = pneg %p36
      %p248 = pneg %p60
      %p249 = pneg %p57
      %p250 = pneg %p81
      %p251 = pneg %p78
      %p252 = pneg %p102
      %p253 = pneg %p99
      %p254 = pneg %p123
      %p255 = pneg %p120
      %p256 = pneg %p144
      %p257 = pneg %p141
      %p258 = pneg %p165
      %p259 = pneg %p162
      %p260 = pneg %p191
      %p261 = pneg %p188
      %p262 = scmp.lt.s32.totalorder %s18, 1
      %s263 = scalar_select %p262, %s18, 1
      %s264 = smul.addr %s263, 8
      %s265 = scalar_lea.vmem %s7, %s264
      %p266 = scmp.lt.s32.totalorder %s18, 1
      %s267 = scalar_select %p266, %s18, 1
      %s268 = smul.addr %s267, 8
      %s269 = scalar_lea.vmem %s0, %s268
      %p270 = scmp.lt.s32.totalorder %s18, 1
      %s271 = scalar_select %p270, %s18, 1
      %s272 = smul.addr %s271, 8
      %s273 = scalar_lea.vmem %s7, %s272
      %v274 = vld [vmem:[%s269] sm:$0xff]
      %v275 = vld [vmem:[%s1] sm:$0x1]
      %v277 = vlaneseq
      %v278 = vshrl.u32 %v277, 7
      %v279 = vsub.s32 0, %v278
      %v280 = vrot.slane %v275, %v279
      %v282 = vmul.f32 %v274, %v280
      %v283 = vld [vmem:[%s2] sm:$0x1]
      %v285 = vlaneseq
      %v286 = vshrl.u32 %v285, 7
      %v287 = vsub.s32 0, %v286
      %v288 = vrot.slane %v283, %v287
      %v290 = vadd.f32 %v282, %v288
      %v291 = vmax.f32 %v290, 0.0
      %vm292 = vcmask 654336
      %293 = vst.msk [vmem:[#allocation2] sm:$0xff] %vm292, 0.0
      %vm294 = vcmask 648192
      %295 = vst.msk [vmem:[#allocation2 + $0x8] sm:$0x3] %vm294, 0.0
      %297 = vrot.lane.b32.xlu0 %v291, 8
      %v298 = vpop.permute.xlu0 %297
      %vm300 = vcmask 588864
      %301 = vst.msk [vmem:[#allocation2 + $0x1] sm:$0xff] %vm300, %v298
      %v302 = vld [vmem:[#allocation2] sm:$0xff]
      %v303 = vld [vmem:[%s3] sm:$0xff]
      %v304 = vld [vmem:[%s3 + $0x8] sm:$0xff]
      %v305 = vld [vmem:[%s3 + $0x10] sm:$0xff]
      %v306 = vld [vmem:[%s3 + $0x18] sm:$0xff]
      %v307 = vld [vmem:[%s3 + $0x20] sm:$0xff]
      %v308 = vld [vmem:[%s3 + $0x28] sm:$0xff]
      %v309 = vld [vmem:[%s3 + $0x30] sm:$0xff]
      %v310 = vld [vmem:[%s3 + $0x38] sm:$0xff]
      %s311 = scalar_lea.vmem %s3, 64
      %v312 = vld [vmem:[%s311] sm:$0xff]
      %v313 = vld [vmem:[%s311 + $0x8] sm:$0xff]
      %v314 = vld [vmem:[%s311 + $0x10] sm:$0xff]
      %v315 = vld [vmem:[%s311 + $0x18] sm:$0xff]
      %v316 = vld [vmem:[%s311 + $0x20] sm:$0xff]
      %v317 = vld [vmem:[%s311 + $0x28] sm:$0xff]
      %v318 = vld [vmem:[%s311 + $0x30] sm:$0xff]
      %v319 = vld [vmem:[%s311 + $0x38] sm:$0xff]
      %321 = vrot.lane.b32.xlu0 %v302, 120
      %v322 = vpop.permute.xlu0 %321
      %vm323 = vcmask 523264
      %v324 = vsel %vm323, %v322, 0
      %326 = vmatprep.subr.mxu0 0.0
      %327 = vmatpush1.msra.mxu0 0.0
      %328 = vmatprep.subr.mxu0 0.0
      %329 = vmatpush1.msra.mxu0 0.0
      %330 = vmatprep.subr.mxu0 0.0
      %331 = vmatpush1.msra.mxu0 0.0
      %332 = vmatprep.subr.mxu0 0.0
      %333 = vmatpush1.msra.mxu0 0.0
      %334 = vmatprep.subr.mxu0 0.0
      %335 = vmatpush1.msra.mxu0 0.0
      %336 = vmatprep.subr.mxu0 0.0
      %337 = vmatpush1.msra.mxu0 0.0
      %338 = vmatprep.subr.mxu0 0.0
      %339 = vmatpush1.msra.mxu0 0.0
      %340 = vmatprep.subr.mxu0 0.0
      %341 = vmatpush1.msra.mxu0 0.0
      %342 = vmatprep.subr.mxu0 0.0
      %343 = vmatpush1.msra.mxu0 %v319
      %344 = vmatprep.subr.mxu0 0.0
      %345 = vmatpush1.msra.mxu0 %v318
      %346 = vmatprep.subr.mxu0 0.0
      %347 = vmatpush1.msra.mxu0 %v317
      %348 = vmatprep.subr.mxu0 0.0
      %349 = vmatpush1.msra.mxu0 %v316
      %350 = vmatprep.subr.mxu0 0.0
      %351 = vmatpush1.msra.mxu0 %v315
      %352 = vmatprep.subr.mxu0 0.0
      %353 = vmatpush1.msra.mxu0 %v314
      %354 = vmatprep.subr.mxu0 0.0
      %355 = vmatpush1.msra.mxu0 %v313
      %356 = vmatprep.subr.mxu0 0.0
      %357 = vmatpush1.msra.mxu0 %v312
      %358 = vmatprep.subr.mxu0 0.0
      %359 = vmatpush2.msra.mxu0 0.0
      %360 = vmatprep.subr.mxu0 0.0
      %361 = vmatpush2.msra.mxu0 0.0
      %362 = vmatprep.subr.mxu0 0.0
      %363 = vmatpush2.msra.mxu0 0.0
      %364 = vmatprep.subr.mxu0 0.0
      %365 = vmatpush2.msra.mxu0 0.0
      %366 = vmatprep.subr.mxu0 0.0
      %367 = vmatpush2.msra.mxu0 0.0
      %368 = vmatprep.subr.mxu0 0.0
      %369 = vmatpush2.msra.mxu0 0.0
      %370 = vmatprep.subr.mxu0 0.0
      %371 = vmatpush2.msra.mxu0 0.0
      %372 = vmatprep.subr.mxu0 0.0
      %373 = vmatpush2.msra.mxu0 0.0
      %374 = vmatprep.subr.mxu0 0.0
      %375 = vmatpush2.msra.mxu0 0.0
      %376 = vmatprep.subr.mxu0 0.0
      %377 = vmatpush2.msra.mxu0 0.0
      %378 = vmatprep.subr.mxu0 0.0
      %379 = vmatpush2.msra.mxu0 0.0
      %380 = vmatprep.subr.mxu0 0.0
      %381 = vmatpush2.msra.mxu0 0.0
      %382 = vmatprep.subr.mxu0 0.0
      %383 = vmatpush2.msra.mxu0 0.0
      %384 = vmatprep.subr.mxu0 0.0
      %385 = vmatpush2.msra.mxu0 0.0
      %386 = vmatprep.subr.mxu0 0.0
      %387 = vmatpush2.msra.mxu0 0.0
      %388 = vmatprep.subr.mxu0 0.0
      %389 = vmatpush2.msra.mxu0 0.0
      %390 = vmatprep.mubr.f32.mxu0 0.0
      %391 = vmatmul.mubr.f32.gmra.mxu0 %v324
      %v392 = vpop.f32.mrf.mxu0
      %v393 = vadd.f32 0.0, %v392
      %v394 = vpop.f32.mrf.mxu0
      %395 = vdwg.mxu0
      %v396 = vsel %vm323, %v302, 0
      %398 = vmatprep.subr.mxu0 0.0
      %399 = vmatpush1.msra.mxu0 0.0
      %400 = vmatprep.subr.mxu0 0.0
      %401 = vmatpush1.msra.mxu0 0.0
      %402 = vmatprep.subr.mxu0 0.0
      %403 = vmatpush1.msra.mxu0 0.0
      %404 = vmatprep.subr.mxu0 0.0
      %405 = vmatpush1.msra.mxu0 0.0
      %406 = vmatprep.subr.mxu0 0.0
      %407 = vmatpush1.msra.mxu0 0.0
      %408 = vmatprep.subr.mxu0 0.0
      %409 = vmatpush1.msra.mxu0 0.0
      %410 = vmatprep.subr.mxu0 0.0
      %411 = vmatpush1.msra.mxu0 0.0
      %412 = vmatprep.subr.mxu0 0.0
      %413 = vmatpush1.msra.mxu0 0.0
      %414 = vmatprep.subr.mxu0 0.0
      %415 = vmatpush1.msra.mxu0 %v310
      %416 = vmatprep.subr.mxu0 0.0
      %417 = vmatpush1.msra.mxu0 %v309
      %418 = vmatprep.subr.mxu0 0.0
      %419 = vmatpush1.msra.mxu0 %v308
      %420 = vmatprep.subr.mxu0 0.0
      %421 = vmatpush1.msra.mxu0 %v307
      %422 = vmatprep.subr.mxu0 0.0
      %423 = vmatpush1.msra.mxu0 %v306
      %424 = vmatprep.subr.mxu0 0.0
      %425 = vmatpush1.msra.mxu0 %v305
      %426 = vmatprep.subr.mxu0 0.0
      %427 = vmatpush1.msra.mxu0 %v304
      %428 = vmatprep.subr.mxu0 0.0
      %429 = vmatpush1.msra.mxu0 %v303
      %430 = vmatprep.subr.mxu0 0.0
      %431 = vmatpush2.msra.mxu0 0.0
      %432 = vmatprep.subr.mxu0 0.0
      %433 = vmatpush2.msra.mxu0 0.0
      %434 = vmatprep.subr.mxu0 0.0
      %435 = vmatpush2.msra.mxu0 0.0
      %436 = vmatprep.subr.mxu0 0.0
      %437 = vmatpush2.msra.mxu0 0.0
      %438 = vmatprep.subr.mxu0 0.0
      %439 = vmatpush2.msra.mxu0 0.0
      %440 = vmatprep.subr.mxu0 0.0
      %441 = vmatpush2.msra.mxu0 0.0
      %442 = vmatprep.subr.mxu0 0.0
      %443 = vmatpush2.msra.mxu0 0.0
      %444 = vmatprep.subr.mxu0 0.0
      %445 = vmatpush2.msra.mxu0 0.0
      %446 = vmatprep.subr.mxu0 0.0
      %447 = vmatpush2.msra.mxu0 0.0
      %448 = vmatprep.subr.mxu0 0.0
      %449 = vmatpush2.msra.mxu0 0.0
      %450 = vmatprep.subr.mxu0 0.0
      %451 = vmatpush2.msra.mxu0 0.0
      %452 = vmatprep.subr.mxu0 0.0
      %453 = vmatpush2.msra.mxu0 0.0
      %454 = vmatprep.subr.mxu0 0.0
      %455 = vmatpush2.msra.mxu0 0.0
      %456 = vmatprep.subr.mxu0 0.0
      %457 = vmatpush2.msra.mxu0 0.0
      %458 = vmatprep.subr.mxu0 0.0
      %459 = vmatpush2.msra.mxu0 0.0
      %460 = vmatprep.subr.mxu0 0.0
      %461 = vmatpush2.msra.mxu0 0.0
      %462 = vmatprep.mubr.f32.mxu0 0.0
      %463 = vmatmul.mubr.f32.gmra.mxu0 %v396
      %v464 = vpop.f32.mrf.mxu0
      %v465 = vadd.f32 %v393, %v464
      %v466 = vpop.f32.mrf.mxu0
      %467 = vdwg.mxu0
      %s468 = scalar_lea.vmem %s3, 128
      %v469 = vld [vmem:[%s468] sm:$0xff]
      %v470 = vld [vmem:[%s468 + $0x8] sm:$0xff]
      %v471 = vld [vmem:[%s468 + $0x10] sm:$0xff]
      %v472 = vld [vmem:[%s468 + $0x18] sm:$0xff]
      %v473 = vld [vmem:[%s468 + $0x20] sm:$0xff]
      %v474 = vld [vmem:[%s468 + $0x28] sm:$0xff]
      %v475 = vld [vmem:[%s468 + $0x30] sm:$0xff]
      %v476 = vld [vmem:[%s468 + $0x38] sm:$0xff]
      %477 = vrot.lane.b32.xlu0 %v302, 112
      %v478 = vpop.permute.xlu0 %477
      %v479 = vsel %vm323, %v478, 0
      %481 = vmatprep.subr.mxu0 0.0
      %482 = vmatpush1.msra.mxu0 0.0
      %483 = vmatprep.subr.mxu0 0.0
      %484 = vmatpush1.msra.mxu0 0.0
      %485 = vmatprep.subr.mxu0 0.0
      %486 = vmatpush1.msra.mxu0 0.0
      %487 = vmatprep.subr.mxu0 0.0
      %488 = vmatpush1.msra.mxu0 0.0
      %489 = vmatprep.subr.mxu0 0.0
      %490 = vmatpush1.msra.mxu0 0.0
      %491 = vmatprep.subr.mxu0 0.0
      %492 = vmatpush1.msra.mxu0 0.0
      %493 = vmatprep.subr.mxu0 0.0
      %494 = vmatpush1.msra.mxu0 0.0
      %495 = vmatprep.subr.mxu0 0.0
      %496 = vmatpush1.msra.mxu0 0.0
      %497 = vmatprep.subr.mxu0 0.0
      %498 = vmatpush1.msra.mxu0 %v476
      %499 = vmatprep.subr.mxu0 0.0
      %500 = vmatpush1.msra.mxu0 %v475
      %501 = vmatprep.subr.mxu0 0.0
      %502 = vmatpush1.msra.mxu0 %v474
      %503 = vmatprep.subr.mxu0 0.0
      %504 = vmatpush1.msra.mxu0 %v473
      %505 = vmatprep.subr.mxu0 0.0
      %506 = vmatpush1.msra.mxu0 %v472
      %507 = vmatprep.subr.mxu0 0.0
      %508 = vmatpush1.msra.mxu0 %v471
      %509 = vmatprep.subr.mxu0 0.0
      %510 = vmatpush1.msra.mxu0 %v470
      %511 = vmatprep.subr.mxu0 0.0
      %512 = vmatpush1.msra.mxu0 %v469
      %513 = vmatprep.subr.mxu0 0.0
      %514 = vmatpush2.msra.mxu0 0.0
      %515 = vmatprep.subr.mxu0 0.0
      %516 = vmatpush2.msra.mxu0 0.0
      %517 = vmatprep.subr.mxu0 0.0
      %518 = vmatpush2.msra.mxu0 0.0
      %519 = vmatprep.subr.mxu0 0.0
      %520 = vmatpush2.msra.mxu0 0.0
      %521 = vmatprep.subr.mxu0 0.0
      %522 = vmatpush2.msra.mxu0 0.0
      %523 = vmatprep.subr.mxu0 0.0
      %524 = vmatpush2.msra.mxu0 0.0
      %525 = vmatprep.subr.mxu0 0.0
      %526 = vmatpush2.msra.mxu0 0.0
      %527 = vmatprep.subr.mxu0 0.0
      %528 = vmatpush2.msra.mxu0 0.0
      %529 = vmatprep.subr.mxu0 0.0
      %530 = vmatpush2.msra.mxu0 0.0
      %531 = vmatprep.subr.mxu0 0.0
      %532 = vmatpush2.msra.mxu0 0.0
      %533 = vmatprep.subr.mxu0 0.0
      %534 = vmatpush2.msra.mxu0 0.0
      %535 = vmatprep.subr.mxu0 0.0
      %536 = vmatpush2.msra.mxu0 0.0
      %537 = vmatprep.subr.mxu0 0.0
      %538 = vmatpush2.msra.mxu0 0.0
      %539 = vmatprep.subr.mxu0 0.0
      %540 = vmatpush2.msra.mxu0 0.0
      %541 = vmatprep.subr.mxu0 0.0
      %542 = vmatpush2.msra.mxu0 0.0
      %543 = vmatprep.subr.mxu0 0.0
      %544 = vmatpush2.msra.mxu0 0.0
      %545 = vmatprep.mubr.f32.mxu0 0.0
      %546 = vmatmul.mubr.f32.gmra.mxu0 %v479
      %v547 = vpop.f32.mrf.mxu0
      %v548 = vadd.f32 0.0, %v547
      %v549 = vpop.f32.mrf.mxu0
      %550 = vdwg.mxu0
      %v551 = vadd.f32 %v465, %v548
      %v552 = vld [vmem:[#allocation2 + $0x1] sm:$0xff]
      %s553 = scalar_lea.vmem %s3, 192
      %v554 = vld [vmem:[%s553] sm:$0xff]
      %v555 = vld [vmem:[%s553 + $0x8] sm:$0xff]
      %v556 = vld [vmem:[%s553 + $0x10] sm:$0xff]
      %v557 = vld [vmem:[%s553 + $0x18] sm:$0xff]
      %v558 = vld [vmem:[%s553 + $0x20] sm:$0xff]
      %v559 = vld [vmem:[%s553 + $0x28] sm:$0xff]
      %v560 = vld [vmem:[%s553 + $0x30] sm:$0xff]
      %v561 = vld [vmem:[%s553 + $0x38] sm:$0xff]
      %v563 = vsel %vm323, %v552, 0
      %565 = vmatprep.subr.mxu0 0.0
      %566 = vmatpush1.msra.mxu0 0.0
      %567 = vmatprep.subr.mxu0 0.0
      %568 = vmatpush1.msra.mxu0 0.0
      %569 = vmatprep.subr.mxu0 0.0
      %570 = vmatpush1.msra.mxu0 0.0
      %571 = vmatprep.subr.mxu0 0.0
      %572 = vmatpush1.msra.mxu0 0.0
      %573 = vmatprep.subr.mxu0 0.0
      %574 = vmatpush1.msra.mxu0 0.0
      %575 = vmatprep.subr.mxu0 0.0
      %576 = vmatpush1.msra.mxu0 0.0
      %577 = vmatprep.subr.mxu0 0.0
      %578 = vmatpush1.msra.mxu0 0.0
      %579 = vmatprep.subr.mxu0 0.0
      %580 = vmatpush1.msra.mxu0 0.0
      %581 = vmatprep.subr.mxu0 0.0
      %582 = vmatpush1.msra.mxu0 %v561
      %583 = vmatprep.subr.mxu0 0.0
      %584 = vmatpush1.msra.mxu0 %v560
      %585 = vmatprep.subr.mxu0 0.0
      %586 = vmatpush1.msra.mxu0 %v559
      %587 = vmatprep.subr.mxu0 0.0
      %588 = vmatpush1.msra.mxu0 %v558
      %589 = vmatprep.subr.mxu0 0.0
      %590 = vmatpush1.msra.mxu0 %v557
      %591 = vmatprep.subr.mxu0 0.0
      %592 = vmatpush1.msra.mxu0 %v556
      %593 = vmatprep.subr.mxu0 0.0
      %594 = vmatpush1.msra.mxu0 %v555
      %595 = vmatprep.subr.mxu0 0.0
      %596 = vmatpush1.msra.mxu0 %v554
      %597 = vmatprep.subr.mxu0 0.0
      %598 = vmatpush2.msra.mxu0 0.0
      %599 = vmatprep.subr.mxu0 0.0
      %600 = vmatpush2.msra.mxu0 0.0
      %601 = vmatprep.subr.mxu0 0.0
      %602 = vmatpush2.msra.mxu0 0.0
      %603 = vmatprep.subr.mxu0 0.0
      %604 = vmatpush2.msra.mxu0 0.0
      %605 = vmatprep.subr.mxu0 0.0
      %606 = vmatpush2.msra.mxu0 0.0
      %607 = vmatprep.subr.mxu0 0.0
      %608 = vmatpush2.msra.mxu0 0.0
      %609 = vmatprep.subr.mxu0 0.0
      %610 = vmatpush2.msra.mxu0 0.0
      %611 = vmatprep.subr.mxu0 0.0
      %612 = vmatpush2.msra.mxu0 0.0
      %613 = vmatprep.subr.mxu0 0.0
      %614 = vmatpush2.msra.mxu0 0.0
      %615 = vmatprep.subr.mxu0 0.0
      %616 = vmatpush2.msra.mxu0 0.0
      %617 = vmatprep.subr.mxu0 0.0
      %618 = vmatpush2.msra.mxu0 0.0
      %619 = vmatprep.subr.mxu0 0.0
      %620 = vmatpush2.msra.mxu0 0.0
      %621 = vmatprep.subr.mxu0 0.0
      %622 = vmatpush2.msra.mxu0 0.0
      %623 = vmatprep.subr.mxu0 0.0
      %624 = vmatpush2.msra.mxu0 0.0
      %625 = vmatprep.subr.mxu0 0.0
      %626 = vmatpush2.msra.mxu0 0.0
      %627 = vmatprep.subr.mxu0 0.0
      %628 = vmatpush2.msra.mxu0 0.0
      %629 = vmatprep.mubr.f32.mxu0 0.0
      %630 = vmatmul.mubr.f32.gmra.mxu0 %v563
      %v631 = vpop.f32.mrf.mxu0
      %v632 = vadd.f32 0.0, %v631
      %v633 = vpop.f32.mrf.mxu0
      %634 = vdwg.mxu0
      %v635 = vadd.f32 %v551, %v632
      %s636 = scalar_lea.vmem %s3, 256
      %v637 = vld [vmem:[%s636] sm:$0xff]
      %v638 = vld [vmem:[%s636 + $0x8] sm:$0xff]
      %v639 = vld [vmem:[%s636 + $0x10] sm:$0xff]
      %v640 = vld [vmem:[%s636 + $0x18] sm:$0xff]
      %v641 = vld [vmem:[%s636 + $0x20] sm:$0xff]
      %v642 = vld [vmem:[%s636 + $0x28] sm:$0xff]
      %v643 = vld [vmem:[%s636 + $0x30] sm:$0xff]
      %v644 = vld [vmem:[%s636 + $0x38] sm:$0xff]
      %645 = vrot.lane.b32.xlu0 %v552, 120
      %v646 = vpop.permute.xlu0 %645
      %v647 = vsel %vm323, %v646, 0
      %649 = vmatprep.subr.mxu0 0.0
      %650 = vmatpush1.msra.mxu0 0.0
      %651 = vmatprep.subr.mxu0 0.0
      %652 = vmatpush1.msra.mxu0 0.0
      %653 = vmatprep.subr.mxu0 0.0
      %654 = vmatpush1.msra.mxu0 0.0
      %655 = vmatprep.subr.mxu0 0.0
      %656 = vmatpush1.msra.mxu0 0.0
      %657 = vmatprep.subr.mxu0 0.0
      %658 = vmatpush1.msra.mxu0 0.0
      %659 = vmatprep.subr.mxu0 0.0
      %660 = vmatpush1.msra.mxu0 0.0
      %661 = vmatprep.subr.mxu0 0.0
      %662 = vmatpush1.msra.mxu0 0.0
      %663 = vmatprep.subr.mxu0 0.0
      %664 = vmatpush1.msra.mxu0 0.0
      %665 = vmatprep.subr.mxu0 0.0
      %666 = vmatpush1.msra.mxu0 %v644
      %667 = vmatprep.subr.mxu0 0.0
      %668 = vmatpush1.msra.mxu0 %v643
      %669 = vmatprep.subr.mxu0 0.0
      %670 = vmatpush1.msra.mxu0 %v642
      %671 = vmatprep.subr.mxu0 0.0
      %672 = vmatpush1.msra.mxu0 %v641
      %673 = vmatprep.subr.mxu0 0.0
      %674 = vmatpush1.msra.mxu0 %v640
      %675 = vmatprep.subr.mxu0 0.0
      %676 = vmatpush1.msra.mxu0 %v639
      %677 = vmatprep.subr.mxu0 0.0
      %678 = vmatpush1.msra.mxu0 %v638
      %679 = vmatprep.subr.mxu0 0.0
      %680 = vmatpush1.msra.mxu0 %v637
      %681 = vmatprep.subr.mxu0 0.0
      %682 = vmatpush2.msra.mxu0 0.0
      %683 = vmatprep.subr.mxu0 0.0
      %684 = vmatpush2.msra.mxu0 0.0
      %685 = vmatprep.subr.mxu0 0.0
      %686 = vmatpush2.msra.mxu0 0.0
      %687 = vmatprep.subr.mxu0 0.0
      %688 = vmatpush2.msra.mxu0 0.0
      %689 = vmatprep.subr.mxu0 0.0
      %690 = vmatpush2.msra.mxu0 0.0
      %691 = vmatprep.subr.mxu0 0.0
      %692 = vmatpush2.msra.mxu0 0.0
      %693 = vmatprep.subr.mxu0 0.0
      %694 = vmatpush2.msra.mxu0 0.0
      %695 = vmatprep.subr.mxu0 0.0
      %696 = vmatpush2.msra.mxu0 0.0
      %697 = vmatprep.subr.mxu0 0.0
      %698 = vmatpush2.msra.mxu0 0.0
      %699 = vmatprep.subr.mxu0 0.0
      %700 = vmatpush2.msra.mxu0 0.0
      %701 = vmatprep.subr.mxu0 0.0
      %702 = vmatpush2.msra.mxu0 0.0
      %703 = vmatprep.subr.mxu0 0.0
      %704 = vmatpush2.msra.mxu0 0.0
      %705 = vmatprep.subr.mxu0 0.0
      %706 = vmatpush2.msra.mxu0 0.0
      %707 = vmatprep.subr.mxu0 0.0
      %708 = vmatpush2.msra.mxu0 0.0
      %709 = vmatprep.subr.mxu0 0.0
      %710 = vmatpush2.msra.mxu0 0.0
      %711 = vmatprep.subr.mxu0 0.0
      %712 = vmatpush2.msra.mxu0 0.0
      %713 = vmatprep.mubr.f32.mxu0 0.0
      %714 = vmatmul.mubr.f32.gmra.mxu0 %v647
      %v715 = vpop.f32.mrf.mxu0
      %v716 = vadd.f32 0.0, %v715
      %v717 = vpop.f32.mrf.mxu0
      %718 = vdwg.mxu0
      %v719 = vadd.f32 %v635, %v716
      %s720 = scalar_lea.vmem %s3, 320
      %v721 = vld [vmem:[%s720] sm:$0xff]
      %v722 = vld [vmem:[%s720 + $0x8] sm:$0xff]
      %v723 = vld [vmem:[%s720 + $0x10] sm:$0xff]
      %v724 = vld [vmem:[%s720 + $0x18] sm:$0xff]
      %v725 = vld [vmem:[%s720 + $0x20] sm:$0xff]
      %v726 = vld [vmem:[%s720 + $0x28] sm:$0xff]
      %v727 = vld [vmem:[%s720 + $0x30] sm:$0xff]
      %v728 = vld [vmem:[%s720 + $0x38] sm:$0xff]
      %729 = vrot.lane.b32.xlu0 %v552, 112
      %v730 = vpop.permute.xlu0 %729
      %v731 = vsel %vm323, %v730, 0
      %733 = vmatprep.subr.mxu0 0.0
      %734 = vmatpush1.msra.mxu0 0.0
      %735 = vmatprep.subr.mxu0 0.0
      %736 = vmatpush1.msra.mxu0 0.0
      %737 = vmatprep.subr.mxu0 0.0
      %738 = vmatpush1.msra.mxu0 0.0
      %739 = vmatprep.subr.mxu0 0.0
      %740 = vmatpush1.msra.mxu0 0.0
      %741 = vmatprep.subr.mxu0 0.0
      %742 = vmatpush1.msra.mxu0 0.0
      %743 = vmatprep.subr.mxu0 0.0
      %744 = vmatpush1.msra.mxu0 0.0
      %745 = vmatprep.subr.mxu0 0.0
      %746 = vmatpush1.msra.mxu0 0.0
      %747 = vmatprep.subr.mxu0 0.0
      %748 = vmatpush1.msra.mxu0 0.0
      %749 = vmatprep.subr.mxu0 0.0
      %750 = vmatpush1.msra.mxu0 %v728
      %751 = vmatprep.subr.mxu0 0.0
      %752 = vmatpush1.msra.mxu0 %v727
      %753 = vmatprep.subr.mxu0 0.0
      %754 = vmatpush1.msra.mxu0 %v726
      %755 = vmatprep.subr.mxu0 0.0
      %756 = vmatpush1.msra.mxu0 %v725
      %757 = vmatprep.subr.mxu0 0.0
      %758 = vmatpush1.msra.mxu0 %v724
      %759 = vmatprep.subr.mxu0 0.0
      %760 = vmatpush1.msra.mxu0 %v723
      %761 = vmatprep.subr.mxu0 0.0
      %762 = vmatpush1.msra.mxu0 %v722
      %763 = vmatprep.subr.mxu0 0.0
      %764 = vmatpush1.msra.mxu0 %v721
      %765 = vmatprep.subr.mxu0 0.0
      %766 = vmatpush2.msra.mxu0 0.0
      %767 = vmatprep.subr.mxu0 0.0
      %768 = vmatpush2.msra.mxu0 0.0
      %769 = vmatprep.subr.mxu0 0.0
      %770 = vmatpush2.msra.mxu0 0.0
      %771 = vmatprep.subr.mxu0 0.0
      %772 = vmatpush2.msra.mxu0 0.0
      %773 = vmatprep.subr.mxu0 0.0
      %774 = vmatpush2.msra.mxu0 0.0
      %775 = vmatprep.subr.mxu0 0.0
      %776 = vmatpush2.msra.mxu0 0.0
      %777 = vmatprep.subr.mxu0 0.0
      %778 = vmatpush2.msra.mxu0 0.0
      %779 = vmatprep.subr.mxu0 0.0
      %780 = vmatpush2.msra.mxu0 0.0
      %781 = vmatprep.subr.mxu0 0.0
      %782 = vmatpush2.msra.mxu0 0.0
      %783 = vmatprep.subr.mxu0 0.0
      %784 = vmatpush2.msra.mxu0 0.0
      %785 = vmatprep.subr.mxu0 0.0
      %786 = vmatpush2.msra.mxu0 0.0
      %787 = vmatprep.subr.mxu0 0.0
      %788 = vmatpush2.msra.mxu0 0.0
      %789 = vmatprep.subr.mxu0 0.0
      %790 = vmatpush2.msra.mxu0 0.0
      %791 = vmatprep.subr.mxu0 0.0
      %792 = vmatpush2.msra.mxu0 0.0
      %793 = vmatprep.subr.mxu0 0.0
      %794 = vmatpush2.msra.mxu0 0.0
      %795 = vmatprep.subr.mxu0 0.0
      %796 = vmatpush2.msra.mxu0 0.0
      %797 = vmatprep.mubr.f32.mxu0 0.0
      %798 = vmatmul.mubr.f32.gmra.mxu0 %v731
      %v799 = vpop.f32.mrf.mxu0
      %v800 = vadd.f32 0.0, %v799
      %v801 = vpop.f32.mrf.mxu0
      %802 = vdwg.mxu0
      %v803 = vadd.f32 %v719, %v800
      %v804 = vld [vmem:[#allocation2 + $0x2] sm:$0xff]
      %s805 = scalar_lea.vmem %s3, 384
      %v806 = vld [vmem:[%s805] sm:$0xff]
      %v807 = vld [vmem:[%s805 + $0x8] sm:$0xff]
      %v808 = vld [vmem:[%s805 + $0x10] sm:$0xff]
      %v809 = vld [vmem:[%s805 + $0x18] sm:$0xff]
      %v810 = vld [vmem:[%s805 + $0x20] sm:$0xff]
      %v811 = vld [vmem:[%s805 + $0x28] sm:$0xff]
      %v812 = vld [vmem:[%s805 + $0x30] sm:$0xff]
      %v813 = vld [vmem:[%s805 + $0x38] sm:$0xff]
      %v815 = vsel %vm323, %v804, 0
      %817 = vmatprep.subr.mxu0 0.0
      %818 = vmatpush1.msra.mxu0 0.0
      %819 = vmatprep.subr.mxu0 0.0
      %820 = vmatpush1.msra.mxu0 0.0
      %821 = vmatprep.subr.mxu0 0.0
      %822 = vmatpush1.msra.mxu0 0.0
      %823 = vmatprep.subr.mxu0 0.0
      %824 = vmatpush1.msra.mxu0 0.0
      %825 = vmatprep.subr.mxu0 0.0
      %826 = vmatpush1.msra.mxu0 0.0
      %827 = vmatprep.subr.mxu0 0.0
      %828 = vmatpush1.msra.mxu0 0.0
      %829 = vmatprep.subr.mxu0 0.0
      %830 = vmatpush1.msra.mxu0 0.0
      %831 = vmatprep.subr.mxu0 0.0
      %832 = vmatpush1.msra.mxu0 0.0
      %833 = vmatprep.subr.mxu0 0.0
      %834 = vmatpush1.msra.mxu0 %v813
      %835 = vmatprep.subr.mxu0 0.0
      %836 = vmatpush1.msra.mxu0 %v812
      %837 = vmatprep.subr.mxu0 0.0
      %838 = vmatpush1.msra.mxu0 %v811
      %839 = vmatprep.subr.mxu0 0.0
      %840 = vmatpush1.msra.mxu0 %v810
      %841 = vmatprep.subr.mxu0 0.0
      %842 = vmatpush1.msra.mxu0 %v809
      %843 = vmatprep.subr.mxu0 0.0
      %844 = vmatpush1.msra.mxu0 %v808
      %845 = vmatprep.subr.mxu0 0.0
      %846 = vmatpush1.msra.mxu0 %v807
      %847 = vmatprep.subr.mxu0 0.0
      %848 = vmatpush1.msra.mxu0 %v806
      %849 = vmatprep.subr.mxu0 0.0
      %850 = vmatpush2.msra.mxu0 0.0
      %851 = vmatprep.subr.mxu0 0.0
      %852 = vmatpush2.msra.mxu0 0.0
      %853 = vmatprep.subr.mxu0 0.0
      %854 = vmatpush2.msra.mxu0 0.0
      %855 = vmatprep.subr.mxu0 0.0
      %856 = vmatpush2.msra.mxu0 0.0
      %857 = vmatprep.subr.mxu0 0.0
      %858 = vmatpush2.msra.mxu0 0.0
      %859 = vmatprep.subr.mxu0 0.0
      %860 = vmatpush2.msra.mxu0 0.0
      %861 = vmatprep.subr.mxu0 0.0
      %862 = vmatpush2.msra.mxu0 0.0
      %863 = vmatprep.subr.mxu0 0.0
      %864 = vmatpush2.msra.mxu0 0.0
      %865 = vmatprep.subr.mxu0 0.0
      %866 = vmatpush2.msra.mxu0 0.0
      %867 = vmatprep.subr.mxu0 0.0
      %868 = vmatpush2.msra.mxu0 0.0
      %869 = vmatprep.subr.mxu0 0.0
      %870 = vmatpush2.msra.mxu0 0.0
      %871 = vmatprep.subr.mxu0 0.0
      %872 = vmatpush2.msra.mxu0 0.0
      %873 = vmatprep.subr.mxu0 0.0
      %874 = vmatpush2.msra.mxu0 0.0
      %875 = vmatprep.subr.mxu0 0.0
      %876 = vmatpush2.msra.mxu0 0.0
      %877 = vmatprep.subr.mxu0 0.0
      %878 = vmatpush2.msra.mxu0 0.0
      %879 = vmatprep.subr.mxu0 0.0
      %880 = vmatpush2.msra.mxu0 0.0
      %881 = vmatprep.mubr.f32.mxu0 0.0
      %882 = vmatmul.mubr.f32.gmra.mxu0 %v815
      %v883 = vpop.f32.mrf.mxu0
      %v884 = vadd.f32 0.0, %v883
      %v885 = vpop.f32.mrf.mxu0
      %886 = vdwg.mxu0
      %v887 = vadd.f32 %v803, %v884
      %s888 = scalar_lea.vmem %s3, 448
      %v889 = vld [vmem:[%s888] sm:$0xff]
      %v890 = vld [vmem:[%s888 + $0x8] sm:$0xff]
      %v891 = vld [vmem:[%s888 + $0x10] sm:$0xff]
      %v892 = vld [vmem:[%s888 + $0x18] sm:$0xff]
      %v893 = vld [vmem:[%s888 + $0x20] sm:$0xff]
      %v894 = vld [vmem:[%s888 + $0x28] sm:$0xff]
      %v895 = vld [vmem:[%s888 + $0x30] sm:$0xff]
      %v896 = vld [vmem:[%s888 + $0x38] sm:$0xff]
      %897 = vrot.lane.b32.xlu0 %v804, 120
      %v898 = vpop.permute.xlu0 %897
      %v899 = vsel %vm323, %v898, 0
      %901 = vmatprep.subr.mxu0 0.0
      %902 = vmatpush1.msra.mxu0 0.0
      %903 = vmatprep.subr.mxu0 0.0
      %904 = vmatpush1.msra.mxu0 0.0
      %905 = vmatprep.subr.mxu0 0.0
      %906 = vmatpush1.msra.mxu0 0.0
      %907 = vmatprep.subr.mxu0 0.0
      %908 = vmatpush1.msra.mxu0 0.0
      %909 = vmatprep.subr.mxu0 0.0
      %910 = vmatpush1.msra.mxu0 0.0
      %911 = vmatprep.subr.mxu0 0.0
      %912 = vmatpush1.msra.mxu0 0.0
      %913 = vmatprep.subr.mxu0 0.0
      %914 = vmatpush1.msra.mxu0 0.0
      %915 = vmatprep.subr.mxu0 0.0
      %916 = vmatpush1.msra.mxu0 0.0
      %917 = vmatprep.subr.mxu0 0.0
      %918 = vmatpush1.msra.mxu0 %v896
      %919 = vmatprep.subr.mxu0 0.0
      %920 = vmatpush1.msra.mxu0 %v895
      %921 = vmatprep.subr.mxu0 0.0
      %922 = vmatpush1.msra.mxu0 %v894
      %923 = vmatprep.subr.mxu0 0.0
      %924 = vmatpush1.msra.mxu0 %v893
      %925 = vmatprep.subr.mxu0 0.0
      %926 = vmatpush1.msra.mxu0 %v892
      %927 = vmatprep.subr.mxu0 0.0
      %928 = vmatpush1.msra.mxu0 %v891
      %929 = vmatprep.subr.mxu0 0.0
      %930 = vmatpush1.msra.mxu0 %v890
      %931 = vmatprep.subr.mxu0 0.0
      %932 = vmatpush1.msra.mxu0 %v889
      %933 = vmatprep.subr.mxu0 0.0
      %934 = vmatpush2.msra.mxu0 0.0
      %935 = vmatprep.subr.mxu0 0.0
      %936 = vmatpush2.msra.mxu0 0.0
      %937 = vmatprep.subr.mxu0 0.0
      %938 = vmatpush2.msra.mxu0 0.0
      %939 = vmatprep.subr.mxu0 0.0
      %940 = vmatpush2.msra.mxu0 0.0
      %941 = vmatprep.subr.mxu0 0.0
      %942 = vmatpush2.msra.mxu0 0.0
      %943 = vmatprep.subr.mxu0 0.0
      %944 = vmatpush2.msra.mxu0 0.0
      %945 = vmatprep.subr.mxu0 0.0
      %946 = vmatpush2.msra.mxu0 0.0
      %947 = vmatprep.subr.mxu0 0.0
      %948 = vmatpush2.msra.mxu0 0.0
      %949 = vmatprep.subr.mxu0 0.0
      %950 = vmatpush2.msra.mxu0 0.0
      %951 = vmatprep.subr.mxu0 0.0
      %952 = vmatpush2.msra.mxu0 0.0
      %953 = vmatprep.subr.mxu0 0.0
      %954 = vmatpush2.msra.mxu0 0.0
      %955 = vmatprep.subr.mxu0 0.0
      %956 = vmatpush2.msra.mxu0 0.0
      %957 = vmatprep.subr.mxu0 0.0
      %958 = vmatpush2.msra.mxu0 0.0
      %959 = vmatprep.subr.mxu0 0.0
      %960 = vmatpush2.msra.mxu0 0.0
      %961 = vmatprep.subr.mxu0 0.0
      %962 = vmatpush2.msra.mxu0 0.0
      %963 = vmatprep.subr.mxu0 0.0
      %964 = vmatpush2.msra.mxu0 0.0
      %965 = vmatprep.mubr.f32.mxu0 0.0
      %966 = vmatmul.mubr.f32.gmra.mxu0 %v899
      %v967 = vpop.f32.mrf.mxu0
      %v968 = vadd.f32 0.0, %v967
      %v969 = vpop.f32.mrf.mxu0
      %970 = vdwg.mxu0
      %v971 = vadd.f32 %v887, %v968
      %s972 = scalar_lea.vmem %s3, 512
      %v973 = vld [vmem:[%s972] sm:$0xff]
      %v974 = vld [vmem:[%s972 + $0x8] sm:$0xff]
      %v975 = vld [vmem:[%s972 + $0x10] sm:$0xff]
      %v976 = vld [vmem:[%s972 + $0x18] sm:$0xff]
      %v977 = vld [vmem:[%s972 + $0x20] sm:$0xff]
      %v978 = vld [vmem:[%s972 + $0x28] sm:$0xff]
      %v979 = vld [vmem:[%s972 + $0x30] sm:$0xff]
      %v980 = vld [vmem:[%s972 + $0x38] sm:$0xff]
      %981 = vrot.lane.b32.xlu0 %v804, 112
      %v982 = vpop.permute.xlu0 %981
      %v983 = vsel %vm323, %v982, 0
      %985 = vmatprep.subr.mxu0 0.0
      %986 = vmatpush1.msra.mxu0 0.0
      %987 = vmatprep.subr.mxu0 0.0
      %988 = vmatpush1.msra.mxu0 0.0
      %989 = vmatprep.subr.mxu0 0.0
      %990 = vmatpush1.msra.mxu0 0.0
      %991 = vmatprep.subr.mxu0 0.0
      %992 = vmatpush1.msra.mxu0 0.0
      %993 = vmatprep.subr.mxu0 0.0
      %994 = vmatpush1.msra.mxu0 0.0
      %995 = vmatprep.subr.mxu0 0.0
      %996 = vmatpush1.msra.mxu0 0.0
      %997 = vmatprep.subr.mxu0 0.0
      %998 = vmatpush1.msra.mxu0 0.0
      %999 = vmatprep.subr.mxu0 0.0
      %1000 = vmatpush1.msra.mxu0 0.0
      %1001 = vmatprep.subr.mxu0 0.0
      %1002 = vmatpush1.msra.mxu0 %v980
      %1003 = vmatprep.subr.mxu0 0.0
      %1004 = vmatpush1.msra.mxu0 %v979
      %1005 = vmatprep.subr.mxu0 0.0
      %1006 = vmatpush1.msra.mxu0 %v978
      %1007 = vmatprep.subr.mxu0 0.0
      %1008 = vmatpush1.msra.mxu0 %v977
      %1009 = vmatprep.subr.mxu0 0.0
      %1010 = vmatpush1.msra.mxu0 %v976
      %1011 = vmatprep.subr.mxu0 0.0
      %1012 = vmatpush1.msra.mxu0 %v975
      %1013 = vmatprep.subr.mxu0 0.0
      %1014 = vmatpush1.msra.mxu0 %v974
      %1015 = vmatprep.subr.mxu0 0.0
      %1016 = vmatpush1.msra.mxu0 %v973
      %1017 = vmatprep.subr.mxu0 0.0
      %1018 = vmatpush2.msra.mxu0 0.0
      %1019 = vmatprep.subr.mxu0 0.0
      %1020 = vmatpush2.msra.mxu0 0.0
      %1021 = vmatprep.subr.mxu0 0.0
      %1022 = vmatpush2.msra.mxu0 0.0
      %1023 = vmatprep.subr.mxu0 0.0
      %1024 = vmatpush2.msra.mxu0 0.0
      %1025 = vmatprep.subr.mxu0 0.0
      %1026 = vmatpush2.msra.mxu0 0.0
      %1027 = vmatprep.subr.mxu0 0.0
      %1028 = vmatpush2.msra.mxu0 0.0
      %1029 = vmatprep.subr.mxu0 0.0
      %1030 = vmatpush2.msra.mxu0 0.0
      %1031 = vmatprep.subr.mxu0 0.0
      %1032 = vmatpush2.msra.mxu0 0.0
      %1033 = vmatprep.subr.mxu0 0.0
      %1034 = vmatpush2.msra.mxu0 0.0
      %1035 = vmatprep.subr.mxu0 0.0
      %1036 = vmatpush2.msra.mxu0 0.0
      %1037 = vmatprep.subr.mxu0 0.0
      %1038 = vmatpush2.msra.mxu0 0.0
      %1039 = vmatprep.subr.mxu0 0.0
      %1040 = vmatpush2.msra.mxu0 0.0
      %1041 = vmatprep.subr.mxu0 0.0
      %1042 = vmatpush2.msra.mxu0 0.0
      %1043 = vmatprep.subr.mxu0 0.0
      %1044 = vmatpush2.msra.mxu0 0.0
      %1045 = vmatprep.subr.mxu0 0.0
      %1046 = vmatpush2.msra.mxu0 0.0
      %1047 = vmatprep.subr.mxu0 0.0
      %1048 = vmatpush2.msra.mxu0 0.0
      %1049 = vmatprep.mubr.f32.mxu0 0.0
      %1050 = vmatmul.mubr.f32.gmra.mxu0 %v983
      %v1051 = vpop.f32.mrf.mxu0
      %v1052 = vadd.f32 0.0, %v1051
      %v1053 = vpop.f32.mrf.mxu0
      %1054 = vdwg.mxu0
      %v1055 = vadd.f32 %v971, %v1052
      %v1056 = vld [vmem:[%s4] sm:$0x1]
      %v1058 = vlaneseq
      %v1059 = vshrl.u32 %v1058, 7
      %v1060 = vsub.s32 0, %v1059
      %v1061 = vrot.slane %v1056, %v1060
      %v1063 = vmul.f32 %v1055, %v1061
      %v1064 = vld [vmem:[%s5] sm:$0x1]
      %v1066 = vlaneseq
      %v1067 = vshrl.u32 %v1066, 7
      %v1068 = vsub.s32 0, %v1067
      %v1069 = vrot.slane %v1064, %v1068
      %v1071 = vadd.f32 %v1063, %v1069
      %v1072 = vmax.f32 %v1071, 0.0
      %1073 = vst.msk [vmem:[#allocation3] sm:$0xff] %vm292, 0.0
      %1074 = vst.msk [vmem:[#allocation3 + $0x8] sm:$0x3] %vm294, 0.0
      %1076 = vrot.lane.b32.xlu0 %v1072, 8
      %v1077 = vpop.permute.xlu0 %1076
      %1079 = vst.msk [vmem:[#allocation3 + $0x1] sm:$0xff] %vm300, %v1077
      %v1080 = vld [vmem:[#allocation3] sm:$0xff]
      %v1081 = vld [vmem:[%s6] sm:$0xff]
      %v1082 = vld [vmem:[%s6 + $0x8] sm:$0xff]
      %v1083 = vld [vmem:[%s6 + $0x10] sm:$0xff]
      %v1084 = vld [vmem:[%s6 + $0x18] sm:$0xff]
      %v1085 = vld [vmem:[%s6 + $0x20] sm:$0xff]
      %v1086 = vld [vmem:[%s6 + $0x28] sm:$0xff]
      %v1087 = vld [vmem:[%s6 + $0x30] sm:$0xff]
      %v1088 = vld [vmem:[%s6 + $0x38] sm:$0xff]
      %v1090 = vsel %vm323, %v1080, 0
      %1092 = vmatprep.subr.mxu0 0.0
      %1093 = vmatpush1.msra.mxu0 0.0
      %1094 = vmatprep.subr.mxu0 0.0
      %1095 = vmatpush1.msra.mxu0 0.0
      %1096 = vmatprep.subr.mxu0 0.0
      %1097 = vmatpush1.msra.mxu0 0.0
      %1098 = vmatprep.subr.mxu0 0.0
      %1099 = vmatpush1.msra.mxu0 0.0
      %1100 = vmatprep.subr.mxu0 0.0
      %1101 = vmatpush1.msra.mxu0 0.0
      %1102 = vmatprep.subr.mxu0 0.0
      %1103 = vmatpush1.msra.mxu0 0.0
      %1104 = vmatprep.subr.mxu0 0.0
      %1105 = vmatpush1.msra.mxu0 0.0
      %1106 = vmatprep.subr.mxu0 0.0
      %1107 = vmatpush1.msra.mxu0 0.0
      %1108 = vmatprep.subr.mxu0 0.0
      %1109 = vmatpush1.msra.mxu0 %v1088
      %1110 = vmatprep.subr.mxu0 0.0
      %1111 = vmatpush1.msra.mxu0 %v1087
      %1112 = vmatprep.subr.mxu0 0.0
      %1113 = vmatpush1.msra.mxu0 %v1086
      %1114 = vmatprep.subr.mxu0 0.0
      %1115 = vmatpush1.msra.mxu0 %v1085
      %1116 = vmatprep.subr.mxu0 0.0
      %1117 = vmatpush1.msra.mxu0 %v1084
      %1118 = vmatprep.subr.mxu0 0.0
      %1119 = vmatpush1.msra.mxu0 %v1083
      %1120 = vmatprep.subr.mxu0 0.0
      %1121 = vmatpush1.msra.mxu0 %v1082
      %1122 = vmatprep.subr.mxu0 0.0
      %1123 = vmatpush1.msra.mxu0 %v1081
      %1124 = vmatprep.subr.mxu0 0.0
      %1125 = vmatpush2.msra.mxu0 0.0
      %1126 = vmatprep.subr.mxu0 0.0
      %1127 = vmatpush2.msra.mxu0 0.0
      %1128 = vmatprep.subr.mxu0 0.0
      %1129 = vmatpush2.msra.mxu0 0.0
      %1130 = vmatprep.subr.mxu0 0.0
      %1131 = vmatpush2.msra.mxu0 0.0
      %1132 = vmatprep.subr.mxu0 0.0
      %1133 = vmatpush2.msra.mxu0 0.0
      %1134 = vmatprep.subr.mxu0 0.0
      %1135 = vmatpush2.msra.mxu0 0.0
      %1136 = vmatprep.subr.mxu0 0.0
      %1137 = vmatpush2.msra.mxu0 0.0
      %1138 = vmatprep.subr.mxu0 0.0
      %1139 = vmatpush2.msra.mxu0 0.0
      %1140 = vmatprep.subr.mxu0 0.0
      %1141 = vmatpush2.msra.mxu0 0.0
      %1142 = vmatprep.subr.mxu0 0.0
      %1143 = vmatpush2.msra.mxu0 0.0
      %1144 = vmatprep.subr.mxu0 0.0
      %1145 = vmatpush2.msra.mxu0 0.0
      %1146 = vmatprep.subr.mxu0 0.0
      %1147 = vmatpush2.msra.mxu0 0.0
      %1148 = vmatprep.subr.mxu0 0.0
      %1149 = vmatpush2.msra.mxu0 0.0
      %1150 = vmatprep.subr.mxu0 0.0
      %1151 = vmatpush2.msra.mxu0 0.0
      %1152 = vmatprep.subr.mxu0 0.0
      %1153 = vmatpush2.msra.mxu0 0.0
      %1154 = vmatprep.subr.mxu0 0.0
      %1155 = vmatpush2.msra.mxu0 0.0
      %1156 = vmatprep.mubr.f32.mxu0 0.0
      %1157 = vmatmul.mubr.f32.gmra.mxu0 %v1090
      %v1158 = vpop.f32.mrf.mxu0
      %v1159 = vadd.f32 0.0, %v1158
      %v1160 = vpop.f32.mrf.mxu0
      %1161 = vdwg.mxu0
      %v1162 = vadd.f32 %v274, %v1159
      %s1163 = scalar_lea.vmem %s6, 64
      %v1164 = vld [vmem:[%s1163] sm:$0xff]
      %v1165 = vld [vmem:[%s1163 + $0x8] sm:$0xff]
      %v1166 = vld [vmem:[%s1163 + $0x10] sm:$0xff]
      %v1167 = vld [vmem:[%s1163 + $0x18] sm:$0xff]
      %v1168 = vld [vmem:[%s1163 + $0x20] sm:$0xff]
      %v1169 = vld [vmem:[%s1163 + $0x28] sm:$0xff]
      %v1170 = vld [vmem:[%s1163 + $0x30] sm:$0xff]
      %v1171 = vld [vmem:[%s1163 + $0x38] sm:$0xff]
      %1172 = vrot.lane.b32.xlu0 %v1080, 120
      %v1173 = vpop.permute.xlu0 %1172
      %v1174 = vsel %vm323, %v1173, 0
      %1176 = vmatprep.subr.mxu0 0.0
      %1177 = vmatpush1.msra.mxu0 0.0
      %1178 = vmatprep.subr.mxu0 0.0
      %1179 = vmatpush1.msra.mxu0 0.0
      %1180 = vmatprep.subr.mxu0 0.0
      %1181 = vmatpush1.msra.mxu0 0.0
      %1182 = vmatprep.subr.mxu0 0.0
      %1183 = vmatpush1.msra.mxu0 0.0
      %1184 = vmatprep.subr.mxu0 0.0
      %1185 = vmatpush1.msra.mxu0 0.0
      %1186 = vmatprep.subr.mxu0 0.0
      %1187 = vmatpush1.msra.mxu0 0.0
      %1188 = vmatprep.subr.mxu0 0.0
      %1189 = vmatpush1.msra.mxu0 0.0
      %1190 = vmatprep.subr.mxu0 0.0
      %1191 = vmatpush1.msra.mxu0 0.0
      %1192 = vmatprep.subr.mxu0 0.0
      %1193 = vmatpush1.msra.mxu0 %v1171
      %1194 = vmatprep.subr.mxu0 0.0
      %1195 = vmatpush1.msra.mxu0 %v1170
      %1196 = vmatprep.subr.mxu0 0.0
      %1197 = vmatpush1.msra.mxu0 %v1169
      %1198 = vmatprep.subr.mxu0 0.0
      %1199 = vmatpush1.msra.mxu0 %v1168
      %1200 = vmatprep.subr.mxu0 0.0
      %1201 = vmatpush1.msra.mxu0 %v1167
      %1202 = vmatprep.subr.mxu0 0.0
      %1203 = vmatpush1.msra.mxu0 %v1166
      %1204 = vmatprep.subr.mxu0 0.0
      %1205 = vmatpush1.msra.mxu0 %v1165
      %1206 = vmatprep.subr.mxu0 0.0
      %1207 = vmatpush1.msra.mxu0 %v1164
      %1208 = vmatprep.subr.mxu0 0.0
      %1209 = vmatpush2.msra.mxu0 0.0
      %1210 = vmatprep.subr.mxu0 0.0
      %1211 = vmatpush2.msra.mxu0 0.0
      %1212 = vmatprep.subr.mxu0 0.0
      %1213 = vmatpush2.msra.mxu0 0.0
      %1214 = vmatprep.subr.mxu0 0.0
      %1215 = vmatpush2.msra.mxu0 0.0
      %1216 = vmatprep.subr.mxu0 0.0
      %1217 = vmatpush2.msra.mxu0 0.0
      %1218 = vmatprep.subr.mxu0 0.0
      %1219 = vmatpush2.msra.mxu0 0.0
      %1220 = vmatprep.subr.mxu0 0.0
      %1221 = vmatpush2.msra.mxu0 0.0
      %1222 = vmatprep.subr.mxu0 0.0
      %1223 = vmatpush2.msra.mxu0 0.0
      %1224 = vmatprep.subr.mxu0 0.0
      %1225 = vmatpush2.msra.mxu0 0.0
      %1226 = vmatprep.subr.mxu0 0.0
      %1227 = vmatpush2.msra.mxu0 0.0
      %1228 = vmatprep.subr.mxu0 0.0
      %1229 = vmatpush2.msra.mxu0 0.0
      %1230 = vmatprep.subr.mxu0 0.0
      %1231 = vmatpush2.msra.mxu0 0.0
      %1232 = vmatprep.subr.mxu0 0.0
      %1233 = vmatpush2.msra.mxu0 0.0
      %1234 = vmatprep.subr.mxu0 0.0
      %1235 = vmatpush2.msra.mxu0 0.0
      %1236 = vmatprep.subr.mxu0 0.0
      %1237 = vmatpush2.msra.mxu0 0.0
      %1238 = vmatprep.subr.mxu0 0.0
      %1239 = vmatpush2.msra.mxu0 0.0
      %1240 = vmatprep.mubr.f32.mxu0 0.0
      %1241 = vmatmul.mubr.f32.gmra.mxu0 %v1174
      %v1242 = vpop.f32.mrf.mxu0
      %v1243 = vadd.f32 0.0, %v1242
      %v1244 = vpop.f32.mrf.mxu0
      %1245 = vdwg.mxu0
      %v1246 = vadd.f32 %v1162, %v1243
      %s1247 = scalar_lea.vmem %s6, 128
      %v1248 = vld [vmem:[%s1247] sm:$0xff]
      %v1249 = vld [vmem:[%s1247 + $0x8] sm:$0xff]
      %v1250 = vld [vmem:[%s1247 + $0x10] sm:$0xff]
      %v1251 = vld [vmem:[%s1247 + $0x18] sm:$0xff]
      %v1252 = vld [vmem:[%s1247 + $0x20] sm:$0xff]
      %v1253 = vld [vmem:[%s1247 + $0x28] sm:$0xff]
      %v1254 = vld [vmem:[%s1247 + $0x30] sm:$0xff]
      %v1255 = vld [vmem:[%s1247 + $0x38] sm:$0xff]
      %1256 = vrot.lane.b32.xlu0 %v1080, 112
      %v1257 = vpop.permute.xlu0 %1256
      %v1258 = vsel %vm323, %v1257, 0
      %1260 = vmatprep.subr.mxu0 0.0
      %1261 = vmatpush1.msra.mxu0 0.0
      %1262 = vmatprep.subr.mxu0 0.0
      %1263 = vmatpush1.msra.mxu0 0.0
      %1264 = vmatprep.subr.mxu0 0.0
      %1265 = vmatpush1.msra.mxu0 0.0
      %1266 = vmatprep.subr.mxu0 0.0
      %1267 = vmatpush1.msra.mxu0 0.0
      %1268 = vmatprep.subr.mxu0 0.0
      %1269 = vmatpush1.msra.mxu0 0.0
      %1270 = vmatprep.subr.mxu0 0.0
      %1271 = vmatpush1.msra.mxu0 0.0
      %1272 = vmatprep.subr.mxu0 0.0
      %1273 = vmatpush1.msra.mxu0 0.0
      %1274 = vmatprep.subr.mxu0 0.0
      %1275 = vmatpush1.msra.mxu0 0.0
      %1276 = vmatprep.subr.mxu0 0.0
      %1277 = vmatpush1.msra.mxu0 %v1255
      %1278 = vmatprep.subr.mxu0 0.0
      %1279 = vmatpush1.msra.mxu0 %v1254
      %1280 = vmatprep.subr.mxu0 0.0
      %1281 = vmatpush1.msra.mxu0 %v1253
      %1282 = vmatprep.subr.mxu0 0.0
      %1283 = vmatpush1.msra.mxu0 %v1252
      %1284 = vmatprep.subr.mxu0 0.0
      %1285 = vmatpush1.msra.mxu0 %v1251
      %1286 = vmatprep.subr.mxu0 0.0
      %1287 = vmatpush1.msra.mxu0 %v1250
      %1288 = vmatprep.subr.mxu0 0.0
      %1289 = vmatpush1.msra.mxu0 %v1249
      %1290 = vmatprep.subr.mxu0 0.0
      %1291 = vmatpush1.msra.mxu0 %v1248
      %1292 = vmatprep.subr.mxu0 0.0
      %1293 = vmatpush2.msra.mxu0 0.0
      %1294 = vmatprep.subr.mxu0 0.0
      %1295 = vmatpush2.msra.mxu0 0.0
      %1296 = vmatprep.subr.mxu0 0.0
      %1297 = vmatpush2.msra.mxu0 0.0
      %1298 = vmatprep.subr.mxu0 0.0
      %1299 = vmatpush2.msra.mxu0 0.0
      %1300 = vmatprep.subr.mxu0 0.0
      %1301 = vmatpush2.msra.mxu0 0.0
      %1302 = vmatprep.subr.mxu0 0.0
      %1303 = vmatpush2.msra.mxu0 0.0
      %1304 = vmatprep.subr.mxu0 0.0
      %1305 = vmatpush2.msra.mxu0 0.0
      %1306 = vmatprep.subr.mxu0 0.0
      %1307 = vmatpush2.msra.mxu0 0.0
      %1308 = vmatprep.subr.mxu0 0.0
      %1309 = vmatpush2.msra.mxu0 0.0
      %1310 = vmatprep.subr.mxu0 0.0
      %1311 = vmatpush2.msra.mxu0 0.0
      %1312 = vmatprep.subr.mxu0 0.0
      %1313 = vmatpush2.msra.mxu0 0.0
      %1314 = vmatprep.subr.mxu0 0.0
      %1315 = vmatpush2.msra.mxu0 0.0
      %1316 = vmatprep.subr.mxu0 0.0
      %1317 = vmatpush2.msra.mxu0 0.0
      %1318 = vmatprep.subr.mxu0 0.0
      %1319 = vmatpush2.msra.mxu0 0.0
      %1320 = vmatprep.subr.mxu0 0.0
      %1321 = vmatpush2.msra.mxu0 0.0
      %1322 = vmatprep.subr.mxu0 0.0
      %1323 = vmatpush2.msra.mxu0 0.0
      %1324 = vmatprep.mubr.f32.mxu0 0.0
      %1325 = vmatmul.mubr.f32.gmra.mxu0 %v1258
      %v1326 = vpop.f32.mrf.mxu0
      %v1327 = vadd.f32 0.0, %v1326
      %v1328 = vpop.f32.mrf.mxu0
      %1329 = vdwg.mxu0
      %v1330 = vadd.f32 %v1246, %v1327
      %v1331 = vld [vmem:[#allocation3 + $0x1] sm:$0xff]
      %s1332 = scalar_lea.vmem %s6, 192
      %v1333 = vld [vmem:[%s1332] sm:$0xff]
      %v1334 = vld [vmem:[%s1332 + $0x8] sm:$0xff]
      %v1335 = vld [vmem:[%s1332 + $0x10] sm:$0xff]
      %v1336 = vld [vmem:[%s1332 + $0x18] sm:$0xff]
      %v1337 = vld [vmem:[%s1332 + $0x20] sm:$0xff]
      %v1338 = vld [vmem:[%s1332 + $0x28] sm:$0xff]
      %v1339 = vld [vmem:[%s1332 + $0x30] sm:$0xff]
      %v1340 = vld [vmem:[%s1332 + $0x38] sm:$0xff]
      %v1342 = vsel %vm323, %v1331, 0
      %1344 = vmatprep.subr.mxu0 0.0
      %1345 = vmatpush1.msra.mxu0 0.0
      %1346 = vmatprep.subr.mxu0 0.0
      %1347 = vmatpush1.msra.mxu0 0.0
      %1348 = vmatprep.subr.mxu0 0.0
      %1349 = vmatpush1.msra.mxu0 0.0
      %1350 = vmatprep.subr.mxu0 0.0
      %1351 = vmatpush1.msra.mxu0 0.0
      %1352 = vmatprep.subr.mxu0 0.0
      %1353 = vmatpush1.msra.mxu0 0.0
      %1354 = vmatprep.subr.mxu0 0.0
      %1355 = vmatpush1.msra.mxu0 0.0
      %1356 = vmatprep.subr.mxu0 0.0
      %1357 = vmatpush1.msra.mxu0 0.0
      %1358 = vmatprep.subr.mxu0 0.0
      %1359 = vmatpush1.msra.mxu0 0.0
      %1360 = vmatprep.subr.mxu0 0.0
      %1361 = vmatpush1.msra.mxu0 %v1340
      %1362 = vmatprep.subr.mxu0 0.0
      %1363 = vmatpush1.msra.mxu0 %v1339
      %1364 = vmatprep.subr.mxu0 0.0
      %1365 = vmatpush1.msra.mxu0 %v1338
      %1366 = vmatprep.subr.mxu0 0.0
      %1367 = vmatpush1.msra.mxu0 %v1337
      %1368 = vmatprep.subr.mxu0 0.0
      %1369 = vmatpush1.msra.mxu0 %v1336
      %1370 = vmatprep.subr.mxu0 0.0
      %1371 = vmatpush1.msra.mxu0 %v1335
      %1372 = vmatprep.subr.mxu0 0.0
      %1373 = vmatpush1.msra.mxu0 %v1334
      %1374 = vmatprep.subr.mxu0 0.0
      %1375 = vmatpush1.msra.mxu0 %v1333
      %1376 = vmatprep.subr.mxu0 0.0
      %1377 = vmatpush2.msra.mxu0 0.0
      %1378 = vmatprep.subr.mxu0 0.0
      %1379 = vmatpush2.msra.mxu0 0.0
      %1380 = vmatprep.subr.mxu0 0.0
      %1381 = vmatpush2.msra.mxu0 0.0
      %1382 = vmatprep.subr.mxu0 0.0
      %1383 = vmatpush2.msra.mxu0 0.0
      %1384 = vmatprep.subr.mxu0 0.0
      %1385 = vmatpush2.msra.mxu0 0.0
      %1386 = vmatprep.subr.mxu0 0.0
      %1387 = vmatpush2.msra.mxu0 0.0
      %1388 = vmatprep.subr.mxu0 0.0
      %1389 = vmatpush2.msra.mxu0 0.0
      %1390 = vmatprep.subr.mxu0 0.0
      %1391 = vmatpush2.msra.mxu0 0.0
      %1392 = vmatprep.subr.mxu0 0.0
      %1393 = vmatpush2.msra.mxu0 0.0
      %1394 = vmatprep.subr.mxu0 0.0
      %1395 = vmatpush2.msra.mxu0 0.0
      %1396 = vmatprep.subr.mxu0 0.0
      %1397 = vmatpush2.msra.mxu0 0.0
      %1398 = vmatprep.subr.mxu0 0.0
      %1399 = vmatpush2.msra.mxu0 0.0
      %1400 = vmatprep.subr.mxu0 0.0
      %1401 = vmatpush2.msra.mxu0 0.0
      %1402 = vmatprep.subr.mxu0 0.0
      %1403 = vmatpush2.msra.mxu0 0.0
      %1404 = vmatprep.subr.mxu0 0.0
      %1405 = vmatpush2.msra.mxu0 0.0
      %1406 = vmatprep.subr.mxu0 0.0
      %1407 = vmatpush2.msra.mxu0 0.0
      %1408 = vmatprep.mubr.f32.mxu0 0.0
      %1409 = vmatmul.mubr.f32.gmra.mxu0 %v1342
      %v1410 = vpop.f32.mrf.mxu0
      %v1411 = vadd.f32 0.0, %v1410
      %v1412 = vpop.f32.mrf.mxu0
      %1413 = vdwg.mxu0
      %v1414 = vadd.f32 %v1330, %v1411
      %s1415 = scalar_lea.vmem %s6, 256
      %v1416 = vld [vmem:[%s1415] sm:$0xff]
      %v1417 = vld [vmem:[%s1415 + $0x8] sm:$0xff]
      %v1418 = vld [vmem:[%s1415 + $0x10] sm:$0xff]
      %v1419 = vld [vmem:[%s1415 + $0x18] sm:$0xff]
      %v1420 = vld [vmem:[%s1415 + $0x20] sm:$0xff]
      %v1421 = vld [vmem:[%s1415 + $0x28] sm:$0xff]
      %v1422 = vld [vmem:[%s1415 + $0x30] sm:$0xff]
      %v1423 = vld [vmem:[%s1415 + $0x38] sm:$0xff]
      %1424 = vrot.lane.b32.xlu0 %v1331, 120
      %v1425 = vpop.permute.xlu0 %1424
      %v1426 = vsel %vm323, %v1425, 0
      %1428 = vmatprep.subr.mxu0 0.0
      %1429 = vmatpush1.msra.mxu0 0.0
      %1430 = vmatprep.subr.mxu0 0.0
      %1431 = vmatpush1.msra.mxu0 0.0
      %1432 = vmatprep.subr.mxu0 0.0
      %1433 = vmatpush1.msra.mxu0 0.0
      %1434 = vmatprep.subr.mxu0 0.0
      %1435 = vmatpush1.msra.mxu0 0.0
      %1436 = vmatprep.subr.mxu0 0.0
      %1437 = vmatpush1.msra.mxu0 0.0
      %1438 = vmatprep.subr.mxu0 0.0
      %1439 = vmatpush1.msra.mxu0 0.0
      %1440 = vmatprep.subr.mxu0 0.0
      %1441 = vmatpush1.msra.mxu0 0.0
      %1442 = vmatprep.subr.mxu0 0.0
      %1443 = vmatpush1.msra.mxu0 0.0
      %1444 = vmatprep.subr.mxu0 0.0
      %1445 = vmatpush1.msra.mxu0 %v1423
      %1446 = vmatprep.subr.mxu0 0.0
      %1447 = vmatpush1.msra.mxu0 %v1422
      %1448 = vmatprep.subr.mxu0 0.0
      %1449 = vmatpush1.msra.mxu0 %v1421
      %1450 = vmatprep.subr.mxu0 0.0
      %1451 = vmatpush1.msra.mxu0 %v1420
      %1452 = vmatprep.subr.mxu0 0.0
      %1453 = vmatpush1.msra.mxu0 %v1419
      %1454 = vmatprep.subr.mxu0 0.0
      %1455 = vmatpush1.msra.mxu0 %v1418
      %1456 = vmatprep.subr.mxu0 0.0
      %1457 = vmatpush1.msra.mxu0 %v1417
      %1458 = vmatprep.subr.mxu0 0.0
      %1459 = vmatpush1.msra.mxu0 %v1416
      %1460 = vmatprep.subr.mxu0 0.0
      %1461 = vmatpush2.msra.mxu0 0.0
      %1462 = vmatprep.subr.mxu0 0.0
      %1463 = vmatpush2.msra.mxu0 0.0
      %1464 = vmatprep.subr.mxu0 0.0
      %1465 = vmatpush2.msra.mxu0 0.0
      %1466 = vmatprep.subr.mxu0 0.0
      %1467 = vmatpush2.msra.mxu0 0.0
      %1468 = vmatprep.subr.mxu0 0.0
      %1469 = vmatpush2.msra.mxu0 0.0
      %1470 = vmatprep.subr.mxu0 0.0
      %1471 = vmatpush2.msra.mxu0 0.0
      %1472 = vmatprep.subr.mxu0 0.0
      %1473 = vmatpush2.msra.mxu0 0.0
      %1474 = vmatprep.subr.mxu0 0.0
      %1475 = vmatpush2.msra.mxu0 0.0
      %1476 = vmatprep.subr.mxu0 0.0
      %1477 = vmatpush2.msra.mxu0 0.0
      %1478 = vmatprep.subr.mxu0 0.0
      %1479 = vmatpush2.msra.mxu0 0.0
      %1480 = vmatprep.subr.mxu0 0.0
      %1481 = vmatpush2.msra.mxu0 0.0
      %1482 = vmatprep.subr.mxu0 0.0
      %1483 = vmatpush2.msra.mxu0 0.0
      %1484 = vmatprep.subr.mxu0 0.0
      %1485 = vmatpush2.msra.mxu0 0.0
      %1486 = vmatprep.subr.mxu0 0.0
      %1487 = vmatpush2.msra.mxu0 0.0
      %1488 = vmatprep.subr.mxu0 0.0
      %1489 = vmatpush2.msra.mxu0 0.0
      %1490 = vmatprep.subr.mxu0 0.0
      %1491 = vmatpush2.msra.mxu0 0.0
      %1492 = vmatprep.mubr.f32.mxu0 0.0
      %1493 = vmatmul.mubr.f32.gmra.mxu0 %v1426
      %v1494 = vpop.f32.mrf.mxu0
      %v1495 = vadd.f32 0.0, %v1494
      %v1496 = vpop.f32.mrf.mxu0
      %1497 = vdwg.mxu0
      %v1498 = vadd.f32 %v1414, %v1495
      %s1499 = scalar_lea.vmem %s6, 320
      %v1500 = vld [vmem:[%s1499] sm:$0xff]
      %v1501 = vld [vmem:[%s1499 + $0x8] sm:$0xff]
      %v1502 = vld [vmem:[%s1499 + $0x10] sm:$0xff]
      %v1503 = vld [vmem:[%s1499 + $0x18] sm:$0xff]
      %v1504 = vld [vmem:[%s1499 + $0x20] sm:$0xff]
      %v1505 = vld [vmem:[%s1499 + $0x28] sm:$0xff]
      %v1506 = vld [vmem:[%s1499 + $0x30] sm:$0xff]
      %v1507 = vld [vmem:[%s1499 + $0x38] sm:$0xff]
      %1508 = vrot.lane.b32.xlu0 %v1331, 112
      %v1509 = vpop.permute.xlu0 %1508
      %v1510 = vsel %vm323, %v1509, 0
      %1512 = vmatprep.subr.mxu0 0.0
      %1513 = vmatpush1.msra.mxu0 0.0
      %1514 = vmatprep.subr.mxu0 0.0
      %1515 = vmatpush1.msra.mxu0 0.0
      %1516 = vmatprep.subr.mxu0 0.0
      %1517 = vmatpush1.msra.mxu0 0.0
      %1518 = vmatprep.subr.mxu0 0.0
      %1519 = vmatpush1.msra.mxu0 0.0
      %1520 = vmatprep.subr.mxu0 0.0
      %1521 = vmatpush1.msra.mxu0 0.0
      %1522 = vmatprep.subr.mxu0 0.0
      %1523 = vmatpush1.msra.mxu0 0.0
      %1524 = vmatprep.subr.mxu0 0.0
      %1525 = vmatpush1.msra.mxu0 0.0
      %1526 = vmatprep.subr.mxu0 0.0
      %1527 = vmatpush1.msra.mxu0 0.0
      %1528 = vmatprep.subr.mxu0 0.0
      %1529 = vmatpush1.msra.mxu0 %v1507
      %1530 = vmatprep.subr.mxu0 0.0
      %1531 = vmatpush1.msra.mxu0 %v1506
      %1532 = vmatprep.subr.mxu0 0.0
      %1533 = vmatpush1.msra.mxu0 %v1505
      %1534 = vmatprep.subr.mxu0 0.0
      %1535 = vmatpush1.msra.mxu0 %v1504
      %1536 = vmatprep.subr.mxu0 0.0
      %1537 = vmatpush1.msra.mxu0 %v1503
      %1538 = vmatprep.subr.mxu0 0.0
      %1539 = vmatpush1.msra.mxu0 %v1502
      %1540 = vmatprep.subr.mxu0 0.0
      %1541 = vmatpush1.msra.mxu0 %v1501
      %1542 = vmatprep.subr.mxu0 0.0
      %1543 = vmatpush1.msra.mxu0 %v1500
      %1544 = vmatprep.subr.mxu0 0.0
      %1545 = vmatpush2.msra.mxu0 0.0
      %1546 = vmatprep.subr.mxu0 0.0
      %1547 = vmatpush2.msra.mxu0 0.0
      %1548 = vmatprep.subr.mxu0 0.0
      %1549 = vmatpush2.msra.mxu0 0.0
      %1550 = vmatprep.subr.mxu0 0.0
      %1551 = vmatpush2.msra.mxu0 0.0
      %1552 = vmatprep.subr.mxu0 0.0
      %1553 = vmatpush2.msra.mxu0 0.0
      %1554 = vmatprep.subr.mxu0 0.0
      %1555 = vmatpush2.msra.mxu0 0.0
      %1556 = vmatprep.subr.mxu0 0.0
      %1557 = vmatpush2.msra.mxu0 0.0
      %1558 = vmatprep.subr.mxu0 0.0
      %1559 = vmatpush2.msra.mxu0 0.0
      %1560 = vmatprep.subr.mxu0 0.0
      %1561 = vmatpush2.msra.mxu0 0.0
      %1562 = vmatprep.subr.mxu0 0.0
      %1563 = vmatpush2.msra.mxu0 0.0
      %1564 = vmatprep.subr.mxu0 0.0
      %1565 = vmatpush2.msra.mxu0 0.0
      %1566 = vmatprep.subr.mxu0 0.0
      %1567 = vmatpush2.msra.mxu0 0.0
      %1568 = vmatprep.subr.mxu0 0.0
      %1569 = vmatpush2.msra.mxu0 0.0
      %1570 = vmatprep.subr.mxu0 0.0
      %1571 = vmatpush2.msra.mxu0 0.0
      %1572 = vmatprep.subr.mxu0 0.0
      %1573 = vmatpush2.msra.mxu0 0.0
      %1574 = vmatprep.subr.mxu0 0.0
      %1575 = vmatpush2.msra.mxu0 0.0
      %1576 = vmatprep.mubr.f32.mxu0 0.0
      %1577 = vmatmul.mubr.f32.gmra.mxu0 %v1510
      %v1578 = vpop.f32.mrf.mxu0
      %v1579 = vadd.f32 0.0, %v1578
      %v1580 = vpop.f32.mrf.mxu0
      %1581 = vdwg.mxu0
      %v1582 = vadd.f32 %v1498, %v1579
      %v1583 = vld [vmem:[#allocation3 + $0x2] sm:$0xff]
      %s1584 = scalar_lea.vmem %s6, 384
      %v1585 = vld [vmem:[%s1584] sm:$0xff]
      %v1586 = vld [vmem:[%s1584 + $0x8] sm:$0xff]
      %v1587 = vld [vmem:[%s1584 + $0x10] sm:$0xff]
      %v1588 = vld [vmem:[%s1584 + $0x18] sm:$0xff]
      %v1589 = vld [vmem:[%s1584 + $0x20] sm:$0xff]
      %v1590 = vld [vmem:[%s1584 + $0x28] sm:$0xff]
      %v1591 = vld [vmem:[%s1584 + $0x30] sm:$0xff]
      %v1592 = vld [vmem:[%s1584 + $0x38] sm:$0xff]
      %v1594 = vsel %vm323, %v1583, 0
      %1596 = vmatprep.subr.mxu0 0.0
      %1597 = vmatpush1.msra.mxu0 0.0
      %1598 = vmatprep.subr.mxu0 0.0
      %1599 = vmatpush1.msra.mxu0 0.0
      %1600 = vmatprep.subr.mxu0 0.0
      %1601 = vmatpush1.msra.mxu0 0.0
      %1602 = vmatprep.subr.mxu0 0.0
      %1603 = vmatpush1.msra.mxu0 0.0
      %1604 = vmatprep.subr.mxu0 0.0
      %1605 = vmatpush1.msra.mxu0 0.0
      %1606 = vmatprep.subr.mxu0 0.0
      %1607 = vmatpush1.msra.mxu0 0.0
      %1608 = vmatprep.subr.mxu0 0.0
      %1609 = vmatpush1.msra.mxu0 0.0
      %1610 = vmatprep.subr.mxu0 0.0
      %1611 = vmatpush1.msra.mxu0 0.0
      %1612 = vmatprep.subr.mxu0 0.0
      %1613 = vmatpush1.msra.mxu0 %v1592
      %1614 = vmatprep.subr.mxu0 0.0
      %1615 = vmatpush1.msra.mxu0 %v1591
      %1616 = vmatprep.subr.mxu0 0.0
      %1617 = vmatpush1.msra.mxu0 %v1590
      %1618 = vmatprep.subr.mxu0 0.0
      %1619 = vmatpush1.msra.mxu0 %v1589
      %1620 = vmatprep.subr.mxu0 0.0
      %1621 = vmatpush1.msra.mxu0 %v1588
      %1622 = vmatprep.subr.mxu0 0.0
      %1623 = vmatpush1.msra.mxu0 %v1587
      %1624 = vmatprep.subr.mxu0 0.0
      %1625 = vmatpush1.msra.mxu0 %v1586
      %1626 = vmatprep.subr.mxu0 0.0
      %1627 = vmatpush1.msra.mxu0 %v1585
      %1628 = vmatprep.subr.mxu0 0.0
      %1629 = vmatpush2.msra.mxu0 0.0
      %1630 = vmatprep.subr.mxu0 0.0
      %1631 = vmatpush2.msra.mxu0 0.0
      %1632 = vmatprep.subr.mxu0 0.0
      %1633 = vmatpush2.msra.mxu0 0.0
      %1634 = vmatprep.subr.mxu0 0.0
      %1635 = vmatpush2.msra.mxu0 0.0
      %1636 = vmatprep.subr.mxu0 0.0
      %1637 = vmatpush2.msra.mxu0 0.0
      %1638 = vmatprep.subr.mxu0 0.0
      %1639 = vmatpush2.msra.mxu0 0.0
      %1640 = vmatprep.subr.mxu0 0.0
      %1641 = vmatpush2.msra.mxu0 0.0
      %1642 = vmatprep.subr.mxu0 0.0
      %1643 = vmatpush2.msra.mxu0 0.0
      %1644 = vmatprep.subr.mxu0 0.0
      %1645 = vmatpush2.msra.mxu0 0.0
      %1646 = vmatprep.subr.mxu0 0.0
      %1647 = vmatpush2.msra.mxu0 0.0
      %1648 = vmatprep.subr.mxu0 0.0
      %1649 = vmatpush2.msra.mxu0 0.0
      %1650 = vmatprep.subr.mxu0 0.0
      %1651 = vmatpush2.msra.mxu0 0.0
      %1652 = vmatprep.subr.mxu0 0.0
      %1653 = vmatpush2.msra.mxu0 0.0
      %1654 = vmatprep.subr.mxu0 0.0
      %1655 = vmatpush2.msra.mxu0 0.0
      %1656 = vmatprep.subr.mxu0 0.0
      %1657 = vmatpush2.msra.mxu0 0.0
      %1658 = vmatprep.subr.mxu0 0.0
      %1659 = vmatpush2.msra.mxu0 0.0
      %1660 = vmatprep.mubr.f32.mxu0 0.0
      %1661 = vmatmul.mubr.f32.gmra.mxu0 %v1594
      %v1662 = vpop.f32.mrf.mxu0
      %v1663 = vadd.f32 0.0, %v1662
      %v1664 = vpop.f32.mrf.mxu0
      %1665 = vdwg.mxu0
      %v1666 = vadd.f32 %v1582, %v1663
      %s1667 = scalar_lea.vmem %s6, 448
      %v1668 = vld [vmem:[%s1667] sm:$0xff]
      %v1669 = vld [vmem:[%s1667 + $0x8] sm:$0xff]
      %v1670 = vld [vmem:[%s1667 + $0x10] sm:$0xff]
      %v1671 = vld [vmem:[%s1667 + $0x18] sm:$0xff]
      %v1672 = vld [vmem:[%s1667 + $0x20] sm:$0xff]
      %v1673 = vld [vmem:[%s1667 + $0x28] sm:$0xff]
      %v1674 = vld [vmem:[%s1667 + $0x30] sm:$0xff]
      %v1675 = vld [vmem:[%s1667 + $0x38] sm:$0xff]
      %1676 = vrot.lane.b32.xlu0 %v1583, 120
      %v1677 = vpop.permute.xlu0 %1676
      %v1678 = vsel %vm323, %v1677, 0
      %1680 = vmatprep.subr.mxu0 0.0
      %1681 = vmatpush1.msra.mxu0 0.0
      %1682 = vmatprep.subr.mxu0 0.0
      %1683 = vmatpush1.msra.mxu0 0.0
      %1684 = vmatprep.subr.mxu0 0.0
      %1685 = vmatpush1.msra.mxu0 0.0
      %1686 = vmatprep.subr.mxu0 0.0
      %1687 = vmatpush1.msra.mxu0 0.0
      %1688 = vmatprep.subr.mxu0 0.0
      %1689 = vmatpush1.msra.mxu0 0.0
      %1690 = vmatprep.subr.mxu0 0.0
      %1691 = vmatpush1.msra.mxu0 0.0
      %1692 = vmatprep.subr.mxu0 0.0
      %1693 = vmatpush1.msra.mxu0 0.0
      %1694 = vmatprep.subr.mxu0 0.0
      %1695 = vmatpush1.msra.mxu0 0.0
      %1696 = vmatprep.subr.mxu0 0.0
      %1697 = vmatpush1.msra.mxu0 %v1675
      %1698 = vmatprep.subr.mxu0 0.0
      %1699 = vmatpush1.msra.mxu0 %v1674
      %1700 = vmatprep.subr.mxu0 0.0
      %1701 = vmatpush1.msra.mxu0 %v1673
      %1702 = vmatprep.subr.mxu0 0.0
      %1703 = vmatpush1.msra.mxu0 %v1672
      %1704 = vmatprep.subr.mxu0 0.0
      %1705 = vmatpush1.msra.mxu0 %v1671
      %1706 = vmatprep.subr.mxu0 0.0
      %1707 = vmatpush1.msra.mxu0 %v1670
      %1708 = vmatprep.subr.mxu0 0.0
      %1709 = vmatpush1.msra.mxu0 %v1669
      %1710 = vmatprep.subr.mxu0 0.0
      %1711 = vmatpush1.msra.mxu0 %v1668
      %1712 = vmatprep.subr.mxu0 0.0
      %1713 = vmatpush2.msra.mxu0 0.0
      %1714 = vmatprep.subr.mxu0 0.0
      %1715 = vmatpush2.msra.mxu0 0.0
      %1716 = vmatprep.subr.mxu0 0.0
      %1717 = vmatpush2.msra.mxu0 0.0
      %1718 = vmatprep.subr.mxu0 0.0
      %1719 = vmatpush2.msra.mxu0 0.0
      %1720 = vmatprep.subr.mxu0 0.0
      %1721 = vmatpush2.msra.mxu0 0.0
      %1722 = vmatprep.subr.mxu0 0.0
      %1723 = vmatpush2.msra.mxu0 0.0
      %1724 = vmatprep.subr.mxu0 0.0
      %1725 = vmatpush2.msra.mxu0 0.0
      %1726 = vmatprep.subr.mxu0 0.0
      %1727 = vmatpush2.msra.mxu0 0.0
      %1728 = vmatprep.subr.mxu0 0.0
      %1729 = vmatpush2.msra.mxu0 0.0
      %1730 = vmatprep.subr.mxu0 0.0
      %1731 = vmatpush2.msra.mxu0 0.0
      %1732 = vmatprep.subr.mxu0 0.0
      %1733 = vmatpush2.msra.mxu0 0.0
      %1734 = vmatprep.subr.mxu0 0.0
      %1735 = vmatpush2.msra.mxu0 0.0
      %1736 = vmatprep.subr.mxu0 0.0
      %1737 = vmatpush2.msra.mxu0 0.0
      %1738 = vmatprep.subr.mxu0 0.0
      %1739 = vmatpush2.msra.mxu0 0.0
      %1740 = vmatprep.subr.mxu0 0.0
      %1741 = vmatpush2.msra.mxu0 0.0
      %1742 = vmatprep.subr.mxu0 0.0
      %1743 = vmatpush2.msra.mxu0 0.0
      %1744 = vmatprep.mubr.f32.mxu0 0.0
      %1745 = vmatmul.mubr.f32.gmra.mxu0 %v1678
      %v1746 = vpop.f32.mrf.mxu0
      %v1747 = vadd.f32 0.0, %v1746
      %v1748 = vpop.f32.mrf.mxu0
      %1749 = vdwg.mxu0
      %v1750 = vadd.f32 %v1666, %v1747
      %s1751 = scalar_lea.vmem %s6, 512
      %v1752 = vld [vmem:[%s1751] sm:$0xff]
      %v1753 = vld [vmem:[%s1751 + $0x8] sm:$0xff]
      %v1754 = vld [vmem:[%s1751 + $0x10] sm:$0xff]
      %v1755 = vld [vmem:[%s1751 + $0x18] sm:$0xff]
      %v1756 = vld [vmem:[%s1751 + $0x20] sm:$0xff]
      %v1757 = vld [vmem:[%s1751 + $0x28] sm:$0xff]
      %v1758 = vld [vmem:[%s1751 + $0x30] sm:$0xff]
      %v1759 = vld [vmem:[%s1751 + $0x38] sm:$0xff]
      %1760 = vrot.lane.b32.xlu0 %v1583, 112
      %v1761 = vpop.permute.xlu0 %1760
      %v1762 = vsel %vm323, %v1761, 0
      %1764 = vmatprep.subr.mxu0 0.0
      %1765 = vmatpush1.msra.mxu0 0.0
      %1766 = vmatprep.subr.mxu0 0.0
      %1767 = vmatpush1.msra.mxu0 0.0
      %1768 = vmatprep.subr.mxu0 0.0
      %1769 = vmatpush1.msra.mxu0 0.0
      %1770 = vmatprep.subr.mxu0 0.0
      %1771 = vmatpush1.msra.mxu0 0.0
      %1772 = vmatprep.subr.mxu0 0.0
      %1773 = vmatpush1.msra.mxu0 0.0
      %1774 = vmatprep.subr.mxu0 0.0
      %1775 = vmatpush1.msra.mxu0 0.0
      %1776 = vmatprep.subr.mxu0 0.0
      %1777 = vmatpush1.msra.mxu0 0.0
      %1778 = vmatprep.subr.mxu0 0.0
      %1779 = vmatpush1.msra.mxu0 0.0
      %1780 = vmatprep.subr.mxu0 0.0
      %1781 = vmatpush1.msra.mxu0 %v1759
      %1782 = vmatprep.subr.mxu0 0.0
      %1783 = vmatpush1.msra.mxu0 %v1758
      %1784 = vmatprep.subr.mxu0 0.0
      %1785 = vmatpush1.msra.mxu0 %v1757
      %1786 = vmatprep.subr.mxu0 0.0
      %1787 = vmatpush1.msra.mxu0 %v1756
      %1788 = vmatprep.subr.mxu0 0.0
      %1789 = vmatpush1.msra.mxu0 %v1755
      %1790 = vmatprep.subr.mxu0 0.0
      %1791 = vmatpush1.msra.mxu0 %v1754
      %1792 = vmatprep.subr.mxu0 0.0
      %1793 = vmatpush1.msra.mxu0 %v1753
      %1794 = vmatprep.subr.mxu0 0.0
      %1795 = vmatpush1.msra.mxu0 %v1752
      %1796 = vmatprep.subr.mxu0 0.0
      %1797 = vmatpush2.msra.mxu0 0.0
      %1798 = vmatprep.subr.mxu0 0.0
      %1799 = vmatpush2.msra.mxu0 0.0
      %1800 = vmatprep.subr.mxu0 0.0
      %1801 = vmatpush2.msra.mxu0 0.0
      %1802 = vmatprep.subr.mxu0 0.0
      %1803 = vmatpush2.msra.mxu0 0.0
      %1804 = vmatprep.subr.mxu0 0.0
      %1805 = vmatpush2.msra.mxu0 0.0
      %1806 = vmatprep.subr.mxu0 0.0
      %1807 = vmatpush2.msra.mxu0 0.0
      %1808 = vmatprep.subr.mxu0 0.0
      %1809 = vmatpush2.msra.mxu0 0.0
      %1810 = vmatprep.subr.mxu0 0.0
      %1811 = vmatpush2.msra.mxu0 0.0
      %1812 = vmatprep.subr.mxu0 0.0
      %1813 = vmatpush2.msra.mxu0 0.0
      %1814 = vmatprep.subr.mxu0 0.0
      %1815 = vmatpush2.msra.mxu0 0.0
      %1816 = vmatprep.subr.mxu0 0.0
      %1817 = vmatpush2.msra.mxu0 0.0
      %1818 = vmatprep.subr.mxu0 0.0
      %1819 = vmatpush2.msra.mxu0 0.0
      %1820 = vmatprep.subr.mxu0 0.0
      %1821 = vmatpush2.msra.mxu0 0.0
      %1822 = vmatprep.subr.mxu0 0.0
      %1823 = vmatpush2.msra.mxu0 0.0
      %1824 = vmatprep.subr.mxu0 0.0
      %1825 = vmatpush2.msra.mxu0 0.0
      %1826 = vmatprep.subr.mxu0 0.0
      %1827 = vmatpush2.msra.mxu0 0.0
      %1828 = vmatprep.mubr.f32.mxu0 0.0
      %1829 = vmatmul.mubr.f32.gmra.mxu0 %v1762
      %v1830 = vpop.f32.mrf.mxu0
      %v1831 = vadd.f32 0.0, %v1830
      %v1832 = vpop.f32.mrf.mxu0
      %1833 = vdwg.mxu0
      %v1834 = vadd.f32 %v1750, %v1831
      %1835 = vst.msk [vmem:[%s273] sm:$0xff] %vm323, %v1834
      %p1836 = scmp.lt.s32.totalorder %s18, 1
      %s1837 = scalar_select %p1836, %s18, 1
      %s1838 = smul.addr %s1837, 8
      %s1839 = scalar_lea.vmem %s7, %s1838
      // Predicated region
      $region49: #{network_block_forward.3} parent=47 // pred_check
        %p1840 = pneg %p188
      $region50: #{network_block_forward.3} parent=47 // pred_check_branch
        %1842 = sbr.rel (%p1840) target = $region52
      $region51: #{network_block_forward.3} parent=47 // pred_region
        _
      $region52: #{network_block_forward.3} parent=47 // pred_fallthru
        _
    $region48: #{network_block_forward.3} parent=5 // pred_fallthru
      _
    %p1843 = scmp.le.s32.totalorder 2, %s13
    // Predicated region
    $region53: #{network_block_forward.3} parent=5 // pred_check
      %p1844 = pneg %p1843
    $region54: #{network_block_forward.3} parent=5 // pred_check_branch
      %1846 = sbr.rel (%p1844) target = $region56
    $region55: #{network_block_forward.3} parent=5 // pred_region
      %s1847 = ssub.s32 %s13, 2
      // Predicated region
      $region57: #{network_block_forward.3} parent=55 // pred_check
        %p1848 = pneg %p194
      $region58: #{network_block_forward.3} parent=55 // pred_check_branch
        %1850 = sbr.rel (%p1848) target = $region60
      $region59: #{network_block_forward.3} parent=55 // pred_region
        %p1851 = scmp.lt.s32.totalorder %s19, 1
        %s1852 = scalar_select %p1851, %s19, 1
        %s1853 = smul.addr %s1852, 8
        %s1854 = scalar_lea.vmem %s7, %s1853
      $region60: #{network_block_forward.3} parent=55 // pred_fallthru
        _
    $region56: #{network_block_forward.3} parent=5 // pred_fallthru
      _
  $region6: #{network_block_forward.3} parent=0 // loop_footer
    %s17 = sadd.s32 1, %s13
  $region7: #{network_block_forward.3} parent=0 // loop_footer_branch
    %12 = sbr.rel target = $region3
  $region8: #{network_block_forward.3} parent=0 // loop_exit
    _

// kernel: network_block_forward.2
$region0: #{network_block_forward.2}
  #allocation0 [shape = 'u32[]', space=smem, size = 0x4, offset = 0x4, fixed_abs, tag = 'smem constant byte address 0x4 - core index']
  #allocation1 [shape = 'u32[144,128]{1,0:T(1,128)}', space=vmem, size = 0x12000, scoped, tag = 'internal scratch']
  #allocation2 [shape = 'f32[9,36]{1,0:T(8,128)}', space=vmem, size = 0x2000, scoped, tag = 'scratch operand']
  #allocation3 [shape = 'f32[9,36]{1,0:T(8,128)}', space=vmem, size = 0x2000, scoped, tag = 'scratch operand']
  #allocation4 [shape = 'f32[9,36]{1,0:T(8,128)}', space=vmem, size = 0x2000, scoped, tag = 'scratch operand']
  #allocation5 [shape = 'f32[9,36]{1,0:T(8,128)}', space=vmem, size = 0x2000, scoped, tag = 'scratch operand']
  #allocation6 [shape = 'f32[10,80]{1,0:T(8,128)}', space=vmem, size = 0x2000, scoped, tag = 'scratch operand']
  %s0 = inlined_call_operand.vmem [shape: f32[2,4,8,32], index: 0, kind: input, shape index: {}]
  %s1 = inlined_call_operand.vmem [shape: f32[1,32], index: 1, kind: input, shape index: {}]
  %s2 = inlined_call_operand.vmem [shape: f32[1,32], index: 2, kind: input, shape index: {}]
  %s3 = inlined_call_operand.vmem [shape: f32[9,32,64], index: 3, kind: input, shape index: {}]
  %s4 = inlined_call_operand.vmem [shape: f32[1,64], index: 4, kind: input, shape index: {}]
  %s5 = inlined_call_operand.vmem [shape: f32[1,64], index: 5, kind: input, shape index: {}]
  %s6 = inlined_call_operand.vmem [shape: f32[9,64,64], index: 6, kind: input, shape index: {}]
  %s7 = inlined_call_operand.vmem [shape: f32[32,64], index: 7, kind: input, shape index: {}]
  %s8 = inlined_call_operand.vmem [shape: f32[2,8,64], index: 8, kind: output, shape index: {}]
  %s9 = sld [smem:[#allocation0]]
  $region65: #{network_block_forward.2} parent=0
    _
  %s11 = ssub.s32 1, %s9
  %s12 = scalar_select 0, %s11, %s9
  loop: start=0, step=1, limit=4
  $region2: #{network_block_forward.2} parent=0 // loop_pre_header
    _
  $region3: #{network_block_forward.2} parent=0 // loop_header
    %s14 = sphi 0, %s18
    %p15 = scmp.ge.s32.totalorder %s14, 4
    %s24 = sphi 0, %s26
    %s27 = sphi 0, %s24
    %s28 = sphi 0, %s27
    %s44 = sphi 0, %s28
    %s48 = sphi 0, %s48
    %s50 = sphi 0, %s48
    %s51 = sphi 0, %s50
    %s65 = sphi 0, %s51
    %s69 = sphi 0, %s69
    %s71 = sphi 0, %s69
    %s72 = sphi 0, %s71
    %s86 = sphi 0, %s72
    %s90 = sphi 0, %s90
    %s92 = sphi 0, %s90
    %s93 = sphi 0, %s92
    %s107 = sphi 0, %s93
    %s111 = sphi 0, %s111
    %s113 = sphi 0, %s111
    %s114 = sphi 0, %s113
    %s128 = sphi 0, %s114
    %s132 = sphi 0, %s132
    %s134 = sphi 0, %s132
    %s135 = sphi 0, %s134
    %s149 = sphi 0, %s135
    %s153 = sphi 0, %s153
    %s155 = sphi 0, %s153
    %s156 = sphi 0, %s155
    %s170 = sphi 0, %s156
    %s174 = sphi 0, %s174
    %s176 = sphi 0, %s174
    %s177 = sphi 0, %s176
    %s191 = sphi 0, %s177
    %s197 = sphi 0, %s199
    %s200 = sphi 0, %s197
    %s201 = sphi 0, %s200
    %s217 = sphi 0, %s201
  $region4: #{network_block_forward.2} parent=0 // loop_header_branch
    %17 = sbr.rel (%p15) target = $region8
  $region5: #{network_block_forward.2} parent=0 // loop_body
    %s19 = ssub.s32 %s14, 1
    %s20 = ssub.s32 %s14, 2
    %s21 = sadd.s32 %s14, 1
    %s22 = ssub.s32 %s14, %s21
    %p23 = scmp.eq.s32.totalorder %s22, 0
    %s25 = sadd.s32 %s24, 1
    %s26 = scalar_select %p23, %s24, %s25
    %p29 = pneg %p23
    %p30 = scmp.eq.s32.totalorder %s14, 1
    %p31 = por %p29, %p30
    %p32 = scmp.ne.s32.totalorder %s24, %s27
    %p33 = scmp.eq.s32.totalorder %s14, 0
    %p34 = por %p32, %p33
    %p35 = scmp.ne.s32.totalorder %s24, %s27
    %p36 = scmp.eq.s32.totalorder %s19, 1
    %p37 = por %p35, %p36
    %p38 = scmp.ne.s32.totalorder %s27, %s28
    %p39 = scmp.eq.s32.totalorder %s19, 0
    %p40 = por %p38, %p39
    %p41 = scmp.ne.s32.totalorder %s27, %s28
    %p42 = scmp.eq.s32.totalorder %s20, 1
    %p43 = por %p41, %p42
    %p45 = scmp.ne.s32.totalorder %s28, %s44
    %p46 = scmp.eq.s32.totalorder %s20, 0
    %p47 = por %p45, %p46
    %s49 = sadd.s32 %s48, 1
    %p52 = scmp.eq.s32.totalorder %s14, 1
    %p53 = scmp.ne.s32.totalorder %s48, %s50
    %p54 = scmp.eq.s32.totalorder %s14, 0
    %p55 = por %p53, %p54
    %p56 = scmp.ne.s32.totalorder %s48, %s50
    %p57 = scmp.eq.s32.totalorder %s19, 1
    %p58 = por %p56, %p57
    %p59 = scmp.ne.s32.totalorder %s50, %s51
    %p60 = scmp.eq.s32.totalorder %s19, 0
    %p61 = por %p59, %p60
    %p62 = scmp.ne.s32.totalorder %s50, %s51
    %p63 = scmp.eq.s32.totalorder %s20, 1
    %p64 = por %p62, %p63
    %p66 = scmp.ne.s32.totalorder %s51, %s65
    %p67 = scmp.eq.s32.totalorder %s20, 0
    %p68 = por %p66, %p67
    %s70 = sadd.s32 %s69, 1
    %p73 = scmp.eq.s32.totalorder %s14, 1
    %p74 = scmp.ne.s32.totalorder %s69, %s71
    %p75 = scmp.eq.s32.totalorder %s14, 0
    %p76 = por %p74, %p75
    %p77 = scmp.ne.s32.totalorder %s69, %s71
    %p78 = scmp.eq.s32.totalorder %s19, 1
    %p79 = por %p77, %p78
    %p80 = scmp.ne.s32.totalorder %s71, %s72
    %p81 = scmp.eq.s32.totalorder %s19, 0
    %p82 = por %p80, %p81
    %p83 = scmp.ne.s32.totalorder %s71, %s72
    %p84 = scmp.eq.s32.totalorder %s20, 1
    %p85 = por %p83, %p84
    %p87 = scmp.ne.s32.totalorder %s72, %s86
    %p88 = scmp.eq.s32.totalorder %s20, 0
    %p89 = por %p87, %p88
    %s91 = sadd.s32 %s90, 1
    %p94 = scmp.eq.s32.totalorder %s14, 1
    %p95 = scmp.ne.s32.totalorder %s90, %s92
    %p96 = scmp.eq.s32.totalorder %s14, 0
    %p97 = por %p95, %p96
    %p98 = scmp.ne.s32.totalorder %s90, %s92
    %p99 = scmp.eq.s32.totalorder %s19, 1
    %p100 = por %p98, %p99
    %p101 = scmp.ne.s32.totalorder %s92, %s93
    %p102 = scmp.eq.s32.totalorder %s19, 0
    %p103 = por %p101, %p102
    %p104 = scmp.ne.s32.totalorder %s92, %s93
    %p105 = scmp.eq.s32.totalorder %s20, 1
    %p106 = por %p104, %p105
    %p108 = scmp.ne.s32.totalorder %s93, %s107
    %p109 = scmp.eq.s32.totalorder %s20, 0
    %p110 = por %p108, %p109
    %s112 = sadd.s32 %s111, 1
    %p115 = scmp.eq.s32.totalorder %s14, 1
    %p116 = scmp.ne.s32.totalorder %s111, %s113
    %p117 = scmp.eq.s32.totalorder %s14, 0
    %p118 = por %p116, %p117
    %p119 = scmp.ne.s32.totalorder %s111, %s113
    %p120 = scmp.eq.s32.totalorder %s19, 1
    %p121 = por %p119, %p120
    %p122 = scmp.ne.s32.totalorder %s113, %s114
    %p123 = scmp.eq.s32.totalorder %s19, 0
    %p124 = por %p122, %p123
    %p125 = scmp.ne.s32.totalorder %s113, %s114
    %p126 = scmp.eq.s32.totalorder %s20, 1
    %p127 = por %p125, %p126
    %p129 = scmp.ne.s32.totalorder %s114, %s128
    %p130 = scmp.eq.s32.totalorder %s20, 0
    %p131 = por %p129, %p130
    %s133 = sadd.s32 %s132, 1
    %p136 = scmp.eq.s32.totalorder %s14, 1
    %p137 = scmp.ne.s32.totalorder %s132, %s134
    %p138 = scmp.eq.s32.totalorder %s14, 0
    %p139 = por %p137, %p138
    %p140 = scmp.ne.s32.totalorder %s132, %s134
    %p141 = scmp.eq.s32.totalorder %s19, 1
    %p142 = por %p140, %p141
    %p143 = scmp.ne.s32.totalorder %s134, %s135
    %p144 = scmp.eq.s32.totalorder %s19, 0
    %p145 = por %p143, %p144
    %p146 = scmp.ne.s32.totalorder %s134, %s135
    %p147 = scmp.eq.s32.totalorder %s20, 1
    %p148 = por %p146, %p147
    %p150 = scmp.ne.s32.totalorder %s135, %s149
    %p151 = scmp.eq.s32.totalorder %s20, 0
    %p152 = por %p150, %p151
    %s154 = sadd.s32 %s153, 1
    %p157 = scmp.eq.s32.totalorder %s14, 1
    %p158 = scmp.ne.s32.totalorder %s153, %s155
    %p159 = scmp.eq.s32.totalorder %s14, 0
    %p160 = por %p158, %p159
    %p161 = scmp.ne.s32.totalorder %s153, %s155
    %p162 = scmp.eq.s32.totalorder %s19, 1
    %p163 = por %p161, %p162
    %p164 = scmp.ne.s32.totalorder %s155, %s156
    %p165 = scmp.eq.s32.totalorder %s19, 0
    %p166 = por %p164, %p165
    %p167 = scmp.ne.s32.totalorder %s155, %s156
    %p168 = scmp.eq.s32.totalorder %s20, 1
    %p169 = por %p167, %p168
    %p171 = scmp.ne.s32.totalorder %s156, %s170
    %p172 = scmp.eq.s32.totalorder %s20, 0
    %p173 = por %p171, %p172
    %s175 = sadd.s32 %s174, 1
    %p178 = scmp.eq.s32.totalorder %s14, 1
    %p179 = scmp.ne.s32.totalorder %s174, %s176
    %p180 = scmp.eq.s32.totalorder %s14, 0
    %p181 = por %p179, %p180
    %p182 = scmp.ne.s32.totalorder %s174, %s176
    %p183 = scmp.eq.s32.totalorder %s19, 1
    %p184 = por %p182, %p183
    %p185 = scmp.ne.s32.totalorder %s176, %s177
    %p186 = scmp.eq.s32.totalorder %s19, 0
    %p187 = por %p185, %p186
    %p188 = scmp.ne.s32.totalorder %s176, %s177
    %p189 = scmp.eq.s32.totalorder %s20, 1
    %p190 = por %p188, %p189
    %p192 = scmp.ne.s32.totalorder %s177, %s191
    %p193 = scmp.eq.s32.totalorder %s20, 0
    %p194 = por %p192, %p193
    %s195 = ssub.s32 %s14, %s21
    %p196 = scmp.eq.s32.totalorder %s195, 0
    %s198 = sadd.s32 %s197, 1
    %s199 = scalar_select %p196, %s197, %s198
    %p202 = pneg %p196
    %p203 = scmp.eq.s32.totalorder %s14, 1
    %p204 = por %p202, %p203
    %p205 = scmp.ne.s32.totalorder %s197, %s200
    %p206 = scmp.eq.s32.totalorder %s14, 0
    %p207 = por %p205, %p206
    %p208 = scmp.ne.s32.totalorder %s197, %s200
    %p209 = scmp.eq.s32.totalorder %s19, 1
    %p210 = por %p208, %p209
    %p211 = scmp.ne.s32.totalorder %s200, %s201
    %p212 = scmp.eq.s32.totalorder %s19, 0
    %p213 = por %p211, %p212
    %p214 = scmp.ne.s32.totalorder %s200, %s201
    %p215 = scmp.eq.s32.totalorder %s20, 1
    %p216 = por %p214, %p215
    %p218 = scmp.ne.s32.totalorder %s201, %s217
    %p219 = scmp.eq.s32.totalorder %s20, 0
    %p220 = por %p218, %p219
    %p221 = scmp.le.s32.totalorder 1, %s14
    %p222 = scmp.lt.s32.totalorder %s14, 3
    %p223 = pnand %p221, %p222
    %p224 = pneg %p223
    // Predicated region
    $region9: #{network_block_forward.2} parent=5 // pred_check
      _
    $region10: #{network_block_forward.2} parent=5 // pred_check_branch
      %226 = sbr.rel (%p223) target = $region12
    $region11: #{network_block_forward.2} parent=5 // pred_region
      %s227 = ssub.s32 %s14, 1
      // Predicated region
      $region13: #{network_block_forward.2} parent=11 // pred_check
        %p228 = pneg %p61
      $region14: #{network_block_forward.2} parent=11 // pred_check_branch
        %230 = sbr.rel (%p228) target = $region16
      $region15: #{network_block_forward.2} parent=11 // pred_region
        _
      $region16: #{network_block_forward.2} parent=11 // pred_fallthru
        _
      // Predicated region
      $region17: #{network_block_forward.2} parent=11 // pred_check
        %p231 = pneg %p82
      $region18: #{network_block_forward.2} parent=11 // pred_check_branch
        %233 = sbr.rel (%p231) target = $region20
      $region19: #{network_block_forward.2} parent=11 // pred_region
        _
      $region20: #{network_block_forward.2} parent=11 // pred_fallthru
        _
      // Predicated region
      $region21: #{network_block_forward.2} parent=11 // pred_check
        %p234 = pneg %p103
      $region22: #{network_block_forward.2} parent=11 // pred_check_branch
        %236 = sbr.rel (%p234) target = $region24
      $region23: #{network_block_forward.2} parent=11 // pred_region
        _
      $region24: #{network_block_forward.2} parent=11 // pred_fallthru
        _
      // Predicated region
      $region25: #{network_block_forward.2} parent=11 // pred_check
        %p237 = pneg %p124
      $region26: #{network_block_forward.2} parent=11 // pred_check_branch
        %239 = sbr.rel (%p237) target = $region28
      $region27: #{network_block_forward.2} parent=11 // pred_region
        _
      $region28: #{network_block_forward.2} parent=11 // pred_fallthru
        _
      // Predicated region
      $region29: #{network_block_forward.2} parent=11 // pred_check
        %p240 = pneg %p145
      $region30: #{network_block_forward.2} parent=11 // pred_check_branch
        %242 = sbr.rel (%p240) target = $region32
      $region31: #{network_block_forward.2} parent=11 // pred_region
        _
      $region32: #{network_block_forward.2} parent=11 // pred_fallthru
        _
      // Predicated region
      $region33: #{network_block_forward.2} parent=11 // pred_check
        %p243 = pneg %p166
      $region34: #{network_block_forward.2} parent=11 // pred_check_branch
        %245 = sbr.rel (%p243) target = $region36
      $region35: #{network_block_forward.2} parent=11 // pred_region
        _
      $region36: #{network_block_forward.2} parent=11 // pred_fallthru
        _
      // Predicated region
      $region37: #{network_block_forward.2} parent=11 // pred_check
        %p246 = pneg %p187
      $region38: #{network_block_forward.2} parent=11 // pred_check_branch
        %248 = sbr.rel (%p246) target = $region40
      $region39: #{network_block_forward.2} parent=11 // pred_region
        _
      $region40: #{network_block_forward.2} parent=11 // pred_fallthru
        _
    $region12: #{network_block_forward.2} parent=5 // pred_fallthru
      _
    %p249 = scmp.lt.s32.totalorder %s14, 2
    // Predicated region
    $region41: #{network_block_forward.2} parent=5 // pred_check
      %p250 = pneg %p249
    $region42: #{network_block_forward.2} parent=5 // pred_check_branch
      %252 = sbr.rel (%p250) target = $region44
    $region43: #{network_block_forward.2} parent=5 // pred_region
      // Predicated region
      $region45: #{network_block_forward.2} parent=43 // pred_check
        %p253 = pneg %p34
      $region46: #{network_block_forward.2} parent=43 // pred_check_branch
        %255 = sbr.rel (%p253) target = $region48
      $region47: #{network_block_forward.2} parent=43 // pred_region
        %p256 = scmp.lt.s32.totalorder %s14, 1
        %s257 = scalar_select %p256, %s14, 1
        %s258 = smul.addr %s257, 4
        %s259 = smul.addr %s258, 8
        %s260 = scalar_lea.vmem %s0, %s259
      $region48: #{network_block_forward.2} parent=43 // pred_fallthru
        _
    $region44: #{network_block_forward.2} parent=5 // pred_fallthru
      _
    %p261 = scmp.le.s32.totalorder 1, %s14
    %p262 = scmp.lt.s32.totalorder %s14, 3
    %p263 = pnand %p261, %p262
    %p264 = pneg %p263
    // Predicated region
    $region49: #{network_block_forward.2} parent=5 // pred_check
      _
    $region50: #{network_block_forward.2} parent=5 // pred_check_branch
      %266 = sbr.rel (%p263) target = $region52
    $region51: #{network_block_forward.2} parent=5 // pred_region
      %s267 = ssub.s32 %s14, 1
      %p268 = scmp.lt.s32.totalorder %s19, 1
      %s269 = scalar_select %p268, %s19, 1
      %s270 = smul.addr %s269, 4
      %s271 = smul.addr %s270, 8
      %s272 = scalar_lea.vmem %s0, %s271
      %p273 = pneg %p40
      %p274 = pneg %p37
      %p275 = pneg %p61
      %p276 = pneg %p58
      %p277 = pneg %p82
      %p278 = pneg %p79
      %p279 = pneg %p103
      %p280 = pneg %p100
      %p281 = pneg %p124
      %p282 = pneg %p121
      %p283 = pneg %p145
      %p284 = pneg %p142
      %p285 = pneg %p166
      %p286 = pneg %p163
      %p287 = pneg %p187
      %p288 = pneg %p184
      %p289 = pneg %p213
      %p290 = pneg %p210
      %p291 = scmp.lt.s32.totalorder %s19, 1
      %s292 = scalar_select %p291, %s19, 1
      %s293 = smul.addr %s292, 8
      %s294 = scalar_lea.vmem %s8, %s293
      %p295 = scmp.lt.s32.totalorder %s19, 1
      %s296 = scalar_select %p295, %s19, 1
      %s297 = smul.addr %s296, 4
      %s298 = smul.addr %s297, 8
      %s299 = scalar_lea.vmem %s0, %s298
      %p300 = scmp.lt.s32.totalorder %s19, 1
      %s301 = scalar_select %p300, %s19, 1
      %s302 = smul.addr %s301, 8
      %s303 = scalar_lea.vmem %s8, %s302
      %vm304 = vcmask 293888
      %305 = vst.msk [vmem:[#allocation2] sm:$0xff] %vm304, 0.0
      %vm306 = vcmask 286720
      %307 = vst.msk [vmem:[#allocation2 + $0x8] sm:$0x1] %vm306, 0.0
      %v308 = vld [vmem:[%s299] sm:$0xff]
      %v309 = vld [vmem:[%s1] sm:$0x1]
      %v311 = vlaneseq
      %v312 = vshrl.u32 %v311, 7
      %v313 = vsub.s32 0, %v312
      %v314 = vrot.slane %v309, %v313
      %v316 = vmul.f32 %v308, %v314
      %v317 = vld [vmem:[%s2] sm:$0x1]
      %v319 = vlaneseq
      %v320 = vshrl.u32 %v319, 7
      %v321 = vsub.s32 0, %v320
      %v322 = vrot.slane %v317, %v321
      %v324 = vadd.f32 %v316, %v322
      %v325 = vmax.f32 %v324, 0.0
      %327 = vrot.lane.b32.xlu0 %v325, 4
      %v328 = vpop.permute.xlu0 %327
      %vm330 = vcmask 293920
      %331 = vst.msk [vmem:[#allocation2 + $0x1] sm:$0xff] %vm330, %v328
      %332 = vst.msk [vmem:[#allocation3] sm:$0xff] %vm304, 0.0
      %333 = vst.msk [vmem:[#allocation3 + $0x8] sm:$0x1] %vm306, 0.0
      %s334 = scalar_lea.vmem %s299, 8
      %v335 = vld [vmem:[%s334] sm:$0xff]
      %v336 = vld [vmem:[%s1] sm:$0x1]
      %v338 = vlaneseq
      %v339 = vshrl.u32 %v338, 7
      %v340 = vsub.s32 0, %v339
      %v341 = vrot.slane %v336, %v340
      %v343 = vmul.f32 %v335, %v341
      %v344 = vld [vmem:[%s2] sm:$0x1]
      %v346 = vlaneseq
      %v347 = vshrl.u32 %v346, 7
      %v348 = vsub.s32 0, %v347
      %v349 = vrot.slane %v344, %v348
      %v351 = vadd.f32 %v343, %v349
      %v352 = vmax.f32 %v351, 0.0
      %vm353 = vcmask 261120
      %354 = vst.msk [vmem:[#allocation3 + $0x1] sm:$0xff] %vm353, %v352
      %355 = vst.msk [vmem:[#allocation4] sm:$0xff] %vm304, 0.0
      %356 = vst.msk [vmem:[#allocation4 + $0x8] sm:$0x1] %vm306, 0.0
      %s357 = scalar_lea.vmem %s299, 16
      %v358 = vld [vmem:[%s357] sm:$0xff]
      %v359 = vld [vmem:[%s1] sm:$0x1]
      %v361 = vlaneseq
      %v362 = vshrl.u32 %v361, 7
      %v363 = vsub.s32 0, %v362
      %v364 = vrot.slane %v359, %v363
      %v366 = vmul.f32 %v358, %v364
      %v367 = vld [vmem:[%s2] sm:$0x1]
      %v369 = vlaneseq
      %v370 = vshrl.u32 %v369, 7
      %v371 = vsub.s32 0, %v370
      %v372 = vrot.slane %v367, %v371
      %v374 = vadd.f32 %v366, %v372
      %v375 = vmax.f32 %v374, 0.0
      %377 = vrot.lane.b32.xlu0 %v375, 4
      %v378 = vpop.permute.xlu0 %377
      %380 = vst.msk [vmem:[#allocation4] sm:$0xff] %vm330, %v378
      %381 = vst.msk [vmem:[#allocation5] sm:$0xff] %vm304, 0.0
      %382 = vst.msk [vmem:[#allocation5 + $0x8] sm:$0x1] %vm306, 0.0
      %s383 = scalar_lea.vmem %s299, 24
      %v384 = vld [vmem:[%s383] sm:$0xff]
      %v385 = vld [vmem:[%s1] sm:$0x1]
      %v387 = vlaneseq
      %v388 = vshrl.u32 %v387, 7
      %v389 = vsub.s32 0, %v388
      %v390 = vrot.slane %v385, %v389
      %v392 = vmul.f32 %v384, %v390
      %v393 = vld [vmem:[%s2] sm:$0x1]
      %v395 = vlaneseq
      %v396 = vshrl.u32 %v395, 7
      %v397 = vsub.s32 0, %v396
      %v398 = vrot.slane %v393, %v397
      %v400 = vadd.f32 %v392, %v398
      %v401 = vmax.f32 %v400, 0.0
      %402 = vst.msk [vmem:[#allocation5] sm:$0xff] %vm353, %v401
      %v403 = vld [vmem:[%s7] sm:$0xff]
      %v404 = vld [vmem:[%s7 + $0x8] sm:$0xff]
      %v405 = vld [vmem:[%s7 + $0x10] sm:$0xff]
      %v406 = vld [vmem:[%s7 + $0x18] sm:$0xff]
      %v407 = vld [vmem:[#allocation2] sm:$0xff]
      %v408 = vld [vmem:[%s3] sm:$0xff]
      %v409 = vld [vmem:[%s3 + $0x8] sm:$0xff]
      %v410 = vld [vmem:[%s3 + $0x10] sm:$0xff]
      %v411 = vld [vmem:[%s3 + $0x18] sm:$0xff]
      %v412 = vld [vmem:[#allocation3] sm:$0xff]
      %s413 = scalar_lea.vmem %s3, 32
      %v414 = vld [vmem:[%s413] sm:$0xff]
      %v415 = vld [vmem:[%s413 + $0x8] sm:$0xff]
      %v416 = vld [vmem:[%s413 + $0x10] sm:$0xff]
      %v417 = vld [vmem:[%s413 + $0x18] sm:$0xff]
      %v419 = vsel %vm353, %v412, 0
      %421 = vmatprep.subr.mxu0 0.0
      %422 = vmatpush1.msra.mxu0 0.0
      %423 = vmatprep.subr.mxu0 0.0
      %424 = vmatpush1.msra.mxu0 0.0
      %425 = vmatprep.subr.mxu0 0.0
      %426 = vmatpush1.msra.mxu0 0.0
      %427 = vmatprep.subr.mxu0 0.0
      %428 = vmatpush1.msra.mxu0 0.0
      %429 = vmatprep.subr.mxu0 0.0
      %430 = vmatpush1.msra.mxu0 0.0
      %431 = vmatprep.subr.mxu0 0.0
      %432 = vmatpush1.msra.mxu0 0.0
      %433 = vmatprep.subr.mxu0 0.0
      %434 = vmatpush1.msra.mxu0 0.0
      %435 = vmatprep.subr.mxu0 0.0
      %436 = vmatpush1.msra.mxu0 0.0
      %437 = vmatprep.subr.mxu0 0.0
      %438 = vmatpush1.msra.mxu0 0.0
      %439 = vmatprep.subr.mxu0 0.0
      %440 = vmatpush1.msra.mxu0 0.0
      %441 = vmatprep.subr.mxu0 0.0
      %442 = vmatpush1.msra.mxu0 0.0
      %443 = vmatprep.subr.mxu0 0.0
      %444 = vmatpush1.msra.mxu0 0.0
      %445 = vmatprep.subr.mxu0 0.0
      %446 = vmatpush1.msra.mxu0 %v417
      %447 = vmatprep.subr.mxu0 0.0
      %448 = vmatpush1.msra.mxu0 %v416
      %449 = vmatprep.subr.mxu0 0.0
      %450 = vmatpush1.msra.mxu0 %v415
      %451 = vmatprep.subr.mxu0 0.0
      %452 = vmatpush1.msra.mxu0 %v414
      %453 = vmatprep.subr.mxu0 0.0
      %454 = vmatpush2.msra.mxu0 0.0
      %455 = vmatprep.subr.mxu0 0.0
      %456 = vmatpush2.msra.mxu0 0.0
      %457 = vmatprep.subr.mxu0 0.0
      %458 = vmatpush2.msra.mxu0 0.0
      %459 = vmatprep.subr.mxu0 0.0
      %460 = vmatpush2.msra.mxu0 0.0
      %461 = vmatprep.subr.mxu0 0.0
      %462 = vmatpush2.msra.mxu0 0.0
      %463 = vmatprep.subr.mxu0 0.0
      %464 = vmatpush2.msra.mxu0 0.0
      %465 = vmatprep.subr.mxu0 0.0
      %466 = vmatpush2.msra.mxu0 0.0
      %467 = vmatprep.subr.mxu0 0.0
      %468 = vmatpush2.msra.mxu0 0.0
      %469 = vmatprep.subr.mxu0 0.0
      %470 = vmatpush2.msra.mxu0 0.0
      %471 = vmatprep.subr.mxu0 0.0
      %472 = vmatpush2.msra.mxu0 0.0
      %473 = vmatprep.subr.mxu0 0.0
      %474 = vmatpush2.msra.mxu0 0.0
      %475 = vmatprep.subr.mxu0 0.0
      %476 = vmatpush2.msra.mxu0 0.0
      %477 = vmatprep.subr.mxu0 0.0
      %478 = vmatpush2.msra.mxu0 0.0
      %479 = vmatprep.subr.mxu0 0.0
      %480 = vmatpush2.msra.mxu0 0.0
      %481 = vmatprep.subr.mxu0 0.0
      %482 = vmatpush2.msra.mxu0 0.0
      %483 = vmatprep.subr.mxu0 0.0
      %484 = vmatpush2.msra.mxu0 0.0
      %485 = vmatprep.mubr.f32.mxu0 0.0
      %486 = vmatmul.mubr.f32.gmra.mxu0 %v419
      %v487 = vpop.f32.mrf.mxu0
      %v488 = vadd.f32 0.0, %v487
      %v489 = vpop.f32.mrf.mxu0
      %490 = vdwg.mxu0
      %v492 = vsel %vm353, %v407, 0
      %494 = vmatprep.subr.mxu0 0.0
      %495 = vmatpush1.msra.mxu0 0.0
      %496 = vmatprep.subr.mxu0 0.0
      %497 = vmatpush1.msra.mxu0 0.0
      %498 = vmatprep.subr.mxu0 0.0
      %499 = vmatpush1.msra.mxu0 0.0
      %500 = vmatprep.subr.mxu0 0.0
      %501 = vmatpush1.msra.mxu0 0.0
      %502 = vmatprep.subr.mxu0 0.0
      %503 = vmatpush1.msra.mxu0 0.0
      %504 = vmatprep.subr.mxu0 0.0
      %505 = vmatpush1.msra.mxu0 0.0
      %506 = vmatprep.subr.mxu0 0.0
      %507 = vmatpush1.msra.mxu0 0.0
      %508 = vmatprep.subr.mxu0 0.0
      %509 = vmatpush1.msra.mxu0 0.0
      %510 = vmatprep.subr.mxu0 0.0
      %511 = vmatpush1.msra.mxu0 0.0
      %512 = vmatprep.subr.mxu0 0.0
      %513 = vmatpush1.msra.mxu0 0.0
      %514 = vmatprep.subr.mxu0 0.0
      %515 = vmatpush1.msra.mxu0 0.0
      %516 = vmatprep.subr.mxu0 0.0
      %517 = vmatpush1.msra.mxu0 0.0
      %518 = vmatprep.subr.mxu0 0.0
      %519 = vmatpush1.msra.mxu0 %v411
      %520 = vmatprep.subr.mxu0 0.0
      %521 = vmatpush1.msra.mxu0 %v410
      %522 = vmatprep.subr.mxu0 0.0
      %523 = vmatpush1.msra.mxu0 %v409
      %524 = vmatprep.subr.mxu0 0.0
      %525 = vmatpush1.msra.mxu0 %v408
      %526 = vmatprep.subr.mxu0 0.0
      %527 = vmatpush2.msra.mxu0 0.0
      %528 = vmatprep.subr.mxu0 0.0
      %529 = vmatpush2.msra.mxu0 0.0
      %530 = vmatprep.subr.mxu0 0.0
      %531 = vmatpush2.msra.mxu0 0.0
      %532 = vmatprep.subr.mxu0 0.0
      %533 = vmatpush2.msra.mxu0 0.0
      %534 = vmatprep.subr.mxu0 0.0
      %535 = vmatpush2.msra.mxu0 0.0
      %536 = vmatprep.subr.mxu0 0.0
      %537 = vmatpush2.msra.mxu0 0.0
      %538 = vmatprep.subr.mxu0 0.0
      %539 = vmatpush2.msra.mxu0 0.0
      %540 = vmatprep.subr.mxu0 0.0
      %541 = vmatpush2.msra.mxu0 0.0
      %542 = vmatprep.subr.mxu0 0.0
      %543 = vmatpush2.msra.mxu0 0.0
      %544 = vmatprep.subr.mxu0 0.0
      %545 = vmatpush2.msra.mxu0 0.0
      %546 = vmatprep.subr.mxu0 0.0
      %547 = vmatpush2.msra.mxu0 0.0
      %548 = vmatprep.subr.mxu0 0.0
      %549 = vmatpush2.msra.mxu0 0.0
      %550 = vmatprep.subr.mxu0 0.0
      %551 = vmatpush2.msra.mxu0 0.0
      %552 = vmatprep.subr.mxu0 0.0
      %553 = vmatpush2.msra.mxu0 0.0
      %554 = vmatprep.subr.mxu0 0.0
      %555 = vmatpush2.msra.mxu0 0.0
      %556 = vmatprep.subr.mxu0 0.0
      %557 = vmatpush2.msra.mxu0 0.0
      %558 = vmatprep.mubr.f32.mxu0 0.0
      %559 = vmatmul.mubr.f32.gmra.mxu0 %v492
      %v560 = vpop.f32.mrf.mxu0
      %v561 = vadd.f32 %v488, %v560
      %v562 = vpop.f32.mrf.mxu0
      %563 = vdwg.mxu0
      %s564 = scalar_lea.vmem %s3, 64
      %v565 = vld [vmem:[%s564] sm:$0xff]
      %v566 = vld [vmem:[%s564 + $0x8] sm:$0xff]
      %v567 = vld [vmem:[%s564 + $0x10] sm:$0xff]
      %v568 = vld [vmem:[%s564 + $0x18] sm:$0xff]
      %569 = vrot.lane.b32.xlu0 %v407, 124
      %v570 = vpop.permute.xlu0 %569
      %v571 = vsel %vm353, %v570, 0
      %573 = vmatprep.subr.mxu0 0.0
      %574 = vmatpush1.msra.mxu0 0.0
      %575 = vmatprep.subr.mxu0 0.0
      %576 = vmatpush1.msra.mxu0 0.0
      %577 = vmatprep.subr.mxu0 0.0
      %578 = vmatpush1.msra.mxu0 0.0
      %579 = vmatprep.subr.mxu0 0.0
      %580 = vmatpush1.msra.mxu0 0.0
      %581 = vmatprep.subr.mxu0 0.0
      %582 = vmatpush1.msra.mxu0 0.0
      %583 = vmatprep.subr.mxu0 0.0
      %584 = vmatpush1.msra.mxu0 0.0
      %585 = vmatprep.subr.mxu0 0.0
      %586 = vmatpush1.msra.mxu0 0.0
      %587 = vmatprep.subr.mxu0 0.0
      %588 = vmatpush1.msra.mxu0 0.0
      %589 = vmatprep.subr.mxu0 0.0
      %590 = vmatpush1.msra.mxu0 0.0
      %591 = vmatprep.subr.mxu0 0.0
      %592 = vmatpush1.msra.mxu0 0.0
      %593 = vmatprep.subr.mxu0 0.0
      %594 = vmatpush1.msra.mxu0 0.0
      %595 = vmatprep.subr.mxu0 0.0
      %596 = vmatpush1.msra.mxu0 0.0
      %597 = vmatprep.subr.mxu0 0.0
      %598 = vmatpush1.msra.mxu0 %v568
      %599 = vmatprep.subr.mxu0 0.0
      %600 = vmatpush1.msra.mxu0 %v567
      %601 = vmatprep.subr.mxu0 0.0
      %602 = vmatpush1.msra.mxu0 %v566
      %603 = vmatprep.subr.mxu0 0.0
      %604 = vmatpush1.msra.mxu0 %v565
      %605 = vmatprep.subr.mxu0 0.0
      %606 = vmatpush2.msra.mxu0 0.0
      %607 = vmatprep.subr.mxu0 0.0
      %608 = vmatpush2.msra.mxu0 0.0
      %609 = vmatprep.subr.mxu0 0.0
      %610 = vmatpush2.msra.mxu0 0.0
      %611 = vmatprep.subr.mxu0 0.0
      %612 = vmatpush2.msra.mxu0 0.0
      %613 = vmatprep.subr.mxu0 0.0
      %614 = vmatpush2.msra.mxu0 0.0
      %615 = vmatprep.subr.mxu0 0.0
      %616 = vmatpush2.msra.mxu0 0.0
      %617 = vmatprep.subr.mxu0 0.0
      %618 = vmatpush2.msra.mxu0 0.0
      %619 = vmatprep.subr.mxu0 0.0
      %620 = vmatpush2.msra.mxu0 0.0
      %621 = vmatprep.subr.mxu0 0.0
      %622 = vmatpush2.msra.mxu0 0.0
      %623 = vmatprep.subr.mxu0 0.0
      %624 = vmatpush2.msra.mxu0 0.0
      %625 = vmatprep.subr.mxu0 0.0
      %626 = vmatpush2.msra.mxu0 0.0
      %627 = vmatprep.subr.mxu0 0.0
      %628 = vmatpush2.msra.mxu0 0.0
      %629 = vmatprep.subr.mxu0 0.0
      %630 = vmatpush2.msra.mxu0 0.0
      %631 = vmatprep.subr.mxu0 0.0
      %632 = vmatpush2.msra.mxu0 0.0
      %633 = vmatprep.subr.mxu0 0.0
      %634 = vmatpush2.msra.mxu0 0.0
      %635 = vmatprep.subr.mxu0 0.0
      %636 = vmatpush2.msra.mxu0 0.0
      %637 = vmatprep.mubr.f32.mxu0 0.0
      %638 = vmatmul.mubr.f32.gmra.mxu0 %v571
      %v639 = vpop.f32.mrf.mxu0
      %v640 = vadd.f32 0.0, %v639
      %v641 = vpop.f32.mrf.mxu0
      %642 = vdwg.mxu0
      %v643 = vadd.f32 %v561, %v640
      %v644 = vld [vmem:[#allocation4] sm:$0xff]
      %s645 = scalar_lea.vmem %s3, 96
      %v646 = vld [vmem:[%s645] sm:$0xff]
      %v647 = vld [vmem:[%s645 + $0x8] sm:$0xff]
      %v648 = vld [vmem:[%s645 + $0x10] sm:$0xff]
      %v649 = vld [vmem:[%s645 + $0x18] sm:$0xff]
      %v651 = vsel %vm353, %v644, 0
      %653 = vmatprep.subr.mxu0 0.0
      %654 = vmatpush1.msra.mxu0 0.0
      %655 = vmatprep.subr.mxu0 0.0
      %656 = vmatpush1.msra.mxu0 0.0
      %657 = vmatprep.subr.mxu0 0.0
      %658 = vmatpush1.msra.mxu0 0.0
      %659 = vmatprep.subr.mxu0 0.0
      %660 = vmatpush1.msra.mxu0 0.0
      %661 = vmatprep.subr.mxu0 0.0
      %662 = vmatpush1.msra.mxu0 0.0
      %663 = vmatprep.subr.mxu0 0.0
      %664 = vmatpush1.msra.mxu0 0.0
      %665 = vmatprep.subr.mxu0 0.0
      %666 = vmatpush1.msra.mxu0 0.0
      %667 = vmatprep.subr.mxu0 0.0
      %668 = vmatpush1.msra.mxu0 0.0
      %669 = vmatprep.subr.mxu0 0.0
      %670 = vmatpush1.msra.mxu0 0.0
      %671 = vmatprep.subr.mxu0 0.0
      %672 = vmatpush1.msra.mxu0 0.0
      %673 = vmatprep.subr.mxu0 0.0
      %674 = vmatpush1.msra.mxu0 0.0
      %675 = vmatprep.subr.mxu0 0.0
      %676 = vmatpush1.msra.mxu0 0.0
      %677 = vmatprep.subr.mxu0 0.0
      %678 = vmatpush1.msra.mxu0 %v649
      %679 = vmatprep.subr.mxu0 0.0
      %680 = vmatpush1.msra.mxu0 %v648
      %681 = vmatprep.subr.mxu0 0.0
      %682 = vmatpush1.msra.mxu0 %v647
      %683 = vmatprep.subr.mxu0 0.0
      %684 = vmatpush1.msra.mxu0 %v646
      %685 = vmatprep.subr.mxu0 0.0
      %686 = vmatpush2.msra.mxu0 0.0
      %687 = vmatprep.subr.mxu0 0.0
      %688 = vmatpush2.msra.mxu0 0.0
      %689 = vmatprep.subr.mxu0 0.0
      %690 = vmatpush2.msra.mxu0 0.0
      %691 = vmatprep.subr.mxu0 0.0
      %692 = vmatpush2.msra.mxu0 0.0
      %693 = vmatprep.subr.mxu0 0.0
      %694 = vmatpush2.msra.mxu0 0.0
      %695 = vmatprep.subr.mxu0 0.0
      %696 = vmatpush2.msra.mxu0 0.0
      %697 = vmatprep.subr.mxu0 0.0
      %698 = vmatpush2.msra.mxu0 0.0
      %699 = vmatprep.subr.mxu0 0.0
      %700 = vmatpush2.msra.mxu0 0.0
      %701 = vmatprep.subr.mxu0 0.0
      %702 = vmatpush2.msra.mxu0 0.0
      %703 = vmatprep.subr.mxu0 0.0
      %704 = vmatpush2.msra.mxu0 0.0
      %705 = vmatprep.subr.mxu0 0.0
      %706 = vmatpush2.msra.mxu0 0.0
      %707 = vmatprep.subr.mxu0 0.0
      %708 = vmatpush2.msra.mxu0 0.0
      %709 = vmatprep.subr.mxu0 0.0
      %710 = vmatpush2.msra.mxu0 0.0
      %711 = vmatprep.subr.mxu0 0.0
      %712 = vmatpush2.msra.mxu0 0.0
      %713 = vmatprep.subr.mxu0 0.0
      %714 = vmatpush2.msra.mxu0 0.0
      %715 = vmatprep.subr.mxu0 0.0
      %716 = vmatpush2.msra.mxu0 0.0
      %717 = vmatprep.mubr.f32.mxu0 0.0
      %718 = vmatmul.mubr.f32.gmra.mxu0 %v651
      %v719 = vpop.f32.mrf.mxu0
      %v720 = vadd.f32 0.0, %v719
      %v721 = vpop.f32.mrf.mxu0
      %722 = vdwg.mxu0
      %v723 = vadd.f32 %v643, %v720
      %v724 = vld [vmem:[#allocation5] sm:$0xff]
      %s725 = scalar_lea.vmem %s3, 128
      %v726 = vld [vmem:[%s725] sm:$0xff]
      %v727 = vld [vmem:[%s725 + $0x8] sm:$0xff]
      %v728 = vld [vmem:[%s725 + $0x10] sm:$0xff]
      %v729 = vld [vmem:[%s725 + $0x18] sm:$0xff]
      %v731 = vsel %vm353, %v724, 0
      %733 = vmatprep.subr.mxu0 0.0
      %734 = vmatpush1.msra.mxu0 0.0
      %735 = vmatprep.subr.mxu0 0.0
      %736 = vmatpush1.msra.mxu0 0.0
      %737 = vmatprep.subr.mxu0 0.0
      %738 = vmatpush1.msra.mxu0 0.0
      %739 = vmatprep.subr.mxu0 0.0
      %740 = vmatpush1.msra.mxu0 0.0
      %741 = vmatprep.subr.mxu0 0.0
      %742 = vmatpush1.msra.mxu0 0.0
      %743 = vmatprep.subr.mxu0 0.0
      %744 = vmatpush1.msra.mxu0 0.0
      %745 = vmatprep.subr.mxu0 0.0
      %746 = vmatpush1.msra.mxu0 0.0
      %747 = vmatprep.subr.mxu0 0.0
      %748 = vmatpush1.msra.mxu0 0.0
      %749 = vmatprep.subr.mxu0 0.0
      %750 = vmatpush1.msra.mxu0 0.0
      %751 = vmatprep.subr.mxu0 0.0
      %752 = vmatpush1.msra.mxu0 0.0
      %753 = vmatprep.subr.mxu0 0.0
      %754 = vmatpush1.msra.mxu0 0.0
      %755 = vmatprep.subr.mxu0 0.0
      %756 = vmatpush1.msra.mxu0 0.0
      %757 = vmatprep.subr.mxu0 0.0
      %758 = vmatpush1.msra.mxu0 %v729
      %759 = vmatprep.subr.mxu0 0.0
      %760 = vmatpush1.msra.mxu0 %v728
      %761 = vmatprep.subr.mxu0 0.0
      %762 = vmatpush1.msra.mxu0 %v727
      %763 = vmatprep.subr.mxu0 0.0
      %764 = vmatpush1.msra.mxu0 %v726
      %765 = vmatprep.subr.mxu0 0.0
      %766 = vmatpush2.msra.mxu0 0.0
      %767 = vmatprep.subr.mxu0 0.0
      %768 = vmatpush2.msra.mxu0 0.0
      %769 = vmatprep.subr.mxu0 0.0
      %770 = vmatpush2.msra.mxu0 0.0
      %771 = vmatprep.subr.mxu0 0.0
      %772 = vmatpush2.msra.mxu0 0.0
      %773 = vmatprep.subr.mxu0 0.0
      %774 = vmatpush2.msra.mxu0 0.0
      %775 = vmatprep.subr.mxu0 0.0
      %776 = vmatpush2.msra.mxu0 0.0
      %777 = vmatprep.subr.mxu0 0.0
      %778 = vmatpush2.msra.mxu0 0.0
      %779 = vmatprep.subr.mxu0 0.0
      %780 = vmatpush2.msra.mxu0 0.0
      %781 = vmatprep.subr.mxu0 0.0
      %782 = vmatpush2.msra.mxu0 0.0
      %783 = vmatprep.subr.mxu0 0.0
      %784 = vmatpush2.msra.mxu0 0.0
      %785 = vmatprep.subr.mxu0 0.0
      %786 = vmatpush2.msra.mxu0 0.0
      %787 = vmatprep.subr.mxu0 0.0
      %788 = vmatpush2.msra.mxu0 0.0
      %789 = vmatprep.subr.mxu0 0.0
      %790 = vmatpush2.msra.mxu0 0.0
      %791 = vmatprep.subr.mxu0 0.0
      %792 = vmatpush2.msra.mxu0 0.0
      %793 = vmatprep.subr.mxu0 0.0
      %794 = vmatpush2.msra.mxu0 0.0
      %795 = vmatprep.subr.mxu0 0.0
      %796 = vmatpush2.msra.mxu0 0.0
      %797 = vmatprep.mubr.f32.mxu0 0.0
      %798 = vmatmul.mubr.f32.gmra.mxu0 %v731
      %v799 = vpop.f32.mrf.mxu0
      %v800 = vadd.f32 0.0, %v799
      %v801 = vpop.f32.mrf.mxu0
      %802 = vdwg.mxu0
      %v803 = vadd.f32 %v723, %v800
      %s804 = scalar_lea.vmem %s3, 160
      %v805 = vld [vmem:[%s804] sm:$0xff]
      %v806 = vld [vmem:[%s804 + $0x8] sm:$0xff]
      %v807 = vld [vmem:[%s804 + $0x10] sm:$0xff]
      %v808 = vld [vmem:[%s804 + $0x18] sm:$0xff]
      %809 = vrot.lane.b32.xlu0 %v644, 124
      %v810 = vpop.permute.xlu0 %809
      %v811 = vsel %vm353, %v810, 0
      %813 = vmatprep.subr.mxu0 0.0
      %814 = vmatpush1.msra.mxu0 0.0
      %815 = vmatprep.subr.mxu0 0.0
      %816 = vmatpush1.msra.mxu0 0.0
      %817 = vmatprep.subr.mxu0 0.0
      %818 = vmatpush1.msra.mxu0 0.0
      %819 = vmatprep.subr.mxu0 0.0
      %820 = vmatpush1.msra.mxu0 0.0
      %821 = vmatprep.subr.mxu0 0.0
      %822 = vmatpush1.msra.mxu0 0.0
      %823 = vmatprep.subr.mxu0 0.0
      %824 = vmatpush1.msra.mxu0 0.0
      %825 = vmatprep.subr.mxu0 0.0
      %826 = vmatpush1.msra.mxu0 0.0
      %827 = vmatprep.subr.mxu0 0.0
      %828 = vmatpush1.msra.mxu0 0.0
      %829 = vmatprep.subr.mxu0 0.0
      %830 = vmatpush1.msra.mxu0 0.0
      %831 = vmatprep.subr.mxu0 0.0
      %832 = vmatpush1.msra.mxu0 0.0
      %833 = vmatprep.subr.mxu0 0.0
      %834 = vmatpush1.msra.mxu0 0.0
      %835 = vmatprep.subr.mxu0 0.0
      %836 = vmatpush1.msra.mxu0 0.0
      %837 = vmatprep.subr.mxu0 0.0
      %838 = vmatpush1.msra.mxu0 %v808
      %839 = vmatprep.subr.mxu0 0.0
      %840 = vmatpush1.msra.mxu0 %v807
      %841 = vmatprep.subr.mxu0 0.0
      %842 = vmatpush1.msra.mxu0 %v806
      %843 = vmatprep.subr.mxu0 0.0
      %844 = vmatpush1.msra.mxu0 %v805
      %845 = vmatprep.subr.mxu0 0.0
      %846 = vmatpush2.msra.mxu0 0.0
      %847 = vmatprep.subr.mxu0 0.0
      %848 = vmatpush2.msra.mxu0 0.0
      %849 = vmatprep.subr.mxu0 0.0
      %850 = vmatpush2.msra.mxu0 0.0
      %851 = vmatprep.subr.mxu0 0.0
      %852 = vmatpush2.msra.mxu0 0.0
      %853 = vmatprep.subr.mxu0 0.0
      %854 = vmatpush2.msra.mxu0 0.0
      %855 = vmatprep.subr.mxu0 0.0
      %856 = vmatpush2.msra.mxu0 0.0
      %857 = vmatprep.subr.mxu0 0.0
      %858 = vmatpush2.msra.mxu0 0.0
      %859 = vmatprep.subr.mxu0 0.0
      %860 = vmatpush2.msra.mxu0 0.0
      %861 = vmatprep.subr.mxu0 0.0
      %862 = vmatpush2.msra.mxu0 0.0
      %863 = vmatprep.subr.mxu0 0.0
      %864 = vmatpush2.msra.mxu0 0.0
      %865 = vmatprep.subr.mxu0 0.0
      %866 = vmatpush2.msra.mxu0 0.0
      %867 = vmatprep.subr.mxu0 0.0
      %868 = vmatpush2.msra.mxu0 0.0
      %869 = vmatprep.subr.mxu0 0.0
      %870 = vmatpush2.msra.mxu0 0.0
      %871 = vmatprep.subr.mxu0 0.0
      %872 = vmatpush2.msra.mxu0 0.0
      %873 = vmatprep.subr.mxu0 0.0
      %874 = vmatpush2.msra.mxu0 0.0
      %875 = vmatprep.subr.mxu0 0.0
      %876 = vmatpush2.msra.mxu0 0.0
      %877 = vmatprep.mubr.f32.mxu0 0.0
      %878 = vmatmul.mubr.f32.gmra.mxu0 %v811
      %v879 = vpop.f32.mrf.mxu0
      %v880 = vadd.f32 0.0, %v879
      %v881 = vpop.f32.mrf.mxu0
      %882 = vdwg.mxu0
      %v883 = vadd.f32 %v803, %v880
      %v884 = vld [vmem:[#allocation2 + $0x1] sm:$0xff]
      %s885 = scalar_lea.vmem %s3, 192
      %v886 = vld [vmem:[%s885] sm:$0xff]
      %v887 = vld [vmem:[%s885 + $0x8] sm:$0xff]
      %v888 = vld [vmem:[%s885 + $0x10] sm:$0xff]
      %v889 = vld [vmem:[%s885 + $0x18] sm:$0xff]
      %v891 = vsel %vm353, %v884, 0
      %893 = vmatprep.subr.mxu0 0.0
      %894 = vmatpush1.msra.mxu0 0.0
      %895 = vmatprep.subr.mxu0 0.0
      %896 = vmatpush1.msra.mxu0 0.0
      %897 = vmatprep.subr.mxu0 0.0
      %898 = vmatpush1.msra.mxu0 0.0
      %899 = vmatprep.subr.mxu0 0.0
      %900 = vmatpush1.msra.mxu0 0.0
      %901 = vmatprep.subr.mxu0 0.0
      %902 = vmatpush1.msra.mxu0 0.0
      %903 = vmatprep.subr.mxu0 0.0
      %904 = vmatpush1.msra.mxu0 0.0
      %905 = vmatprep.subr.mxu0 0.0
      %906 = vmatpush1.msra.mxu0 0.0
      %907 = vmatprep.subr.mxu0 0.0
      %908 = vmatpush1.msra.mxu0 0.0
      %909 = vmatprep.subr.mxu0 0.0
      %910 = vmatpush1.msra.mxu0 0.0
      %911 = vmatprep.subr.mxu0 0.0
      %912 = vmatpush1.msra.mxu0 0.0
      %913 = vmatprep.subr.mxu0 0.0
      %914 = vmatpush1.msra.mxu0 0.0
      %915 = vmatprep.subr.mxu0 0.0
      %916 = vmatpush1.msra.mxu0 0.0
      %917 = vmatprep.subr.mxu0 0.0
      %918 = vmatpush1.msra.mxu0 %v889
      %919 = vmatprep.subr.mxu0 0.0
      %920 = vmatpush1.msra.mxu0 %v888
      %921 = vmatprep.subr.mxu0 0.0
      %922 = vmatpush1.msra.mxu0 %v887
      %923 = vmatprep.subr.mxu0 0.0
      %924 = vmatpush1.msra.mxu0 %v886
      %925 = vmatprep.subr.mxu0 0.0
      %926 = vmatpush2.msra.mxu0 0.0
      %927 = vmatprep.subr.mxu0 0.0
      %928 = vmatpush2.msra.mxu0 0.0
      %929 = vmatprep.subr.mxu0 0.0
      %930 = vmatpush2.msra.mxu0 0.0
      %931 = vmatprep.subr.mxu0 0.0
      %932 = vmatpush2.msra.mxu0 0.0
      %933 = vmatprep.subr.mxu0 0.0
      %934 = vmatpush2.msra.mxu0 0.0
      %935 = vmatprep.subr.mxu0 0.0
      %936 = vmatpush2.msra.mxu0 0.0
      %937 = vmatprep.subr.mxu0 0.0
      %938 = vmatpush2.msra.mxu0 0.0
      %939 = vmatprep.subr.mxu0 0.0
      %940 = vmatpush2.msra.mxu0 0.0
      %941 = vmatprep.subr.mxu0 0.0
      %942 = vmatpush2.msra.mxu0 0.0
      %943 = vmatprep.subr.mxu0 0.0
      %944 = vmatpush2.msra.mxu0 0.0
      %945 = vmatprep.subr.mxu0 0.0
      %946 = vmatpush2.msra.mxu0 0.0
      %947 = vmatprep.subr.mxu0 0.0
      %948 = vmatpush2.msra.mxu0 0.0
      %949 = vmatprep.subr.mxu0 0.0
      %950 = vmatpush2.msra.mxu0 0.0
      %951 = vmatprep.subr.mxu0 0.0
      %952 = vmatpush2.msra.mxu0 0.0
      %953 = vmatprep.subr.mxu0 0.0
      %954 = vmatpush2.msra.mxu0 0.0
      %955 = vmatprep.subr.mxu0 0.0
      %956 = vmatpush2.msra.mxu0 0.0
      %957 = vmatprep.mubr.f32.mxu0 0.0
      %958 = vmatmul.mubr.f32.gmra.mxu0 %v891
      %v959 = vpop.f32.mrf.mxu0
      %v960 = vadd.f32 0.0, %v959
      %v961 = vpop.f32.mrf.mxu0
      %962 = vdwg.mxu0
      %v963 = vadd.f32 %v883, %v960
      %v964 = vld [vmem:[#allocation3 + $0x1] sm:$0xff]
      %s965 = scalar_lea.vmem %s3, 224
      %v966 = vld [vmem:[%s965] sm:$0xff]
      %v967 = vld [vmem:[%s965 + $0x8] sm:$0xff]
      %v968 = vld [vmem:[%s965 + $0x10] sm:$0xff]
      %v969 = vld [vmem:[%s965 + $0x18] sm:$0xff]
      %v971 = vsel %vm353, %v964, 0
      %973 = vmatprep.subr.mxu0 0.0
      %974 = vmatpush1.msra.mxu0 0.0
      %975 = vmatprep.subr.mxu0 0.0
      %976 = vmatpush1.msra.mxu0 0.0
      %977 = vmatprep.subr.mxu0 0.0
      %978 = vmatpush1.msra.mxu0 0.0
      %979 = vmatprep.subr.mxu0 0.0
      %980 = vmatpush1.msra.mxu0 0.0
      %981 = vmatprep.subr.mxu0 0.0
      %982 = vmatpush1.msra.mxu0 0.0
      %983 = vmatprep.subr.mxu0 0.0
      %984 = vmatpush1.msra.mxu0 0.0
      %985 = vmatprep.subr.mxu0 0.0
      %986 = vmatpush1.msra.mxu0 0.0
      %987 = vmatprep.subr.mxu0 0.0
      %988 = vmatpush1.msra.mxu0 0.0
      %989 = vmatprep.subr.mxu0 0.0
      %990 = vmatpush1.msra.mxu0 0.0
      %991 = vmatprep.subr.mxu0 0.0
      %992 = vmatpush1.msra.mxu0 0.0
      %993 = vmatprep.subr.mxu0 0.0
      %994 = vmatpush1.msra.mxu0 0.0
      %995 = vmatprep.subr.mxu0 0.0
      %996 = vmatpush1.msra.mxu0 0.0
      %997 = vmatprep.subr.mxu0 0.0
      %998 = vmatpush1.msra.mxu0 %v969
      %999 = vmatprep.subr.mxu0 0.0
      %1000 = vmatpush1.msra.mxu0 %v968
      %1001 = vmatprep.subr.mxu0 0.0
      %1002 = vmatpush1.msra.mxu0 %v967
      %1003 = vmatprep.subr.mxu0 0.0
      %1004 = vmatpush1.msra.mxu0 %v966
      %1005 = vmatprep.subr.mxu0 0.0
      %1006 = vmatpush2.msra.mxu0 0.0
      %1007 = vmatprep.subr.mxu0 0.0
      %1008 = vmatpush2.msra.mxu0 0.0
      %1009 = vmatprep.subr.mxu0 0.0
      %1010 = vmatpush2.msra.mxu0 0.0
      %1011 = vmatprep.subr.mxu0 0.0
      %1012 = vmatpush2.msra.mxu0 0.0
      %1013 = vmatprep.subr.mxu0 0.0
      %1014 = vmatpush2.msra.mxu0 0.0
      %1015 = vmatprep.subr.mxu0 0.0
      %1016 = vmatpush2.msra.mxu0 0.0
      %1017 = vmatprep.subr.mxu0 0.0
      %1018 = vmatpush2.msra.mxu0 0.0
      %1019 = vmatprep.subr.mxu0 0.0
      %1020 = vmatpush2.msra.mxu0 0.0
      %1021 = vmatprep.subr.mxu0 0.0
      %1022 = vmatpush2.msra.mxu0 0.0
      %1023 = vmatprep.subr.mxu0 0.0
      %1024 = vmatpush2.msra.mxu0 0.0
      %1025 = vmatprep.subr.mxu0 0.0
      %1026 = vmatpush2.msra.mxu0 0.0
      %1027 = vmatprep.subr.mxu0 0.0
      %1028 = vmatpush2.msra.mxu0 0.0
      %1029 = vmatprep.subr.mxu0 0.0
      %1030 = vmatpush2.msra.mxu0 0.0
      %1031 = vmatprep.subr.mxu0 0.0
      %1032 = vmatpush2.msra.mxu0 0.0
      %1033 = vmatprep.subr.mxu0 0.0
      %1034 = vmatpush2.msra.mxu0 0.0
      %1035 = vmatprep.subr.mxu0 0.0
      %1036 = vmatpush2.msra.mxu0 0.0
      %1037 = vmatprep.mubr.f32.mxu0 0.0
      %1038 = vmatmul.mubr.f32.gmra.mxu0 %v971
      %v1039 = vpop.f32.mrf.mxu0
      %v1040 = vadd.f32 0.0, %v1039
      %v1041 = vpop.f32.mrf.mxu0
      %1042 = vdwg.mxu0
      %v1043 = vadd.f32 %v963, %v1040
      %s1044 = scalar_lea.vmem %s3, 256
      %v1045 = vld [vmem:[%s1044] sm:$0xff]
      %v1046 = vld [vmem:[%s1044 + $0x8] sm:$0xff]
      %v1047 = vld [vmem:[%s1044 + $0x10] sm:$0xff]
      %v1048 = vld [vmem:[%s1044 + $0x18] sm:$0xff]
      %1049 = vrot.lane.b32.xlu0 %v884, 124
      %v1050 = vpop.permute.xlu0 %1049
      %v1051 = vsel %vm353, %v1050, 0
      %1053 = vmatprep.subr.mxu0 0.0
      %1054 = vmatpush1.msra.mxu0 0.0
      %1055 = vmatprep.subr.mxu0 0.0
      %1056 = vmatpush1.msra.mxu0 0.0
      %1057 = vmatprep.subr.mxu0 0.0
      %1058 = vmatpush1.msra.mxu0 0.0
      %1059 = vmatprep.subr.mxu0 0.0
      %1060 = vmatpush1.msra.mxu0 0.0
      %1061 = vmatprep.subr.mxu0 0.0
      %1062 = vmatpush1.msra.mxu0 0.0
      %1063 = vmatprep.subr.mxu0 0.0
      %1064 = vmatpush1.msra.mxu0 0.0
      %1065 = vmatprep.subr.mxu0 0.0
      %1066 = vmatpush1.msra.mxu0 0.0
      %1067 = vmatprep.subr.mxu0 0.0
      %1068 = vmatpush1.msra.mxu0 0.0
      %1069 = vmatprep.subr.mxu0 0.0
      %1070 = vmatpush1.msra.mxu0 0.0
      %1071 = vmatprep.subr.mxu0 0.0
      %1072 = vmatpush1.msra.mxu0 0.0
      %1073 = vmatprep.subr.mxu0 0.0
      %1074 = vmatpush1.msra.mxu0 0.0
      %1075 = vmatprep.subr.mxu0 0.0
      %1076 = vmatpush1.msra.mxu0 0.0
      %1077 = vmatprep.subr.mxu0 0.0
      %1078 = vmatpush1.msra.mxu0 %v1048
      %1079 = vmatprep.subr.mxu0 0.0
      %1080 = vmatpush1.msra.mxu0 %v1047
      %1081 = vmatprep.subr.mxu0 0.0
      %1082 = vmatpush1.msra.mxu0 %v1046
      %1083 = vmatprep.subr.mxu0 0.0
      %1084 = vmatpush1.msra.mxu0 %v1045
      %1085 = vmatprep.subr.mxu0 0.0
      %1086 = vmatpush2.msra.mxu0 0.0
      %1087 = vmatprep.subr.mxu0 0.0
      %1088 = vmatpush2.msra.mxu0 0.0
      %1089 = vmatprep.subr.mxu0 0.0
      %1090 = vmatpush2.msra.mxu0 0.0
      %1091 = vmatprep.subr.mxu0 0.0
      %1092 = vmatpush2.msra.mxu0 0.0
      %1093 = vmatprep.subr.mxu0 0.0
      %1094 = vmatpush2.msra.mxu0 0.0
      %1095 = vmatprep.subr.mxu0 0.0
      %1096 = vmatpush2.msra.mxu0 0.0
      %1097 = vmatprep.subr.mxu0 0.0
      %1098 = vmatpush2.msra.mxu0 0.0
      %1099 = vmatprep.subr.mxu0 0.0
      %1100 = vmatpush2.msra.mxu0 0.0
      %1101 = vmatprep.subr.mxu0 0.0
      %1102 = vmatpush2.msra.mxu0 0.0
      %1103 = vmatprep.subr.mxu0 0.0
      %1104 = vmatpush2.msra.mxu0 0.0
      %1105 = vmatprep.subr.mxu0 0.0
      %1106 = vmatpush2.msra.mxu0 0.0
      %1107 = vmatprep.subr.mxu0 0.0
      %1108 = vmatpush2.msra.mxu0 0.0
      %1109 = vmatprep.subr.mxu0 0.0
      %1110 = vmatpush2.msra.mxu0 0.0
      %1111 = vmatprep.subr.mxu0 0.0
      %1112 = vmatpush2.msra.mxu0 0.0
      %1113 = vmatprep.subr.mxu0 0.0
      %1114 = vmatpush2.msra.mxu0 0.0
      %1115 = vmatprep.subr.mxu0 0.0
      %1116 = vmatpush2.msra.mxu0 0.0
      %1117 = vmatprep.mubr.f32.mxu0 0.0
      %1118 = vmatmul.mubr.f32.gmra.mxu0 %v1051
      %v1119 = vpop.f32.mrf.mxu0
      %v1120 = vadd.f32 0.0, %v1119
      %v1121 = vpop.f32.mrf.mxu0
      %1122 = vdwg.mxu0
      %v1123 = vadd.f32 %v1043, %v1120
      %v1124 = vld [vmem:[%s4] sm:$0x1]
      %v1126 = vlaneseq
      %v1127 = vshrl.u32 %v1126, 7
      %v1128 = vsub.s32 0, %v1127
      %v1129 = vrot.slane %v1124, %v1128
      %v1131 = vmul.f32 %v1123, %v1129
      %v1132 = vld [vmem:[%s5] sm:$0x1]
      %v1134 = vlaneseq
      %v1135 = vshrl.u32 %v1134, 7
      %v1136 = vsub.s32 0, %v1135
      %v1137 = vrot.slane %v1132, %v1136
      %v1139 = vadd.f32 %v1131, %v1137
      %v1140 = vmax.f32 %v1139, 0.0
      %vm1141 = vcmask 654336
      %1142 = vst.msk [vmem:[#allocation6] sm:$0xff] %vm1141, 0.0
      %vm1143 = vcmask 648192
      %1144 = vst.msk [vmem:[#allocation6 + $0x8] sm:$0x3] %vm1143, 0.0
      %1146 = vrot.lane.b32.xlu0 %v1140, 8
      %v1147 = vpop.permute.xlu0 %1146
      %vm1149 = vcmask 588864
      %1150 = vst.msk [vmem:[#allocation6 + $0x1] sm:$0xff] %vm1149, %v1147
      %v1151 = vld [vmem:[#allocation6] sm:$0xff]
      %v1152 = vld [vmem:[%s6] sm:$0xff]
      %v1153 = vld [vmem:[%s6 + $0x8] sm:$0xff]
      %v1154 = vld [vmem:[%s6 + $0x10] sm:$0xff]
      %v1155 = vld [vmem:[%s6 + $0x18] sm:$0xff]
      %v1156 = vld [vmem:[%s6 + $0x20] sm:$0xff]
      %v1157 = vld [vmem:[%s6 + $0x28] sm:$0xff]
      %v1158 = vld [vmem:[%s6 + $0x30] sm:$0xff]
      %v1159 = vld [vmem:[%s6 + $0x38] sm:$0xff]
      %vm1160 = vcmask 523264
      %v1162 = vsel %vm1160, %v1151, 0
      %1164 = vmatprep.subr.mxu0 0.0
      %1165 = vmatpush1.msra.mxu0 0.0
      %1166 = vmatprep.subr.mxu0 0.0
      %1167 = vmatpush1.msra.mxu0 0.0
      %1168 = vmatprep.subr.mxu0 0.0
      %1169 = vmatpush1.msra.mxu0 0.0
      %1170 = vmatprep.subr.mxu0 0.0
      %1171 = vmatpush1.msra.mxu0 0.0
      %1172 = vmatprep.subr.mxu0 0.0
      %1173 = vmatpush1.msra.mxu0 0.0
      %1174 = vmatprep.subr.mxu0 0.0
      %1175 = vmatpush1.msra.mxu0 0.0
      %1176 = vmatprep.subr.mxu0 0.0
      %1177 = vmatpush1.msra.mxu0 0.0
      %1178 = vmatprep.subr.mxu0 0.0
      %1179 = vmatpush1.msra.mxu0 0.0
      %1180 = vmatprep.subr.mxu0 0.0
      %1181 = vmatpush1.msra.mxu0 %v1159
      %1182 = vmatprep.subr.mxu0 0.0
      %1183 = vmatpush1.msra.mxu0 %v1158
      %1184 = vmatprep.subr.mxu0 0.0
      %1185 = vmatpush1.msra.mxu0 %v1157
      %1186 = vmatprep.subr.mxu0 0.0
      %1187 = vmatpush1.msra.mxu0 %v1156
      %1188 = vmatprep.subr.mxu0 0.0
      %1189 = vmatpush1.msra.mxu0 %v1155
      %1190 = vmatprep.subr.mxu0 0.0
      %1191 = vmatpush1.msra.mxu0 %v1154
      %1192 = vmatprep.subr.mxu0 0.0
      %1193 = vmatpush1.msra.mxu0 %v1153
      %1194 = vmatprep.subr.mxu0 0.0
      %1195 = vmatpush1.msra.mxu0 %v1152
      %1196 = vmatprep.subr.mxu0 0.0
      %1197 = vmatpush2.msra.mxu0 0.0
      %1198 = vmatprep.subr.mxu0 0.0
      %1199 = vmatpush2.msra.mxu0 0.0
      %1200 = vmatprep.subr.mxu0 0.0
      %1201 = vmatpush2.msra.mxu0 0.0
      %1202 = vmatprep.subr.mxu0 0.0
      %1203 = vmatpush2.msra.mxu0 0.0
      %1204 = vmatprep.subr.mxu0 0.0
      %1205 = vmatpush2.msra.mxu0 0.0
      %1206 = vmatprep.subr.mxu0 0.0
      %1207 = vmatpush2.msra.mxu0 0.0
      %1208 = vmatprep.subr.mxu0 0.0
      %1209 = vmatpush2.msra.mxu0 0.0
      %1210 = vmatprep.subr.mxu0 0.0
      %1211 = vmatpush2.msra.mxu0 0.0
      %1212 = vmatprep.subr.mxu0 0.0
      %1213 = vmatpush2.msra.mxu0 0.0
      %1214 = vmatprep.subr.mxu0 0.0
      %1215 = vmatpush2.msra.mxu0 0.0
      %1216 = vmatprep.subr.mxu0 0.0
      %1217 = vmatpush2.msra.mxu0 0.0
      %1218 = vmatprep.subr.mxu0 0.0
      %1219 = vmatpush2.msra.mxu0 0.0
      %1220 = vmatprep.subr.mxu0 0.0
      %1221 = vmatpush2.msra.mxu0 0.0
      %1222 = vmatprep.subr.mxu0 0.0
      %1223 = vmatpush2.msra.mxu0 0.0
      %1224 = vmatprep.subr.mxu0 0.0
      %1225 = vmatpush2.msra.mxu0 0.0
      %1226 = vmatprep.subr.mxu0 0.0
      %1227 = vmatpush2.msra.mxu0 0.0
      %1228 = vmatprep.mubr.f32.mxu0 0.0
      %1229 = vmatmul.mubr.f32.gmra.mxu0 %v1162
      %v1230 = vpop.f32.mrf.mxu0
      %v1231 = vadd.f32 0.0, %v1230
      %v1232 = vpop.f32.mrf.mxu0
      %1233 = vdwg.mxu0
      %v1235 = vsel %vm353, %v401, 0
      %1237 = vmatprep.subr.mxu0 0.0
      %1238 = vmatpush1.msra.mxu0 0.0
      %1239 = vmatprep.subr.mxu0 0.0
      %1240 = vmatpush1.msra.mxu0 0.0
      %1241 = vmatprep.subr.mxu0 0.0
      %1242 = vmatpush1.msra.mxu0 0.0
      %1243 = vmatprep.subr.mxu0 0.0
      %1244 = vmatpush1.msra.mxu0 0.0
      %1245 = vmatprep.subr.mxu0 0.0
      %1246 = vmatpush1.msra.mxu0 0.0
      %1247 = vmatprep.subr.mxu0 0.0
      %1248 = vmatpush1.msra.mxu0 0.0
      %1249 = vmatprep.subr.mxu0 0.0
      %1250 = vmatpush1.msra.mxu0 0.0
      %1251 = vmatprep.subr.mxu0 0.0
      %1252 = vmatpush1.msra.mxu0 0.0
      %1253 = vmatprep.subr.mxu0 0.0
      %1254 = vmatpush1.msra.mxu0 0.0
      %1255 = vmatprep.subr.mxu0 0.0
      %1256 = vmatpush1.msra.mxu0 0.0
      %1257 = vmatprep.subr.mxu0 0.0
      %1258 = vmatpush1.msra.mxu0 0.0
      %1259 = vmatprep.subr.mxu0 0.0
      %1260 = vmatpush1.msra.mxu0 0.0
      %1261 = vmatprep.subr.mxu0 0.0
      %1262 = vmatpush1.msra.mxu0 %v406
      %1263 = vmatprep.subr.mxu0 0.0
      %1264 = vmatpush1.msra.mxu0 %v405
      %1265 = vmatprep.subr.mxu0 0.0
      %1266 = vmatpush1.msra.mxu0 %v404
      %1267 = vmatprep.subr.mxu0 0.0
      %1268 = vmatpush1.msra.mxu0 %v403
      %1269 = vmatprep.subr.mxu0 0.0
      %1270 = vmatpush2.msra.mxu0 0.0
      %1271 = vmatprep.subr.mxu0 0.0
      %1272 = vmatpush2.msra.mxu0 0.0
      %1273 = vmatprep.subr.mxu0 0.0
      %1274 = vmatpush2.msra.mxu0 0.0
      %1275 = vmatprep.subr.mxu0 0.0
      %1276 = vmatpush2.msra.mxu0 0.0
      %1277 = vmatprep.subr.mxu0 0.0
      %1278 = vmatpush2.msra.mxu0 0.0
      %1279 = vmatprep.subr.mxu0 0.0
      %1280 = vmatpush2.msra.mxu0 0.0
      %1281 = vmatprep.subr.mxu0 0.0
      %1282 = vmatpush2.msra.mxu0 0.0
      %1283 = vmatprep.subr.mxu0 0.0
      %1284 = vmatpush2.msra.mxu0 0.0
      %1285 = vmatprep.subr.mxu0 0.0
      %1286 = vmatpush2.msra.mxu0 0.0
      %1287 = vmatprep.subr.mxu0 0.0
      %1288 = vmatpush2.msra.mxu0 0.0
      %1289 = vmatprep.subr.mxu0 0.0
      %1290 = vmatpush2.msra.mxu0 0.0
      %1291 = vmatprep.subr.mxu0 0.0
      %1292 = vmatpush2.msra.mxu0 0.0
      %1293 = vmatprep.subr.mxu0 0.0
      %1294 = vmatpush2.msra.mxu0 0.0
      %1295 = vmatprep.subr.mxu0 0.0
      %1296 = vmatpush2.msra.mxu0 0.0
      %1297 = vmatprep.subr.mxu0 0.0
      %1298 = vmatpush2.msra.mxu0 0.0
      %1299 = vmatprep.subr.mxu0 0.0
      %1300 = vmatpush2.msra.mxu0 0.0
      %1301 = vmatprep.mubr.f32.mxu0 0.0
      %1302 = vmatmul.mubr.f32.gmra.mxu0 %v1235
      %v1303 = vpop.f32.mrf.mxu0
      %v1304 = vadd.f32 %v1231, %v1303
      %v1305 = vpop.f32.mrf.mxu0
      %1306 = vdwg.mxu0
      %s1307 = scalar_lea.vmem %s6, 64
      %v1308 = vld [vmem:[%s1307] sm:$0xff]
      %v1309 = vld [vmem:[%s1307 + $0x8] sm:$0xff]
      %v1310 = vld [vmem:[%s1307 + $0x10] sm:$0xff]
      %v1311 = vld [vmem:[%s1307 + $0x18] sm:$0xff]
      %v1312 = vld [vmem:[%s1307 + $0x20] sm:$0xff]
      %v1313 = vld [vmem:[%s1307 + $0x28] sm:$0xff]
      %v1314 = vld [vmem:[%s1307 + $0x30] sm:$0xff]
      %v1315 = vld [vmem:[%s1307 + $0x38] sm:$0xff]
      %1316 = vrot.lane.b32.xlu0 %v1151, 120
      %v1317 = vpop.permute.xlu0 %1316
      %v1318 = vsel %vm1160, %v1317, 0
      %1320 = vmatprep.subr.mxu0 0.0
      %1321 = vmatpush1.msra.mxu0 0.0
      %1322 = vmatprep.subr.mxu0 0.0
      %1323 = vmatpush1.msra.mxu0 0.0
      %1324 = vmatprep.subr.mxu0 0.0
      %1325 = vmatpush1.msra.mxu0 0.0
      %1326 = vmatprep.subr.mxu0 0.0
      %1327 = vmatpush1.msra.mxu0 0.0
      %1328 = vmatprep.subr.mxu0 0.0
      %1329 = vmatpush1.msra.mxu0 0.0
      %1330 = vmatprep.subr.mxu0 0.0
      %1331 = vmatpush1.msra.mxu0 0.0
      %1332 = vmatprep.subr.mxu0 0.0
      %1333 = vmatpush1.msra.mxu0 0.0
      %1334 = vmatprep.subr.mxu0 0.0
      %1335 = vmatpush1.msra.mxu0 0.0
      %1336 = vmatprep.subr.mxu0 0.0
      %1337 = vmatpush1.msra.mxu0 %v1315
      %1338 = vmatprep.subr.mxu0 0.0
      %1339 = vmatpush1.msra.mxu0 %v1314
      %1340 = vmatprep.subr.mxu0 0.0
      %1341 = vmatpush1.msra.mxu0 %v1313
      %1342 = vmatprep.subr.mxu0 0.0
      %1343 = vmatpush1.msra.mxu0 %v1312
      %1344 = vmatprep.subr.mxu0 0.0
      %1345 = vmatpush1.msra.mxu0 %v1311
      %1346 = vmatprep.subr.mxu0 0.0
      %1347 = vmatpush1.msra.mxu0 %v1310
      %1348 = vmatprep.subr.mxu0 0.0
      %1349 = vmatpush1.msra.mxu0 %v1309
      %1350 = vmatprep.subr.mxu0 0.0
      %1351 = vmatpush1.msra.mxu0 %v1308
      %1352 = vmatprep.subr.mxu0 0.0
      %1353 = vmatpush2.msra.mxu0 0.0
      %1354 = vmatprep.subr.mxu0 0.0
      %1355 = vmatpush2.msra.mxu0 0.0
      %1356 = vmatprep.subr.mxu0 0.0
      %1357 = vmatpush2.msra.mxu0 0.0
      %1358 = vmatprep.subr.mxu0 0.0
      %1359 = vmatpush2.msra.mxu0 0.0
      %1360 = vmatprep.subr.mxu0 0.0
      %1361 = vmatpush2.msra.mxu0 0.0
      %1362 = vmatprep.subr.mxu0 0.0
      %1363 = vmatpush2.msra.mxu0 0.0
      %1364 = vmatprep.subr.mxu0 0.0
      %1365 = vmatpush2.msra.mxu0 0.0
      %1366 = vmatprep.subr.mxu0 0.0
      %1367 = vmatpush2.msra.mxu0 0.0
      %1368 = vmatprep.subr.mxu0 0.0
      %1369 = vmatpush2.msra.mxu0 0.0
      %1370 = vmatprep.subr.mxu0 0.0
      %1371 = vmatpush2.msra.mxu0 0.0
      %1372 = vmatprep.subr.mxu0 0.0
      %1373 = vmatpush2.msra.mxu0 0.0
      %1374 = vmatprep.subr.mxu0 0.0
      %1375 = vmatpush2.msra.mxu0 0.0
      %1376 = vmatprep.subr.mxu0 0.0
      %1377 = vmatpush2.msra.mxu0 0.0
      %1378 = vmatprep.subr.mxu0 0.0
      %1379 = vmatpush2.msra.mxu0 0.0
      %1380 = vmatprep.subr.mxu0 0.0
      %1381 = vmatpush2.msra.mxu0 0.0
      %1382 = vmatprep.subr.mxu0 0.0
      %1383 = vmatpush2.msra.mxu0 0.0
      %1384 = vmatprep.mubr.f32.mxu0 0.0
      %1385 = vmatmul.mubr.f32.gmra.mxu0 %v1318
      %v1386 = vpop.f32.mrf.mxu0
      %v1387 = vadd.f32 0.0, %v1386
      %v1388 = vpop.f32.mrf.mxu0
      %1389 = vdwg.mxu0
      %v1390 = vadd.f32 %v1304, %v1387
      %s1391 = scalar_lea.vmem %s6, 128
      %v1392 = vld [vmem:[%s1391] sm:$0xff]
      %v1393 = vld [vmem:[%s1391 + $0x8] sm:$0xff]
      %v1394 = vld [vmem:[%s1391 + $0x10] sm:$0xff]
      %v1395 = vld [vmem:[%s1391 + $0x18] sm:$0xff]
      %v1396 = vld [vmem:[%s1391 + $0x20] sm:$0xff]
      %v1397 = vld [vmem:[%s1391 + $0x28] sm:$0xff]
      %v1398 = vld [vmem:[%s1391 + $0x30] sm:$0xff]
      %v1399 = vld [vmem:[%s1391 + $0x38] sm:$0xff]
      %1400 = vrot.lane.b32.xlu0 %v1151, 112
      %v1401 = vpop.permute.xlu0 %1400
      %v1402 = vsel %vm1160, %v1401, 0
      %1404 = vmatprep.subr.mxu0 0.0
      %1405 = vmatpush1.msra.mxu0 0.0
      %1406 = vmatprep.subr.mxu0 0.0
      %1407 = vmatpush1.msra.mxu0 0.0
      %1408 = vmatprep.subr.mxu0 0.0
      %1409 = vmatpush1.msra.mxu0 0.0
      %1410 = vmatprep.subr.mxu0 0.0
      %1411 = vmatpush1.msra.mxu0 0.0
      %1412 = vmatprep.subr.mxu0 0.0
      %1413 = vmatpush1.msra.mxu0 0.0
      %1414 = vmatprep.subr.mxu0 0.0
      %1415 = vmatpush1.msra.mxu0 0.0
      %1416 = vmatprep.subr.mxu0 0.0
      %1417 = vmatpush1.msra.mxu0 0.0
      %1418 = vmatprep.subr.mxu0 0.0
      %1419 = vmatpush1.msra.mxu0 0.0
      %1420 = vmatprep.subr.mxu0 0.0
      %1421 = vmatpush1.msra.mxu0 %v1399
      %1422 = vmatprep.subr.mxu0 0.0
      %1423 = vmatpush1.msra.mxu0 %v1398
      %1424 = vmatprep.subr.mxu0 0.0
      %1425 = vmatpush1.msra.mxu0 %v1397
      %1426 = vmatprep.subr.mxu0 0.0
      %1427 = vmatpush1.msra.mxu0 %v1396
      %1428 = vmatprep.subr.mxu0 0.0
      %1429 = vmatpush1.msra.mxu0 %v1395
      %1430 = vmatprep.subr.mxu0 0.0
      %1431 = vmatpush1.msra.mxu0 %v1394
      %1432 = vmatprep.subr.mxu0 0.0
      %1433 = vmatpush1.msra.mxu0 %v1393
      %1434 = vmatprep.subr.mxu0 0.0
      %1435 = vmatpush1.msra.mxu0 %v1392
      %1436 = vmatprep.subr.mxu0 0.0
      %1437 = vmatpush2.msra.mxu0 0.0
      %1438 = vmatprep.subr.mxu0 0.0
      %1439 = vmatpush2.msra.mxu0 0.0
      %1440 = vmatprep.subr.mxu0 0.0
      %1441 = vmatpush2.msra.mxu0 0.0
      %1442 = vmatprep.subr.mxu0 0.0
      %1443 = vmatpush2.msra.mxu0 0.0
      %1444 = vmatprep.subr.mxu0 0.0
      %1445 = vmatpush2.msra.mxu0 0.0
      %1446 = vmatprep.subr.mxu0 0.0
      %1447 = vmatpush2.msra.mxu0 0.0
      %1448 = vmatprep.subr.mxu0 0.0
      %1449 = vmatpush2.msra.mxu0 0.0
      %1450 = vmatprep.subr.mxu0 0.0
      %1451 = vmatpush2.msra.mxu0 0.0
      %1452 = vmatprep.subr.mxu0 0.0
      %1453 = vmatpush2.msra.mxu0 0.0
      %1454 = vmatprep.subr.mxu0 0.0
      %1455 = vmatpush2.msra.mxu0 0.0
      %1456 = vmatprep.subr.mxu0 0.0
      %1457 = vmatpush2.msra.mxu0 0.0
      %1458 = vmatprep.subr.mxu0 0.0
      %1459 = vmatpush2.msra.mxu0 0.0
      %1460 = vmatprep.subr.mxu0 0.0
      %1461 = vmatpush2.msra.mxu0 0.0
      %1462 = vmatprep.subr.mxu0 0.0
      %1463 = vmatpush2.msra.mxu0 0.0
      %1464 = vmatprep.subr.mxu0 0.0
      %1465 = vmatpush2.msra.mxu0 0.0
      %1466 = vmatprep.subr.mxu0 0.0
      %1467 = vmatpush2.msra.mxu0 0.0
      %1468 = vmatprep.mubr.f32.mxu0 0.0
      %1469 = vmatmul.mubr.f32.gmra.mxu0 %v1402
      %v1470 = vpop.f32.mrf.mxu0
      %v1471 = vadd.f32 0.0, %v1470
      %v1472 = vpop.f32.mrf.mxu0
      %1473 = vdwg.mxu0
      %v1474 = vadd.f32 %v1390, %v1471
      %v1475 = vld [vmem:[#allocation6 + $0x1] sm:$0xff]
      %s1476 = scalar_lea.vmem %s6, 192
      %v1477 = vld [vmem:[%s1476] sm:$0xff]
      %v1478 = vld [vmem:[%s1476 + $0x8] sm:$0xff]
      %v1479 = vld [vmem:[%s1476 + $0x10] sm:$0xff]
      %v1480 = vld [vmem:[%s1476 + $0x18] sm:$0xff]
      %v1481 = vld [vmem:[%s1476 + $0x20] sm:$0xff]
      %v1482 = vld [vmem:[%s1476 + $0x28] sm:$0xff]
      %v1483 = vld [vmem:[%s1476 + $0x30] sm:$0xff]
      %v1484 = vld [vmem:[%s1476 + $0x38] sm:$0xff]
      %v1486 = vsel %vm1160, %v1475, 0
      %1488 = vmatprep.subr.mxu0 0.0
      %1489 = vmatpush1.msra.mxu0 0.0
      %1490 = vmatprep.subr.mxu0 0.0
      %1491 = vmatpush1.msra.mxu0 0.0
      %1492 = vmatprep.subr.mxu0 0.0
      %1493 = vmatpush1.msra.mxu0 0.0
      %1494 = vmatprep.subr.mxu0 0.0
      %1495 = vmatpush1.msra.mxu0 0.0
      %1496 = vmatprep.subr.mxu0 0.0
      %1497 = vmatpush1.msra.mxu0 0.0
      %1498 = vmatprep.subr.mxu0 0.0
      %1499 = vmatpush1.msra.mxu0 0.0
      %1500 = vmatprep.subr.mxu0 0.0
      %1501 = vmatpush1.msra.mxu0 0.0
      %1502 = vmatprep.subr.mxu0 0.0
      %1503 = vmatpush1.msra.mxu0 0.0
      %1504 = vmatprep.subr.mxu0 0.0
      %1505 = vmatpush1.msra.mxu0 %v1484
      %1506 = vmatprep.subr.mxu0 0.0
      %1507 = vmatpush1.msra.mxu0 %v1483
      %1508 = vmatprep.subr.mxu0 0.0
      %1509 = vmatpush1.msra.mxu0 %v1482
      %1510 = vmatprep.subr.mxu0 0.0
      %1511 = vmatpush1.msra.mxu0 %v1481
      %1512 = vmatprep.subr.mxu0 0.0
      %1513 = vmatpush1.msra.mxu0 %v1480
      %1514 = vmatprep.subr.mxu0 0.0
      %1515 = vmatpush1.msra.mxu0 %v1479
      %1516 = vmatprep.subr.mxu0 0.0
      %1517 = vmatpush1.msra.mxu0 %v1478
      %1518 = vmatprep.subr.mxu0 0.0
      %1519 = vmatpush1.msra.mxu0 %v1477
      %1520 = vmatprep.subr.mxu0 0.0
      %1521 = vmatpush2.msra.mxu0 0.0
      %1522 = vmatprep.subr.mxu0 0.0
      %1523 = vmatpush2.msra.mxu0 0.0
      %1524 = vmatprep.subr.mxu0 0.0
      %1525 = vmatpush2.msra.mxu0 0.0
      %1526 = vmatprep.subr.mxu0 0.0
      %1527 = vmatpush2.msra.mxu0 0.0
      %1528 = vmatprep.subr.mxu0 0.0
      %1529 = vmatpush2.msra.mxu0 0.0
      %1530 = vmatprep.subr.mxu0 0.0
      %1531 = vmatpush2.msra.mxu0 0.0
      %1532 = vmatprep.subr.mxu0 0.0
      %1533 = vmatpush2.msra.mxu0 0.0
      %1534 = vmatprep.subr.mxu0 0.0
      %1535 = vmatpush2.msra.mxu0 0.0
      %1536 = vmatprep.subr.mxu0 0.0
      %1537 = vmatpush2.msra.mxu0 0.0
      %1538 = vmatprep.subr.mxu0 0.0
      %1539 = vmatpush2.msra.mxu0 0.0
      %1540 = vmatprep.subr.mxu0 0.0
      %1541 = vmatpush2.msra.mxu0 0.0
      %1542 = vmatprep.subr.mxu0 0.0
      %1543 = vmatpush2.msra.mxu0 0.0
      %1544 = vmatprep.subr.mxu0 0.0
      %1545 = vmatpush2.msra.mxu0 0.0
      %1546 = vmatprep.subr.mxu0 0.0
      %1547 = vmatpush2.msra.mxu0 0.0
      %1548 = vmatprep.subr.mxu0 0.0
      %1549 = vmatpush2.msra.mxu0 0.0
      %1550 = vmatprep.subr.mxu0 0.0
      %1551 = vmatpush2.msra.mxu0 0.0
      %1552 = vmatprep.mubr.f32.mxu0 0.0
      %1553 = vmatmul.mubr.f32.gmra.mxu0 %v1486
      %v1554 = vpop.f32.mrf.mxu0
      %v1555 = vadd.f32 0.0, %v1554
      %v1556 = vpop.f32.mrf.mxu0
      %1557 = vdwg.mxu0
      %v1558 = vadd.f32 %v1474, %v1555
      %s1559 = scalar_lea.vmem %s6, 256
      %v1560 = vld [vmem:[%s1559] sm:$0xff]
      %v1561 = vld [vmem:[%s1559 + $0x8] sm:$0xff]
      %v1562 = vld [vmem:[%s1559 + $0x10] sm:$0xff]
      %v1563 = vld [vmem:[%s1559 + $0x18] sm:$0xff]
      %v1564 = vld [vmem:[%s1559 + $0x20] sm:$0xff]
      %v1565 = vld [vmem:[%s1559 + $0x28] sm:$0xff]
      %v1566 = vld [vmem:[%s1559 + $0x30] sm:$0xff]
      %v1567 = vld [vmem:[%s1559 + $0x38] sm:$0xff]
      %1568 = vrot.lane.b32.xlu0 %v1475, 120
      %v1569 = vpop.permute.xlu0 %1568
      %v1570 = vsel %vm1160, %v1569, 0
      %1572 = vmatprep.subr.mxu0 0.0
      %1573 = vmatpush1.msra.mxu0 0.0
      %1574 = vmatprep.subr.mxu0 0.0
      %1575 = vmatpush1.msra.mxu0 0.0
      %1576 = vmatprep.subr.mxu0 0.0
      %1577 = vmatpush1.msra.mxu0 0.0
      %1578 = vmatprep.subr.mxu0 0.0
      %1579 = vmatpush1.msra.mxu0 0.0
      %1580 = vmatprep.subr.mxu0 0.0
      %1581 = vmatpush1.msra.mxu0 0.0
      %1582 = vmatprep.subr.mxu0 0.0
      %1583 = vmatpush1.msra.mxu0 0.0
      %1584 = vmatprep.subr.mxu0 0.0
      %1585 = vmatpush1.msra.mxu0 0.0
      %1586 = vmatprep.subr.mxu0 0.0
      %1587 = vmatpush1.msra.mxu0 0.0
      %1588 = vmatprep.subr.mxu0 0.0
      %1589 = vmatpush1.msra.mxu0 %v1567
      %1590 = vmatprep.subr.mxu0 0.0
      %1591 = vmatpush1.msra.mxu0 %v1566
      %1592 = vmatprep.subr.mxu0 0.0
      %1593 = vmatpush1.msra.mxu0 %v1565
      %1594 = vmatprep.subr.mxu0 0.0
      %1595 = vmatpush1.msra.mxu0 %v1564
      %1596 = vmatprep.subr.mxu0 0.0
      %1597 = vmatpush1.msra.mxu0 %v1563
      %1598 = vmatprep.subr.mxu0 0.0
      %1599 = vmatpush1.msra.mxu0 %v1562
      %1600 = vmatprep.subr.mxu0 0.0
      %1601 = vmatpush1.msra.mxu0 %v1561
      %1602 = vmatprep.subr.mxu0 0.0
      %1603 = vmatpush1.msra.mxu0 %v1560
      %1604 = vmatprep.subr.mxu0 0.0
      %1605 = vmatpush2.msra.mxu0 0.0
      %1606 = vmatprep.subr.mxu0 0.0
      %1607 = vmatpush2.msra.mxu0 0.0
      %1608 = vmatprep.subr.mxu0 0.0
      %1609 = vmatpush2.msra.mxu0 0.0
      %1610 = vmatprep.subr.mxu0 0.0
      %1611 = vmatpush2.msra.mxu0 0.0
      %1612 = vmatprep.subr.mxu0 0.0
      %1613 = vmatpush2.msra.mxu0 0.0
      %1614 = vmatprep.subr.mxu0 0.0
      %1615 = vmatpush2.msra.mxu0 0.0
      %1616 = vmatprep.subr.mxu0 0.0
      %1617 = vmatpush2.msra.mxu0 0.0
      %1618 = vmatprep.subr.mxu0 0.0
      %1619 = vmatpush2.msra.mxu0 0.0
      %1620 = vmatprep.subr.mxu0 0.0
      %1621 = vmatpush2.msra.mxu0 0.0
      %1622 = vmatprep.subr.mxu0 0.0
      %1623 = vmatpush2.msra.mxu0 0.0
      %1624 = vmatprep.subr.mxu0 0.0
      %1625 = vmatpush2.msra.mxu0 0.0
      %1626 = vmatprep.subr.mxu0 0.0
      %1627 = vmatpush2.msra.mxu0 0.0
      %1628 = vmatprep.subr.mxu0 0.0
      %1629 = vmatpush2.msra.mxu0 0.0
      %1630 = vmatprep.subr.mxu0 0.0
      %1631 = vmatpush2.msra.mxu0 0.0
      %1632 = vmatprep.subr.mxu0 0.0
      %1633 = vmatpush2.msra.mxu0 0.0
      %1634 = vmatprep.subr.mxu0 0.0
      %1635 = vmatpush2.msra.mxu0 0.0
      %1636 = vmatprep.mubr.f32.mxu0 0.0
      %1637 = vmatmul.mubr.f32.gmra.mxu0 %v1570
      %v1638 = vpop.f32.mrf.mxu0
      %v1639 = vadd.f32 0.0, %v1638
      %v1640 = vpop.f32.mrf.mxu0
      %1641 = vdwg.mxu0
      %v1642 = vadd.f32 %v1558, %v1639
      %s1643 = scalar_lea.vmem %s6, 320
      %v1644 = vld [vmem:[%s1643] sm:$0xff]
      %v1645 = vld [vmem:[%s1643 + $0x8] sm:$0xff]
      %v1646 = vld [vmem:[%s1643 + $0x10] sm:$0xff]
      %v1647 = vld [vmem:[%s1643 + $0x18] sm:$0xff]
      %v1648 = vld [vmem:[%s1643 + $0x20] sm:$0xff]
      %v1649 = vld [vmem:[%s1643 + $0x28] sm:$0xff]
      %v1650 = vld [vmem:[%s1643 + $0x30] sm:$0xff]
      %v1651 = vld [vmem:[%s1643 + $0x38] sm:$0xff]
      %1652 = vrot.lane.b32.xlu0 %v1475, 112
      %v1653 = vpop.permute.xlu0 %1652
      %v1654 = vsel %vm1160, %v1653, 0
      %1656 = vmatprep.subr.mxu0 0.0
      %1657 = vmatpush1.msra.mxu0 0.0
      %1658 = vmatprep.subr.mxu0 0.0
      %1659 = vmatpush1.msra.mxu0 0.0
      %1660 = vmatprep.subr.mxu0 0.0
      %1661 = vmatpush1.msra.mxu0 0.0
      %1662 = vmatprep.subr.mxu0 0.0
      %1663 = vmatpush1.msra.mxu0 0.0
      %1664 = vmatprep.subr.mxu0 0.0
      %1665 = vmatpush1.msra.mxu0 0.0
      %1666 = vmatprep.subr.mxu0 0.0
      %1667 = vmatpush1.msra.mxu0 0.0
      %1668 = vmatprep.subr.mxu0 0.0
      %1669 = vmatpush1.msra.mxu0 0.0
      %1670 = vmatprep.subr.mxu0 0.0
      %1671 = vmatpush1.msra.mxu0 0.0
      %1672 = vmatprep.subr.mxu0 0.0
      %1673 = vmatpush1.msra.mxu0 %v1651
      %1674 = vmatprep.subr.mxu0 0.0
      %1675 = vmatpush1.msra.mxu0 %v1650
      %1676 = vmatprep.subr.mxu0 0.0
      %1677 = vmatpush1.msra.mxu0 %v1649
      %1678 = vmatprep.subr.mxu0 0.0
      %1679 = vmatpush1.msra.mxu0 %v1648
      %1680 = vmatprep.subr.mxu0 0.0
      %1681 = vmatpush1.msra.mxu0 %v1647
      %1682 = vmatprep.subr.mxu0 0.0
      %1683 = vmatpush1.msra.mxu0 %v1646
      %1684 = vmatprep.subr.mxu0 0.0
      %1685 = vmatpush1.msra.mxu0 %v1645
      %1686 = vmatprep.subr.mxu0 0.0
      %1687 = vmatpush1.msra.mxu0 %v1644
      %1688 = vmatprep.subr.mxu0 0.0
      %1689 = vmatpush2.msra.mxu0 0.0
      %1690 = vmatprep.subr.mxu0 0.0
      %1691 = vmatpush2.msra.mxu0 0.0
      %1692 = vmatprep.subr.mxu0 0.0
      %1693 = vmatpush2.msra.mxu0 0.0
      %1694 = vmatprep.subr.mxu0 0.0
      %1695 = vmatpush2.msra.mxu0 0.0
      %1696 = vmatprep.subr.mxu0 0.0
      %1697 = vmatpush2.msra.mxu0 0.0
      %1698 = vmatprep.subr.mxu0 0.0
      %1699 = vmatpush2.msra.mxu0 0.0
      %1700 = vmatprep.subr.mxu0 0.0
      %1701 = vmatpush2.msra.mxu0 0.0
      %1702 = vmatprep.subr.mxu0 0.0
      %1703 = vmatpush2.msra.mxu0 0.0
      %1704 = vmatprep.subr.mxu0 0.0
      %1705 = vmatpush2.msra.mxu0 0.0
      %1706 = vmatprep.subr.mxu0 0.0
      %1707 = vmatpush2.msra.mxu0 0.0
      %1708 = vmatprep.subr.mxu0 0.0
      %1709 = vmatpush2.msra.mxu0 0.0
      %1710 = vmatprep.subr.mxu0 0.0
      %1711 = vmatpush2.msra.mxu0 0.0
      %1712 = vmatprep.subr.mxu0 0.0
      %1713 = vmatpush2.msra.mxu0 0.0
      %1714 = vmatprep.subr.mxu0 0.0
      %1715 = vmatpush2.msra.mxu0 0.0
      %1716 = vmatprep.subr.mxu0 0.0
      %1717 = vmatpush2.msra.mxu0 0.0
      %1718 = vmatprep.subr.mxu0 0.0
      %1719 = vmatpush2.msra.mxu0 0.0
      %1720 = vmatprep.mubr.f32.mxu0 0.0
      %1721 = vmatmul.mubr.f32.gmra.mxu0 %v1654
      %v1722 = vpop.f32.mrf.mxu0
      %v1723 = vadd.f32 0.0, %v1722
      %v1724 = vpop.f32.mrf.mxu0
      %1725 = vdwg.mxu0
      %v1726 = vadd.f32 %v1642, %v1723
      %v1727 = vld [vmem:[#allocation6 + $0x2] sm:$0xff]
      %s1728 = scalar_lea.vmem %s6, 384
      %v1729 = vld [vmem:[%s1728] sm:$0xff]
      %v1730 = vld [vmem:[%s1728 + $0x8] sm:$0xff]
      %v1731 = vld [vmem:[%s1728 + $0x10] sm:$0xff]
      %v1732 = vld [vmem:[%s1728 + $0x18] sm:$0xff]
      %v1733 = vld [vmem:[%s1728 + $0x20] sm:$0xff]
      %v1734 = vld [vmem:[%s1728 + $0x28] sm:$0xff]
      %v1735 = vld [vmem:[%s1728 + $0x30] sm:$0xff]
      %v1736 = vld [vmem:[%s1728 + $0x38] sm:$0xff]
      %v1738 = vsel %vm1160, %v1727, 0
      %1740 = vmatprep.subr.mxu0 0.0
      %1741 = vmatpush1.msra.mxu0 0.0
      %1742 = vmatprep.subr.mxu0 0.0
      %1743 = vmatpush1.msra.mxu0 0.0
      %1744 = vmatprep.subr.mxu0 0.0
      %1745 = vmatpush1.msra.mxu0 0.0
      %1746 = vmatprep.subr.mxu0 0.0
      %1747 = vmatpush1.msra.mxu0 0.0
      %1748 = vmatprep.subr.mxu0 0.0
      %1749 = vmatpush1.msra.mxu0 0.0
      %1750 = vmatprep.subr.mxu0 0.0
      %1751 = vmatpush1.msra.mxu0 0.0
      %1752 = vmatprep.subr.mxu0 0.0
      %1753 = vmatpush1.msra.mxu0 0.0
      %1754 = vmatprep.subr.mxu0 0.0
      %1755 = vmatpush1.msra.mxu0 0.0
      %1756 = vmatprep.subr.mxu0 0.0
      %1757 = vmatpush1.msra.mxu0 %v1736
      %1758 = vmatprep.subr.mxu0 0.0
      %1759 = vmatpush1.msra.mxu0 %v1735
      %1760 = vmatprep.subr.mxu0 0.0
      %1761 = vmatpush1.msra.mxu0 %v1734
      %1762 = vmatprep.subr.mxu0 0.0
      %1763 = vmatpush1.msra.mxu0 %v1733
      %1764 = vmatprep.subr.mxu0 0.0
      %1765 = vmatpush1.msra.mxu0 %v1732
      %1766 = vmatprep.subr.mxu0 0.0
      %1767 = vmatpush1.msra.mxu0 %v1731
      %1768 = vmatprep.subr.mxu0 0.0
      %1769 = vmatpush1.msra.mxu0 %v1730
      %1770 = vmatprep.subr.mxu0 0.0
      %1771 = vmatpush1.msra.mxu0 %v1729
      %1772 = vmatprep.subr.mxu0 0.0
      %1773 = vmatpush2.msra.mxu0 0.0
      %1774 = vmatprep.subr.mxu0 0.0
      %1775 = vmatpush2.msra.mxu0 0.0
      %1776 = vmatprep.subr.mxu0 0.0
      %1777 = vmatpush2.msra.mxu0 0.0
      %1778 = vmatprep.subr.mxu0 0.0
      %1779 = vmatpush2.msra.mxu0 0.0
      %1780 = vmatprep.subr.mxu0 0.0
      %1781 = vmatpush2.msra.mxu0 0.0
      %1782 = vmatprep.subr.mxu0 0.0
      %1783 = vmatpush2.msra.mxu0 0.0
      %1784 = vmatprep.subr.mxu0 0.0
      %1785 = vmatpush2.msra.mxu0 0.0
      %1786 = vmatprep.subr.mxu0 0.0
      %1787 = vmatpush2.msra.mxu0 0.0
      %1788 = vmatprep.subr.mxu0 0.0
      %1789 = vmatpush2.msra.mxu0 0.0
      %1790 = vmatprep.subr.mxu0 0.0
      %1791 = vmatpush2.msra.mxu0 0.0
      %1792 = vmatprep.subr.mxu0 0.0
      %1793 = vmatpush2.msra.mxu0 0.0
      %1794 = vmatprep.subr.mxu0 0.0
      %1795 = vmatpush2.msra.mxu0 0.0
      %1796 = vmatprep.subr.mxu0 0.0
      %1797 = vmatpush2.msra.mxu0 0.0
      %1798 = vmatprep.subr.mxu0 0.0
      %1799 = vmatpush2.msra.mxu0 0.0
      %1800 = vmatprep.subr.mxu0 0.0
      %1801 = vmatpush2.msra.mxu0 0.0
      %1802 = vmatprep.subr.mxu0 0.0
      %1803 = vmatpush2.msra.mxu0 0.0
      %1804 = vmatprep.mubr.f32.mxu0 0.0
      %1805 = vmatmul.mubr.f32.gmra.mxu0 %v1738
      %v1806 = vpop.f32.mrf.mxu0
      %v1807 = vadd.f32 0.0, %v1806
      %v1808 = vpop.f32.mrf.mxu0
      %1809 = vdwg.mxu0
      %v1810 = vadd.f32 %v1726, %v1807
      %s1811 = scalar_lea.vmem %s6, 448
      %v1812 = vld [vmem:[%s1811] sm:$0xff]
      %v1813 = vld [vmem:[%s1811 + $0x8] sm:$0xff]
      %v1814 = vld [vmem:[%s1811 + $0x10] sm:$0xff]
      %v1815 = vld [vmem:[%s1811 + $0x18] sm:$0xff]
      %v1816 = vld [vmem:[%s1811 + $0x20] sm:$0xff]
      %v1817 = vld [vmem:[%s1811 + $0x28] sm:$0xff]
      %v1818 = vld [vmem:[%s1811 + $0x30] sm:$0xff]
      %v1819 = vld [vmem:[%s1811 + $0x38] sm:$0xff]
      %1820 = vrot.lane.b32.xlu0 %v1727, 120
      %v1821 = vpop.permute.xlu0 %1820
      %v1822 = vsel %vm1160, %v1821, 0
      %1824 = vmatprep.subr.mxu0 0.0
      %1825 = vmatpush1.msra.mxu0 0.0
      %1826 = vmatprep.subr.mxu0 0.0
      %1827 = vmatpush1.msra.mxu0 0.0
      %1828 = vmatprep.subr.mxu0 0.0
      %1829 = vmatpush1.msra.mxu0 0.0
      %1830 = vmatprep.subr.mxu0 0.0
      %1831 = vmatpush1.msra.mxu0 0.0
      %1832 = vmatprep.subr.mxu0 0.0
      %1833 = vmatpush1.msra.mxu0 0.0
      %1834 = vmatprep.subr.mxu0 0.0
      %1835 = vmatpush1.msra.mxu0 0.0
      %1836 = vmatprep.subr.mxu0 0.0
      %1837 = vmatpush1.msra.mxu0 0.0
      %1838 = vmatprep.subr.mxu0 0.0
      %1839 = vmatpush1.msra.mxu0 0.0
      %1840 = vmatprep.subr.mxu0 0.0
      %1841 = vmatpush1.msra.mxu0 %v1819
      %1842 = vmatprep.subr.mxu0 0.0
      %1843 = vmatpush1.msra.mxu0 %v1818
      %1844 = vmatprep.subr.mxu0 0.0
      %1845 = vmatpush1.msra.mxu0 %v1817
      %1846 = vmatprep.subr.mxu0 0.0
      %1847 = vmatpush1.msra.mxu0 %v1816
      %1848 = vmatprep.subr.mxu0 0.0
      %1849 = vmatpush1.msra.mxu0 %v1815
      %1850 = vmatprep.subr.mxu0 0.0
      %1851 = vmatpush1.msra.mxu0 %v1814
      %1852 = vmatprep.subr.mxu0 0.0
      %1853 = vmatpush1.msra.mxu0 %v1813
      %1854 = vmatprep.subr.mxu0 0.0
      %1855 = vmatpush1.msra.mxu0 %v1812
      %1856 = vmatprep.subr.mxu0 0.0
      %1857 = vmatpush2.msra.mxu0 0.0
      %1858 = vmatprep.subr.mxu0 0.0
      %1859 = vmatpush2.msra.mxu0 0.0
      %1860 = vmatprep.subr.mxu0 0.0
      %1861 = vmatpush2.msra.mxu0 0.0
      %1862 = vmatprep.subr.mxu0 0.0
      %1863 = vmatpush2.msra.mxu0 0.0
      %1864 = vmatprep.subr.mxu0 0.0
      %1865 = vmatpush2.msra.mxu0 0.0
      %1866 = vmatprep.subr.mxu0 0.0
      %1867 = vmatpush2.msra.mxu0 0.0
      %1868 = vmatprep.subr.mxu0 0.0
      %1869 = vmatpush2.msra.mxu0 0.0
      %1870 = vmatprep.subr.mxu0 0.0
      %1871 = vmatpush2.msra.mxu0 0.0
      %1872 = vmatprep.subr.mxu0 0.0
      %1873 = vmatpush2.msra.mxu0 0.0
      %1874 = vmatprep.subr.mxu0 0.0
      %1875 = vmatpush2.msra.mxu0 0.0
      %1876 = vmatprep.subr.mxu0 0.0
      %1877 = vmatpush2.msra.mxu0 0.0
      %1878 = vmatprep.subr.mxu0 0.0
      %1879 = vmatpush2.msra.mxu0 0.0
      %1880 = vmatprep.subr.mxu0 0.0
      %1881 = vmatpush2.msra.mxu0 0.0
      %1882 = vmatprep.subr.mxu0 0.0
      %1883 = vmatpush2.msra.mxu0 0.0
      %1884 = vmatprep.subr.mxu0 0.0
      %1885 = vmatpush2.msra.mxu0 0.0
      %1886 = vmatprep.subr.mxu0 0.0
      %1887 = vmatpush2.msra.mxu0 0.0
      %1888 = vmatprep.mubr.f32.mxu0 0.0
      %1889 = vmatmul.mubr.f32.gmra.mxu0 %v1822
      %v1890 = vpop.f32.mrf.mxu0
      %v1891 = vadd.f32 0.0, %v1890
      %v1892 = vpop.f32.mrf.mxu0
      %1893 = vdwg.mxu0
      %v1894 = vadd.f32 %v1810, %v1891
      %s1895 = scalar_lea.vmem %s6, 512
      %v1896 = vld [vmem:[%s1895] sm:$0xff]
      %v1897 = vld [vmem:[%s1895 + $0x8] sm:$0xff]
      %v1898 = vld [vmem:[%s1895 + $0x10] sm:$0xff]
      %v1899 = vld [vmem:[%s1895 + $0x18] sm:$0xff]
      %v1900 = vld [vmem:[%s1895 + $0x20] sm:$0xff]
      %v1901 = vld [vmem:[%s1895 + $0x28] sm:$0xff]
      %v1902 = vld [vmem:[%s1895 + $0x30] sm:$0xff]
      %v1903 = vld [vmem:[%s1895 + $0x38] sm:$0xff]
      %1904 = vrot.lane.b32.xlu0 %v1727, 112
      %v1905 = vpop.permute.xlu0 %1904
      %v1906 = vsel %vm1160, %v1905, 0
      %1908 = vmatprep.subr.mxu0 0.0
      %1909 = vmatpush1.msra.mxu0 0.0
      %1910 = vmatprep.subr.mxu0 0.0
      %1911 = vmatpush1.msra.mxu0 0.0
      %1912 = vmatprep.subr.mxu0 0.0
      %1913 = vmatpush1.msra.mxu0 0.0
      %1914 = vmatprep.subr.mxu0 0.0
      %1915 = vmatpush1.msra.mxu0 0.0
      %1916 = vmatprep.subr.mxu0 0.0
      %1917 = vmatpush1.msra.mxu0 0.0
      %1918 = vmatprep.subr.mxu0 0.0
      %1919 = vmatpush1.msra.mxu0 0.0
      %1920 = vmatprep.subr.mxu0 0.0
      %1921 = vmatpush1.msra.mxu0 0.0
      %1922 = vmatprep.subr.mxu0 0.0
      %1923 = vmatpush1.msra.mxu0 0.0
      %1924 = vmatprep.subr.mxu0 0.0
      %1925 = vmatpush1.msra.mxu0 %v1903
      %1926 = vmatprep.subr.mxu0 0.0
      %1927 = vmatpush1.msra.mxu0 %v1902
      %1928 = vmatprep.subr.mxu0 0.0
      %1929 = vmatpush1.msra.mxu0 %v1901
      %1930 = vmatprep.subr.mxu0 0.0
      %1931 = vmatpush1.msra.mxu0 %v1900
      %1932 = vmatprep.subr.mxu0 0.0
      %1933 = vmatpush1.msra.mxu0 %v1899
      %1934 = vmatprep.subr.mxu0 0.0
      %1935 = vmatpush1.msra.mxu0 %v1898
      %1936 = vmatprep.subr.mxu0 0.0
      %1937 = vmatpush1.msra.mxu0 %v1897
      %1938 = vmatprep.subr.mxu0 0.0
      %1939 = vmatpush1.msra.mxu0 %v1896
      %1940 = vmatprep.subr.mxu0 0.0
      %1941 = vmatpush2.msra.mxu0 0.0
      %1942 = vmatprep.subr.mxu0 0.0
      %1943 = vmatpush2.msra.mxu0 0.0
      %1944 = vmatprep.subr.mxu0 0.0
      %1945 = vmatpush2.msra.mxu0 0.0
      %1946 = vmatprep.subr.mxu0 0.0
      %1947 = vmatpush2.msra.mxu0 0.0
      %1948 = vmatprep.subr.mxu0 0.0
      %1949 = vmatpush2.msra.mxu0 0.0
      %1950 = vmatprep.subr.mxu0 0.0
      %1951 = vmatpush2.msra.mxu0 0.0
      %1952 = vmatprep.subr.mxu0 0.0
      %1953 = vmatpush2.msra.mxu0 0.0
      %1954 = vmatprep.subr.mxu0 0.0
      %1955 = vmatpush2.msra.mxu0 0.0
      %1956 = vmatprep.subr.mxu0 0.0
      %1957 = vmatpush2.msra.mxu0 0.0
      %1958 = vmatprep.subr.mxu0 0.0
      %1959 = vmatpush2.msra.mxu0 0.0
      %1960 = vmatprep.subr.mxu0 0.0
      %1961 = vmatpush2.msra.mxu0 0.0
      %1962 = vmatprep.subr.mxu0 0.0
      %1963 = vmatpush2.msra.mxu0 0.0
      %1964 = vmatprep.subr.mxu0 0.0
      %1965 = vmatpush2.msra.mxu0 0.0
      %1966 = vmatprep.subr.mxu0 0.0
      %1967 = vmatpush2.msra.mxu0 0.0
      %1968 = vmatprep.subr.mxu0 0.0
      %1969 = vmatpush2.msra.mxu0 0.0
      %1970 = vmatprep.subr.mxu0 0.0
      %1971 = vmatpush2.msra.mxu0 0.0
      %1972 = vmatprep.mubr.f32.mxu0 0.0
      %1973 = vmatmul.mubr.f32.gmra.mxu0 %v1906
      %v1974 = vpop.f32.mrf.mxu0
      %v1975 = vadd.f32 0.0, %v1974
      %v1976 = vpop.f32.mrf.mxu0
      %1977 = vdwg.mxu0
      %v1978 = vadd.f32 %v1894, %v1975
      %1979 = vst.msk [vmem:[%s303] sm:$0xff] %vm1160, %v1978
      %p1980 = scmp.lt.s32.totalorder %s19, 1
      %s1981 = scalar_select %p1980, %s19, 1
      %s1982 = smul.addr %s1981, 8
      %s1983 = scalar_lea.vmem %s8, %s1982
      // Predicated region
      $region53: #{network_block_forward.2} parent=51 // pred_check
        %p1984 = pneg %p210
      $region54: #{network_block_forward.2} parent=51 // pred_check_branch
        %1986 = sbr.rel (%p1984) target = $region56
      $region55: #{network_block_forward.2} parent=51 // pred_region
        _
      $region56: #{network_block_forward.2} parent=51 // pred_fallthru
        _
    $region52: #{network_block_forward.2} parent=5 // pred_fallthru
      _
    %p1987 = scmp.le.s32.totalorder 2, %s14
    // Predicated region
    $region57: #{network_block_forward.2} parent=5 // pred_check
      %p1988 = pneg %p1987
    $region58: #{network_block_forward.2} parent=5 // pred_check_branch
      %1990 = sbr.rel (%p1988) target = $region60
    $region59: #{network_block_forward.2} parent=5 // pred_region
      %s1991 = ssub.s32 %s14, 2
      // Predicated region
      $region61: #{network_block_forward.2} parent=59 // pred_check
        %p1992 = pneg %p216
      $region62: #{network_block_forward.2} parent=59 // pred_check_branch
        %1994 = sbr.rel (%p1992) target = $region64
      $region63: #{network_block_forward.2} parent=59 // pred_region
        %p1995 = scmp.lt.s32.totalorder %s20, 1
        %s1996 = scalar_select %p1995, %s20, 1
        %s1997 = smul.addr %s1996, 8
        %s1998 = scalar_lea.vmem %s8, %s1997
      $region64: #{network_block_forward.2} parent=59 // pred_fallthru
        _
    $region60: #{network_block_forward.2} parent=5 // pred_fallthru
      _
  $region6: #{network_block_forward.2} parent=0 // loop_footer
    %s18 = sadd.s32 1, %s14
  $region7: #{network_block_forward.2} parent=0 // loop_footer_branch
    %13 = sbr.rel target = $region3
  $region8: #{network_block_forward.2} parent=0 // loop_exit
    _

</llo_original>
